<compile_context>
chip_gen: v7x
topology: tpu7x:2x2x1
jax: 0.10.0
libtpu: 0.0.40
codegen_flags: <defaults>
</compile_context>

<pallas_src>
import math
from functools import partial

import jax
import jax.numpy as jnp
from jax.experimental import pallas as pl
from jax.experimental.pallas import tpu as pltpu

_NEG_INF = -1e30   # finite "minus infinity": avoids exp(-inf - -inf) NaNs


def _vmem_limit_bytes():
    """~80% of this chip's per-core VMEM, clamped to a sane range (leaves headroom
    for compiler-internal scratch and (8,128)-padded layouts)."""
    try:
        cap = getattr(pltpu.get_tpu_info(), "vmem_capacity_bytes", None)
        if cap:
            return max(32 * 1024 * 1024, min(int(cap * 4 // 5), 110 * 1024 * 1024))
    except Exception:
        pass
    return 48 * 1024 * 1024


# ----------------------------- kernel helpers ------------------------------
def _layernorm(x, w, b, eps=1e-5):
    mu = jnp.mean(x, axis=-1, keepdims=True)
    var = jnp.mean(jnp.square(x - mu), axis=-1, keepdims=True)
    return (x - mu) * jax.lax.rsqrt(var + eps) * w + b


def _gelu_tanh(x):
    # matches torch.nn.GELU(approximate='tanh'); kept in fp32 (v5e has no bf16 VPU/EUP)
    c = math.sqrt(2.0 / math.pi)
    return 0.5 * x * (1.0 + jnp.tanh(c * (x + 0.044715 * x * x * x)))


# ----------------- kernel 1: ln_1 + c_attn (qkv, head-major) -----------------
def _ln_qkv_kernel(x_ref, lnw_ref, lnb_ref, wqkv_ref, bqkv_ref,
                   q_ref, k_ref, v_ref, *, n_head, head_dim):
    C = x_ref.shape[-1]
    scale = 1.0 / math.sqrt(head_dim)
    h = _layernorm(x_ref[0].astype(jnp.float32), lnw_ref[0], lnb_ref[0])
    qkv = jnp.dot(h.astype(wqkv_ref.dtype), wqkv_ref[...],
                  preferred_element_type=jnp.float32) + bqkv_ref[0]      # (bs, 3C) f32
    # Head-major stores (layout plumbing done here, in VMEM, not by XLA in HBM).
    for hi in range(n_head):
        lo = hi * head_dim
        q_ref[0, hi] = (qkv[:, lo:lo + head_dim] * scale).astype(q_ref.dtype)  # pre-scaled
        k_ref[0, hi] = qkv[:, C + lo:C + lo + head_dim].astype(k_ref.dtype)
        v_ref[0, hi] = qkv[:, 2 * C + lo:2 * C + lo + head_dim].astype(v_ref.dtype)


# ---------------- kernel 2: causal flash attention (head-batched) ------------
def _flash_attn_kernel(q_ref, k_ref, v_ref, o_ref, m_sc, l_sc, acc_sc,
                       *, block_q, block_k, n_head, head_dim):
    qi = pl.program_id(1)
    ki = pl.program_id(2)
    q_start = qi * block_q
    k_start = ki * block_k

    @pl.when(ki == 0)
    def _init():
        m_sc[...] = jnp.full(m_sc.shape, _NEG_INF, jnp.float32)
        l_sc[...] = jnp.zeros(l_sc.shape, jnp.float32)
        acc_sc[...] = jnp.zeros(acc_sc.shape, jnp.float32)

    def _scores():
        # q is already pre-scaled by 1/sqrt(head_dim)
        return jnp.einsum("hqd,hkd->hqk", q_ref[0], k_ref[0],
                          preferred_element_type=jnp.float32)           # (H, TQ, TK) f32

    def _online_update(s):
        v = v_ref[0]
        m_prev = m_sc[...]
        m_new = jnp.maximum(m_prev, jnp.max(s, axis=-1, keepdims=True))
        alpha = jnp.exp(m_prev - m_new)
        p = jnp.exp(s - m_new)
        l_sc[...] = alpha * l_sc[...] + jnp.sum(p, axis=-1, keepdims=True)
        acc_sc[...] = alpha * acc_sc[...] + jnp.einsum(
            "hqk,hkd->hqd", p.astype(v.dtype), v,
            preferred_element_type=jnp.float32)
        m_sc[...] = m_new

    # Fully-visible tile (entirely at/below the diagonal): no mask math at all.
    @pl.when(k_start + block_k - 1 <= q_start)
    def _unmasked():
        _online_update(_scores())

    # Diagonal-straddling tile: additive finite causal bias.
    @pl.when(jnp.logical_and(k_start + block_k - 1 > q_start,
                             k_start < q_start + block_q))
    def _masked():
        s = _scores()
        rows = q_start + jax.lax.broadcasted_iota(jnp.int32, (block_q, block_k), 0)
        cols = k_start + jax.lax.broadcasted_iota(jnp.int32, (block_q, block_k), 1)
        s = s + jnp.where(rows >= cols, 0.0, _NEG_INF)[None, :, :]
        _online_update(s)

    # Fully-above-diagonal tiles: compute skipped AND K/V DMA elided (clamped index_map).

    @pl.when(ki == pl.num_programs(2) - 1)
    def _finalize():
        inv_l = pl.reciprocal(l_sc[...], approx=False)
        out = acc_sc[...] * inv_l                          # (H, bq, hd) f32
        # Merge heads -> lane-dense (bq, C) output tile (in VMEM, once per q block).
        for hi in range(n_head):
            o_ref[0, :, hi * head_dim:(hi + 1) * head_dim] = out[hi].astype(o_ref.dtype)


# ---- kernel 3: c_proj + residual, ln_2 + MLP (hidden-dim tiled) + residual ----
def _proj_mlp_kernel(x_ref, y_ref, wpr_ref, bpr_ref, ln2w_ref, ln2b_ref,
                     wfc_ref, bfc_ref, wmp_ref, bmp_ref, o_ref,
                     x1_sc, h_sc, acc_sc):
    j = pl.program_id(2)

    @pl.when(j == 0)
    def _init():
        x = x_ref[0].astype(jnp.float32)
        attn = jnp.dot(y_ref[0], wpr_ref[...],
                       preferred_element_type=jnp.float32) + bpr_ref[0]
        x1 = x + attn
        x1_sc[...] = x1
        h_sc[...] = _layernorm(x1, ln2w_ref[0], ln2b_ref[0]).astype(h_sc.dtype)
        acc_sc[...] = jnp.zeros_like(acc_sc)

    # One (C, bh) x (bh, C) chunk of the MLP per grid step (weights streamed, not resident).
    fc = jnp.dot(h_sc[...], wfc_ref[...],
                 preferred_element_type=jnp.float32) + bfc_ref[0]
    g = _gelu_tanh(fc).astype(wmp_ref.dtype)               # GELU in f32, cast for MXU
    acc_sc[...] += jnp.dot(g, wmp_ref[...], preferred_element_type=jnp.float32)

    @pl.when(j == pl.num_programs(2) - 1)
    def _fin():
        o_ref[0] = (x1_sc[...] + acc_sc[...] + bmp_ref[0]).astype(o_ref.dtype)


# ------------------------------- wrappers ------------------------------------
def prepare_gpt2_block_params(params, compute_dtype=jnp.bfloat16):
    """Cast weights ONCE (hoisted out of the forward).  Big matmul weights go to the
    compute dtype; LayerNorm params and biases stay fp32 (added on f32 accumulators)."""
    cdt = jnp.dtype(compute_dtype)
    f32 = jnp.float32
    return {
        "w_qkv": params["w_qkv"].astype(cdt),
        "w_proj": params["w_proj"].astype(cdt),
        "w_fc": params["w_fc"].astype(cdt),
        "w_mlp_proj": params["w_mlp_proj"].astype(cdt),
        "b_qkv": params["b_qkv"].astype(f32),
        "b_proj": params["b_proj"].astype(f32),
        "b_fc": params["b_fc"].astype(f32),
        "b_mlp_proj": params["b_mlp_proj"].astype(f32),
        "ln1_w": params["ln1_w"].astype(f32),
        "ln1_b": params["ln1_b"].astype(f32),
        "ln2_w": params["ln2_w"].astype(f32),
        "ln2_b": params["ln2_b"].astype(f32),
    }


def gpt2_block(x, params, n_head, *, block_q=128, block_k=128,
               block_seq=128, block_hidden=512):
    """GPT-2 Block forward.  `params` must come from prepare_gpt2_block_params.
    Tile sizes: 128 for v5e (defaults); 256 recommended for v6e / v7x."""
    B, T, C = x.shape
    assert C % n_head == 0
    hd = C // n_head
    H4 = 4 * C
    cdt = params["w_qkv"].dtype
    vmem_limit = _vmem_limit_bytes()

    # TODO(synk): pad T / 4C and mask instead of falling back to a full-size block.
    bq = block_q if T % block_q == 0 else T
    bk = block_k if T % block_k == 0 else T
    bs = block_seq if T % block_seq == 0 else T
    bh = block_hidden if H4 % block_hidden == 0 else H4

    w_qkv, b_qkv = params["w_qkv"], params["b_qkv"]
    w_proj, b_proj = params["w_proj"], params["b_proj"]
    w_fc, b_fc = params["w_fc"], params["b_fc"]
    w_mp, b_mp = params["w_mlp_proj"], params["b_mlp_proj"]
    ln1_w, ln1_b = params["ln1_w"], params["ln1_b"]
    ln2_w, ln2_b = params["ln2_w"], params["ln2_b"]

    # ---- kernel 1: ln_1 + c_attn, tiled over (batch, seq); Q/K/V written head-major ----
    qkv_out_spec = pl.BlockSpec((1, n_head, bs, hd), lambda b, s: (b, 0, s, 0))
    q, k, v = pl.pallas_call(
        partial(_ln_qkv_kernel, n_head=n_head, head_dim=hd),
        out_shape=tuple(jax.ShapeDtypeStruct((B, n_head, T, hd), cdt) for _ in range(3)),
        grid_spec=pltpu.PrefetchScalarGridSpec(
            num_scalar_prefetch=0,
            grid=(B, T // bs),
            in_specs=[
                pl.BlockSpec((1, bs, C), lambda b, s: (b, s, 0)),
                pl.BlockSpec((1, C), lambda b, s: (0, 0)),        # ln1_w
                pl.BlockSpec((1, C), lambda b, s: (0, 0)),        # ln1_b
                pl.BlockSpec((C, 3 * C), lambda b, s: (0, 0)),    # w_qkv
                pl.BlockSpec((1, 3 * C), lambda b, s: (0, 0)),    # b_qkv
            ],
            out_specs=(qkv_out_spec, qkv_out_spec, qkv_out_spec),
        ),
        compiler_params=pltpu.CompilerParams(
            dimension_semantics=("parallel", "parallel"),
            vmem_limit_bytes=vmem_limit),
    )(x, ln1_w, ln1_b, w_qkv, b_qkv)

    # ---- kernel 2: head-batched causal flash attention; output lane-dense (B, T, C) ----
    def kv_index_map(b, qi, ki):
        # Clamp to the last block at/below the diagonal so upper-triangle K/V tiles
        # repeat the previous block index and their DMA is elided.
        last = ((qi + 1) * bq - 1) // bk
        return (b, 0, jnp.minimum(ki, last), 0)

    y = pl.pallas_call(
        partial(_flash_attn_kernel, block_q=bq, block_k=bk,
                n_head=n_head, head_dim=hd),
        out_shape=jax.ShapeDtypeStruct((B, T, C), cdt),
        grid_spec=pltpu.PrefetchScalarGridSpec(
            num_scalar_prefetch=0,
            grid=(B, T // bq, T // bk),
            in_specs=[
                pl.BlockSpec((1, n_head, bq, hd), lambda b, qi, ki: (b, 0, qi, 0)),
                pl.BlockSpec((1, n_head, bk, hd), kv_index_map),
                pl.BlockSpec((1, n_head, bk, hd), kv_index_map),
            ],
            out_specs=pl.BlockSpec((1, bq, C), lambda b, qi, ki: (b, qi, 0)),
            scratch_shapes=[
                pltpu.VMEM((n_head, bq, 1), jnp.float32),    # running max m
                pltpu.VMEM((n_head, bq, 1), jnp.float32),    # running sum l
                pltpu.VMEM((n_head, bq, hd), jnp.float32),   # output accumulator
            ],
        ),
        compiler_params=pltpu.CompilerParams(
            dimension_semantics=("parallel", "parallel", "arbitrary"),
            vmem_limit_bytes=vmem_limit),
    )(q, k, v)

    # ---- kernel 3: c_proj + residual + ln_2 + MLP (hidden-dim streamed) + residual ----
    out = pl.pallas_call(
        _proj_mlp_kernel,
        out_shape=jax.ShapeDtypeStruct((B, T, C), x.dtype),
        grid_spec=pltpu.PrefetchScalarGridSpec(
            num_scalar_prefetch=0,
            grid=(B, T // bs, H4 // bh),
            in_specs=[
                pl.BlockSpec((1, bs, C), lambda b, s, j: (b, s, 0)),   # x (residual in)
                pl.BlockSpec((1, bs, C), lambda b, s, j: (b, s, 0)),   # y (attention out)
                pl.BlockSpec((C, C), lambda b, s, j: (0, 0)),          # w_proj
                pl.BlockSpec((1, C), lambda b, s, j: (0, 0)),          # b_proj
                pl.BlockSpec((1, C), lambda b, s, j: (0, 0)),          # ln2_w
                pl.BlockSpec((1, C), lambda b, s, j: (0, 0)),          # ln2_b
                pl.BlockSpec((C, bh), lambda b, s, j: (0, j)),         # w_fc tile
                pl.BlockSpec((1, bh), lambda b, s, j: (0, j)),         # b_fc tile
                pl.BlockSpec((bh, C), lambda b, s, j: (j, 0)),         # w_mlp_proj tile
                pl.BlockSpec((1, C), lambda b, s, j: (0, 0)),          # b_mlp_proj
            ],
            out_specs=pl.BlockSpec((1, bs, C), lambda b, s, j: (b, s, 0)),
            scratch_shapes=[
                pltpu.VMEM((bs, C), jnp.float32),   # x1 = x + attn_proj (residual)
                pltpu.VMEM((bs, C), cdt),           # ln_2 output (MXU operand)
                pltpu.VMEM((bs, C), jnp.float32),   # MLP accumulator
            ],
        ),
        compiler_params=pltpu.CompilerParams(
            dimension_semantics=("parallel", "parallel", "arbitrary"),
            vmem_limit_bytes=vmem_limit),
    )(x, y, w_proj, b_proj, ln2_w, ln2_b, w_fc, b_fc, w_mp, b_mp)
    return out


# --------------------------- pure-JAX reference ------------------------------
def gpt2_block_ref(x, params, n_head):
    B, T, C = x.shape
    hd = C // n_head

    def ln(v, w, b):
        mu = jnp.mean(v, axis=-1, keepdims=True)
        var = jnp.mean(jnp.square(v - mu), axis=-1, keepdims=True)
        return (v - mu) * jax.lax.rsqrt(var + 1e-5) * w[0] + b[0]

    h = ln(x, params["ln1_w"], params["ln1_b"])
    qkv = h @ params["w_qkv"] + params["b_qkv"][0]
    q, k, v = jnp.split(qkv, 3, axis=-1)
    q = q.reshape(B, T, n_head, hd).transpose(0, 2, 1, 3)
    k = k.reshape(B, T, n_head, hd).transpose(0, 2, 1, 3)
    v = v.reshape(B, T, n_head, hd).transpose(0, 2, 1, 3)
    att = jnp.einsum("bhtd,bhsd->bhts", q, k) / math.sqrt(hd)
    mask = jnp.tril(jnp.ones((T, T), bool))
    att = jnp.where(mask, att, -jnp.inf)
    att = jax.nn.softmax(att, axis=-1)
    y = jnp.einsum("bhts,bhsd->bhtd", att, v)
    y = y.transpose(0, 2, 1, 3).reshape(B, T, C)
    y = y @ params["w_proj"] + params["b_proj"][0]
    x = x + y

    h = ln(x, params["ln2_w"], params["ln2_b"])
    h = h @ params["w_fc"] + params["b_fc"][0]
    c = math.sqrt(2.0 / math.pi)
    h = 0.5 * h * (1.0 + jnp.tanh(c * (h + 0.044715 * h ** 3)))
    h = h @ params["w_mlp_proj"] + params["b_mlp_proj"][0]
    return x + h


# ---------------------------------- main -------------------------------------
if __name__ == "__main__":
    # Small but tile-exercising shapes: C multiple of 128; T spans multiple 128-wide
    # q/k tiles so causal tile-skipping / DMA clamping / diagonal masking are exercised;
    # 4C spans two hidden tiles so the MLP accumulator path is exercised.
    B, T, C, n_head = 2, 256, 256, 4

    key = jax.random.PRNGKey(0)
    keys = jax.random.split(key, 9)
    std = 0.02

    params = {
        # LayerNorm params stored (1, C) so they are 2-D for the kernels
        "ln1_w": jnp.ones((1, C), jnp.float32),
        "ln1_b": jnp.zeros((1, C), jnp.float32),
        "ln2_w": jnp.ones((1, C), jnp.float32),
        "ln2_b": jnp.zeros((1, C), jnp.float32),
        # attention: c_attn (C -> 3C), c_proj (C -> C); weights are (in, out)
        "w_qkv": std * jax.random.normal(keys[0], (C, 3 * C), jnp.float32),
        "b_qkv": std * jax.random.normal(keys[1], (1, 3 * C), jnp.float32),
        "w_proj": std * jax.random.normal(keys[2], (C, C), jnp.float32),
        "b_proj": std * jax.random.normal(keys[3], (1, C), jnp.float32),
        # MLP: c_fc (C -> 4C), c_proj (4C -> C)
        "w_fc": std * jax.random.normal(keys[4], (C, 4 * C), jnp.float32),
        "b_fc": std * jax.random.normal(keys[5], (1, 4 * C), jnp.float32),
        "w_mlp_proj": std * jax.random.normal(keys[6], (4 * C, C), jnp.float32),
        "b_mlp_proj": std * jax.random.normal(keys[7], (1, C), jnp.float32),
    }

    x = jax.random.normal(keys[8], (B, T, C), jnp.float32)
    ref = gpt2_block_ref(x, params, n_head)

    # fp32 compute path: tight check of the kernel math (flash softmax, mask, residuals).
    params_f32 = prepare_gpt2_block_params(params, jnp.float32)
    out_f32 = gpt2_block(x, params_f32, n_head)
    out_f32 = jax.block_until_ready(out_f32)
    assert out_f32.shape == (B, T, C)
    assert jnp.allclose(out_f32, ref, atol=5e-3, rtol=5e-3), "fp32 mismatch vs reference"

    # bf16 MXU-operand path (recommended production config); weights pre-cast once.
    params_bf16 = prepare_gpt2_block_params(params, jnp.bfloat16)
    out_bf16 = gpt2_block(x, params_bf16, n_head)
    out_bf16 = jax.block_until_ready(out_bf16)
    assert out_bf16.shape == (B, T, C)
    assert jnp.allclose(out_bf16, ref, atol=3e-2, rtol=3e-2), "bf16 mismatch vs reference"

    print("KERNEL_OK")
</pallas_src>

<mosaic_0001>
module attributes {stable_mosaic.version = 11 : i64} {
  func.func @_ln_qkv_kernel(%arg0: i32, %arg1: i32, %arg2: memref<1x128x256xf32, #tpu.memory_space<vmem>>, %arg3: memref<1x256xf32, #tpu.memory_space<vmem>>, %arg4: memref<1x256xf32, #tpu.memory_space<vmem>>, %arg5: memref<256x768xf32, #tpu.memory_space<vmem>>, %arg6: memref<1x768xf32, #tpu.memory_space<vmem>>, %arg7: memref<1x4x128x64xf32, #tpu.memory_space<vmem>>, %arg8: memref<1x4x128x64xf32, #tpu.memory_space<vmem>>, %arg9: memref<1x4x128x64xf32, #tpu.memory_space<vmem>>) attributes {dimension_semantics = [#tpu.dimension_semantics<parallel>, #tpu.dimension_semantics<parallel>], iteration_bounds = array<i64: 2, 2>, scalar_prefetch = 0 : i64, scratch_operands = 0 : i64, tpu.core_type = #tpu.core_type<tc>, window_params = [{transform_indices = @transform_0, window_bounds = array<i64: 1, 128, 256>}, {pipeline_mode = #tpu.pipeline_mode<synchronous>, transform_indices = @transform_1, window_bounds = array<i64: 1, 256>}, {pipeline_mode = #tpu.pipeline_mode<synchronous>, transform_indices = @transform_2, window_bounds = array<i64: 1, 256>}, {pipeline_mode = #tpu.pipeline_mode<synchronous>, transform_indices = @transform_3, window_bounds = array<i64: 256, 768>}, {pipeline_mode = #tpu.pipeline_mode<synchronous>, transform_indices = @transform_4, window_bounds = array<i64: 1, 768>}, {transform_indices = @transform_5, window_bounds = array<i64: 1, 4, 128, 64>}, {transform_indices = @transform_6, window_bounds = array<i64: 1, 4, 128, 64>}, {transform_indices = @transform_7, window_bounds = array<i64: 1, 4, 128, 64>}]} {
    %c0 = arith.constant 0 : index
    %c0_0 = arith.constant 0 : index
    %c0_1 = arith.constant 0 : index
    %0 = vector.load %arg2[%c0, %c0_0, %c0_1] : memref<1x128x256xf32, #tpu.memory_space<vmem>>, vector<1x128x256xf32>
    %1 = vector.shape_cast %0 : vector<1x128x256xf32> to vector<128x256xf32>
    %c0_2 = arith.constant 0 : index
    %c0_3 = arith.constant 0 : index
    %2 = vector.load %arg3[%c0_2, %c0_3] : memref<1x256xf32, #tpu.memory_space<vmem>>, vector<1x256xf32>
    %3 = vector.shape_cast %2 : vector<1x256xf32> to vector<256xf32>
    %c0_4 = arith.constant 0 : index
    %c0_5 = arith.constant 0 : index
    %4 = vector.load %arg4[%c0_4, %c0_5] : memref<1x256xf32, #tpu.memory_space<vmem>>, vector<1x256xf32>
    %5 = vector.shape_cast %4 : vector<1x256xf32> to vector<256xf32>
    %cst = arith.constant dense<0.000000e+00> : vector<128xf32>
    %6 = vector.multi_reduction <add>, %1, %cst [1] : vector<128x256xf32> to vector<128xf32>
    %7 = vector.shape_cast %6 : vector<128xf32> to vector<128x1xf32>
    %cst_6 = arith.constant 2.560000e+02 : f32
    %8 = vector.broadcast %cst_6 : f32 to vector<128x1xf32>
    %9 = arith.divf %7, %8 : vector<128x1xf32>
    %10 = vector.broadcast %9 : vector<128x1xf32> to vector<128x256xf32>
    %11 = arith.subf %1, %10 : vector<128x256xf32>
    %12 = arith.mulf %11, %11 : vector<128x256xf32>
    %cst_7 = arith.constant dense<0.000000e+00> : vector<128xf32>
    %13 = vector.multi_reduction <add>, %12, %cst_7 [1] : vector<128x256xf32> to vector<128xf32>
    %14 = vector.shape_cast %13 : vector<128xf32> to vector<128x1xf32>
    %cst_8 = arith.constant 2.560000e+02 : f32
    %15 = vector.broadcast %cst_8 : f32 to vector<128x1xf32>
    %16 = arith.divf %14, %15 : vector<128x1xf32>
    %17 = vector.broadcast %9 : vector<128x1xf32> to vector<128x256xf32>
    %18 = arith.subf %1, %17 : vector<128x256xf32>
    %cst_9 = arith.constant 9.99999974E-6 : f32
    %19 = vector.broadcast %cst_9 : f32 to vector<128x1xf32>
    %20 = arith.addf %16, %19 : vector<128x1xf32>
    %21 = math.rsqrt %20 : vector<128x1xf32>
    %22 = vector.broadcast %21 : vector<128x1xf32> to vector<128x256xf32>
    %23 = arith.mulf %18, %22 : vector<128x256xf32>
    %24 = vector.shape_cast %3 : vector<256xf32> to vector<1x256xf32>
    %25 = vector.broadcast %24 : vector<1x256xf32> to vector<128x256xf32>
    %26 = arith.mulf %23, %25 : vector<128x256xf32>
    %27 = vector.shape_cast %5 : vector<256xf32> to vector<1x256xf32>
    %28 = vector.broadcast %27 : vector<1x256xf32> to vector<128x256xf32>
    %29 = arith.addf %26, %28 : vector<128x256xf32>
    %c0_10 = arith.constant 0 : index
    %c0_11 = arith.constant 0 : index
    %30 = vector.load %arg5[%c0_10, %c0_11] : memref<256x768xf32, #tpu.memory_space<vmem>>, vector<256x768xf32>
    %cst_12 = arith.constant dense<0.000000e+00> : vector<128x768xf32>
    %31 = tpu.matmul %29, %30, %cst_12 {dimension_numbers = #tpu.dot_dimension_numbers<[1], [0], [0], [1], [0, 0, 1, 1], [], []>} : vector<128x256xf32>, vector<256x768xf32>, vector<128x768xf32> -> vector<128x768xf32>
    %c0_13 = arith.constant 0 : index
    %c0_14 = arith.constant 0 : index
    %32 = vector.load %arg6[%c0_13, %c0_14] : memref<1x768xf32, #tpu.memory_space<vmem>>, vector<1x768xf32>
    %33 = vector.shape_cast %32 : vector<1x768xf32> to vector<768xf32>
    %34 = vector.shape_cast %33 : vector<768xf32> to vector<1x768xf32>
    %35 = vector.broadcast %34 : vector<1x768xf32> to vector<128x768xf32>
    %36 = arith.addf %31, %35 : vector<128x768xf32>
    %37 = vector.extract_strided_slice %36 {offsets = [0, 0], sizes = [128, 64], strides = [1, 1]} : vector<128x768xf32> to vector<128x64xf32>
    %cst_15 = arith.constant 1.250000e-01 : f32
    %38 = vector.broadcast %cst_15 : f32 to vector<128x64xf32>
    %39 = arith.mulf %37, %38 : vector<128x64xf32>
    %c0_16 = arith.constant 0 : index
    %c0_17 = arith.constant 0 : index
    %c0_18 = arith.constant 0 : index
    %c0_19 = arith.constant 0 : index
    %40 = vector.load %arg7[%c0_16, %c0_17, %c0_18, %c0_19] : memref<1x4x128x64xf32, #tpu.memory_space<vmem>>, vector<1x1x128x64xf32>
    %41 = vector.shape_cast %40 : vector<1x1x128x64xf32> to vector<128x64xf32>
    %42 = vector.shape_cast %39 : vector<128x64xf32> to vector<1x1x128x64xf32>
    tpu.vector_store %arg7[%c0_16, %c0_17, %c0_18, %c0_19], %42 {strides = array<i32>} : memref<1x4x128x64xf32, #tpu.memory_space<vmem>>, vector<1x1x128x64xf32>,
    %43 = vector.extract_strided_slice %36 {offsets = [0, 256], sizes = [128, 64], strides = [1, 1]} : vector<128x768xf32> to vector<128x64xf32>
    %c0_20 = arith.constant 0 : index
    %c0_21 = arith.constant 0 : index
    %c0_22 = arith.constant 0 : index
    %c0_23 = arith.constant 0 : index
    %44 = vector.load %arg8[%c0_20, %c0_21, %c0_22, %c0_23] : memref<1x4x128x64xf32, #tpu.memory_space<vmem>>, vector<1x1x128x64xf32>
    %45 = vector.shape_cast %44 : vector<1x1x128x64xf32> to vector<128x64xf32>
    %46 = vector.shape_cast %43 : vector<128x64xf32> to vector<1x1x128x64xf32>
    tpu.vector_store %arg8[%c0_20, %c0_21, %c0_22, %c0_23], %46 {strides = array<i32>} : memref<1x4x128x64xf32, #tpu.memory_space<vmem>>, vector<1x1x128x64xf32>,
    %47 = vector.extract_strided_slice %36 {offsets = [0, 512], sizes = [128, 64], strides = [1, 1]} : vector<128x768xf32> to vector<128x64xf32>
    %c0_24 = arith.constant 0 : index
    %c0_25 = arith.constant 0 : index
    %c0_26 = arith.constant 0 : index
    %c0_27 = arith.constant 0 : index
    %48 = vector.load %arg9[%c0_24, %c0_25, %c0_26, %c0_27] : memref<1x4x128x64xf32, #tpu.memory_space<vmem>>, vector<1x1x128x64xf32>
    %49 = vector.shape_cast %48 : vector<1x1x128x64xf32> to vector<128x64xf32>
    %50 = vector.shape_cast %47 : vector<128x64xf32> to vector<1x1x128x64xf32>
    tpu.vector_store %arg9[%c0_24, %c0_25, %c0_26, %c0_27], %50 {strides = array<i32>} : memref<1x4x128x64xf32, #tpu.memory_space<vmem>>, vector<1x1x128x64xf32>,
    %51 = vector.extract_strided_slice %36 {offsets = [0, 64], sizes = [128, 64], strides = [1, 1]} : vector<128x768xf32> to vector<128x64xf32>
    %cst_28 = arith.constant 1.250000e-01 : f32
    %52 = vector.broadcast %cst_28 : f32 to vector<128x64xf32>
    %53 = arith.mulf %51, %52 : vector<128x64xf32>
    %c0_29 = arith.constant 0 : index
    %c1 = arith.constant 1 : index
    %c0_30 = arith.constant 0 : index
    %c0_31 = arith.constant 0 : index
    %54 = vector.load %arg7[%c0_29, %c1, %c0_30, %c0_31] : memref<1x4x128x64xf32, #tpu.memory_space<vmem>>, vector<1x1x128x64xf32>
    %55 = vector.shape_cast %54 : vector<1x1x128x64xf32> to vector<128x64xf32>
    %56 = vector.shape_cast %53 : vector<128x64xf32> to vector<1x1x128x64xf32>
    tpu.vector_store %arg7[%c0_29, %c1, %c0_30, %c0_31], %56 {strides = array<i32>} : memref<1x4x128x64xf32, #tpu.memory_space<vmem>>, vector<1x1x128x64xf32>,
    %57 = vector.extract_strided_slice %36 {offsets = [0, 320], sizes = [128, 64], strides = [1, 1]} : vector<128x768xf32> to vector<128x64xf32>
    %c0_32 = arith.constant 0 : index
    %c1_33 = arith.constant 1 : index
    %c0_34 = arith.constant 0 : index
    %c0_35 = arith.constant 0 : index
    %58 = vector.load %arg8[%c0_32, %c1_33, %c0_34, %c0_35] : memref<1x4x128x64xf32, #tpu.memory_space<vmem>>, vector<1x1x128x64xf32>
    %59 = vector.shape_cast %58 : vector<1x1x128x64xf32> to vector<128x64xf32>
    %60 = vector.shape_cast %57 : vector<128x64xf32> to vector<1x1x128x64xf32>
    tpu.vector_store %arg8[%c0_32, %c1_33, %c0_34, %c0_35], %60 {strides = array<i32>} : memref<1x4x128x64xf32, #tpu.memory_space<vmem>>, vector<1x1x128x64xf32>,
    %61 = vector.extract_strided_slice %36 {offsets = [0, 576], sizes = [128, 64], strides = [1, 1]} : vector<128x768xf32> to vector<128x64xf32>
    %c0_36 = arith.constant 0 : index
    %c1_37 = arith.constant 1 : index
    %c0_38 = arith.constant 0 : index
    %c0_39 = arith.constant 0 : index
    %62 = vector.load %arg9[%c0_36, %c1_37, %c0_38, %c0_39] : memref<1x4x128x64xf32, #tpu.memory_space<vmem>>, vector<1x1x128x64xf32>
    %63 = vector.shape_cast %62 : vector<1x1x128x64xf32> to vector<128x64xf32>
    %64 = vector.shape_cast %61 : vector<128x64xf32> to vector<1x1x128x64xf32>
    tpu.vector_store %arg9[%c0_36, %c1_37, %c0_38, %c0_39], %64 {strides = array<i32>} : memref<1x4x128x64xf32, #tpu.memory_space<vmem>>, vector<1x1x128x64xf32>,
    %65 = vector.extract_strided_slice %36 {offsets = [0, 128], sizes = [128, 64], strides = [1, 1]} : vector<128x768xf32> to vector<128x64xf32>
    %cst_40 = arith.constant 1.250000e-01 : f32
    %66 = vector.broadcast %cst_40 : f32 to vector<128x64xf32>
    %67 = arith.mulf %65, %66 : vector<128x64xf32>
    %c0_41 = arith.constant 0 : index
    %c2 = arith.constant 2 : index
    %c0_42 = arith.constant 0 : index
    %c0_43 = arith.constant 0 : index
    %68 = vector.load %arg7[%c0_41, %c2, %c0_42, %c0_43] : memref<1x4x128x64xf32, #tpu.memory_space<vmem>>, vector<1x1x128x64xf32>
    %69 = vector.shape_cast %68 : vector<1x1x128x64xf32> to vector<128x64xf32>
    %70 = vector.shape_cast %67 : vector<128x64xf32> to vector<1x1x128x64xf32>
    tpu.vector_store %arg7[%c0_41, %c2, %c0_42, %c0_43], %70 {strides = array<i32>} : memref<1x4x128x64xf32, #tpu.memory_space<vmem>>, vector<1x1x128x64xf32>,
    %71 = vector.extract_strided_slice %36 {offsets = [0, 384], sizes = [128, 64], strides = [1, 1]} : vector<128x768xf32> to vector<128x64xf32>
    %c0_44 = arith.constant 0 : index
    %c2_45 = arith.constant 2 : index
    %c0_46 = arith.constant 0 : index
    %c0_47 = arith.constant 0 : index
    %72 = vector.load %arg8[%c0_44, %c2_45, %c0_46, %c0_47] : memref<1x4x128x64xf32, #tpu.memory_space<vmem>>, vector<1x1x128x64xf32>
    %73 = vector.shape_cast %72 : vector<1x1x128x64xf32> to vector<128x64xf32>
    %74 = vector.shape_cast %71 : vector<128x64xf32> to vector<1x1x128x64xf32>
    tpu.vector_store %arg8[%c0_44, %c2_45, %c0_46, %c0_47], %74 {strides = array<i32>} : memref<1x4x128x64xf32, #tpu.memory_space<vmem>>, vector<1x1x128x64xf32>,
    %75 = vector.extract_strided_slice %36 {offsets = [0, 640], sizes = [128, 64], strides = [1, 1]} : vector<128x768xf32> to vector<128x64xf32>
    %c0_48 = arith.constant 0 : index
    %c2_49 = arith.constant 2 : index
    %c0_50 = arith.constant 0 : index
    %c0_51 = arith.constant 0 : index
    %76 = vector.load %arg9[%c0_48, %c2_49, %c0_50, %c0_51] : memref<1x4x128x64xf32, #tpu.memory_space<vmem>>, vector<1x1x128x64xf32>
    %77 = vector.shape_cast %76 : vector<1x1x128x64xf32> to vector<128x64xf32>
    %78 = vector.shape_cast %75 : vector<128x64xf32> to vector<1x1x128x64xf32>
    tpu.vector_store %arg9[%c0_48, %c2_49, %c0_50, %c0_51], %78 {strides = array<i32>} : memref<1x4x128x64xf32, #tpu.memory_space<vmem>>, vector<1x1x128x64xf32>,
    %79 = vector.extract_strided_slice %36 {offsets = [0, 192], sizes = [128, 64], strides = [1, 1]} : vector<128x768xf32> to vector<128x64xf32>
    %cst_52 = arith.constant 1.250000e-01 : f32
    %80 = vector.broadcast %cst_52 : f32 to vector<128x64xf32>
    %81 = arith.mulf %79, %80 : vector<128x64xf32>
    %c0_53 = arith.constant 0 : index
    %c3 = arith.constant 3 : index
    %c0_54 = arith.constant 0 : index
    %c0_55 = arith.constant 0 : index
    %82 = vector.load %arg7[%c0_53, %c3, %c0_54, %c0_55] : memref<1x4x128x64xf32, #tpu.memory_space<vmem>>, vector<1x1x128x64xf32>
    %83 = vector.shape_cast %82 : vector<1x1x128x64xf32> to vector<128x64xf32>
    %84 = vector.shape_cast %81 : vector<128x64xf32> to vector<1x1x128x64xf32>
    tpu.vector_store %arg7[%c0_53, %c3, %c0_54, %c0_55], %84 {strides = array<i32>} : memref<1x4x128x64xf32, #tpu.memory_space<vmem>>, vector<1x1x128x64xf32>,
    %85 = vector.extract_strided_slice %36 {offsets = [0, 448], sizes = [128, 64], strides = [1, 1]} : vector<128x768xf32> to vector<128x64xf32>
    %c0_56 = arith.constant 0 : index
    %c3_57 = arith.constant 3 : index
    %c0_58 = arith.constant 0 : index
    %c0_59 = arith.constant 0 : index
    %86 = vector.load %arg8[%c0_56, %c3_57, %c0_58, %c0_59] : memref<1x4x128x64xf32, #tpu.memory_space<vmem>>, vector<1x1x128x64xf32>
    %87 = vector.shape_cast %86 : vector<1x1x128x64xf32> to vector<128x64xf32>
    %88 = vector.shape_cast %85 : vector<128x64xf32> to vector<1x1x128x64xf32>
    tpu.vector_store %arg8[%c0_56, %c3_57, %c0_58, %c0_59], %88 {strides = array<i32>} : memref<1x4x128x64xf32, #tpu.memory_space<vmem>>, vector<1x1x128x64xf32>,
    %89 = vector.extract_strided_slice %36 {offsets = [0, 704], sizes = [128, 64], strides = [1, 1]} : vector<128x768xf32> to vector<128x64xf32>
    %c0_60 = arith.constant 0 : index
    %c3_61 = arith.constant 3 : index
    %c0_62 = arith.constant 0 : index
    %c0_63 = arith.constant 0 : index
    %90 = vector.load %arg9[%c0_60, %c3_61, %c0_62, %c0_63] : memref<1x4x128x64xf32, #tpu.memory_space<vmem>>, vector<1x1x128x64xf32>
    %91 = vector.shape_cast %90 : vector<1x1x128x64xf32> to vector<128x64xf32>
    %92 = vector.shape_cast %89 : vector<128x64xf32> to vector<1x1x128x64xf32>
    tpu.vector_store %arg9[%c0_60, %c3_61, %c0_62, %c0_63], %92 {strides = array<i32>} : memref<1x4x128x64xf32, #tpu.memory_space<vmem>>, vector<1x1x128x64xf32>,
    return
  }
  func.func @transform_0(%arg0: i32, %arg1: i32) -> (i32, i32, i32) {
    %c0_i32 = arith.constant 0 : i32
    %c0_i32_0 = arith.constant 0 : i32
    return %arg0, %arg1, %c0_i32 : i32, i32, i32
  }
  func.func @transform_1(%arg0: i32, %arg1: i32) -> (i32, i32) {
    %c0_i32 = arith.constant 0 : i32
    %c0_i32_0 = arith.constant 0 : i32
    %c0_i32_1 = arith.constant 0 : i32
    return %c0_i32, %c0_i32_0 : i32, i32
  }
  func.func @transform_2(%arg0: i32, %arg1: i32) -> (i32, i32) {
    %c0_i32 = arith.constant 0 : i32
    %c0_i32_0 = arith.constant 0 : i32
    %c0_i32_1 = arith.constant 0 : i32
    return %c0_i32, %c0_i32_0 : i32, i32
  }
  func.func @transform_3(%arg0: i32, %arg1: i32) -> (i32, i32) {
    %c0_i32 = arith.constant 0 : i32
    %c0_i32_0 = arith.constant 0 : i32
    %c0_i32_1 = arith.constant 0 : i32
    return %c0_i32, %c0_i32_0 : i32, i32
  }
  func.func @transform_4(%arg0: i32, %arg1: i32) -> (i32, i32) {
    %c0_i32 = arith.constant 0 : i32
    %c0_i32_0 = arith.constant 0 : i32
    %c0_i32_1 = arith.constant 0 : i32
    return %c0_i32, %c0_i32_0 : i32, i32
  }
  func.func @transform_5(%arg0: i32, %arg1: i32) -> (i32, i32, i32, i32) {
    %c0_i32 = arith.constant 0 : i32
    %c0_i32_0 = arith.constant 0 : i32
    %c0_i32_1 = arith.constant 0 : i32
    return %arg0, %c0_i32, %arg1, %c0_i32_0 : i32, i32, i32, i32
  }
  func.func @transform_6(%arg0: i32, %arg1: i32) -> (i32, i32, i32, i32) {
    %c0_i32 = arith.constant 0 : i32
    %c0_i32_0 = arith.constant 0 : i32
    %c0_i32_1 = arith.constant 0 : i32
    return %arg0, %c0_i32, %arg1, %c0_i32_0 : i32, i32, i32, i32
  }
  func.func @transform_7(%arg0: i32, %arg1: i32) -> (i32, i32, i32, i32) {
    %c0_i32 = arith.constant 0 : i32
    %c0_i32_0 = arith.constant 0 : i32
    %c0_i32_1 = arith.constant 0 : i32
    return %arg0, %c0_i32, %arg1, %c0_i32_0 : i32, i32, i32, i32
  }
}

</mosaic_0001>

<llo_original>
// kernel: tpu_custom_call.1
$region0: #{tpu_custom_call.1}
  #allocation0 [shape = 'u32[]', space=smem, size = 0x4, offset = 0x4, fixed_abs, tag = 'smem constant byte address 0x4 - core index']
  #allocation1 [shape = 'u32[144,128]{1,0:T(1,128)}', space=vmem, size = 0x12000, scoped, tag = 'internal scratch']
  %s0 = inlined_call_operand.hbm [shape: f32[2,256,256], index: 0, kind: input, shape index: {}]
  %s1 = inlined_call_operand.vmem [shape: f32[1,256], index: 1, kind: input, shape index: {}]
  %s2 = inlined_call_operand.vmem [shape: f32[1,256], index: 2, kind: input, shape index: {}]
  %s3 = inlined_call_operand.hbm [shape: f32[256,768], index: 3, kind: input, shape index: {}]
  %s4 = inlined_call_operand.vmem [shape: f32[1,768], index: 4, kind: input, shape index: {}]
  %s5 = inlined_call_operand.vmem [shape: f32[2,4,256,64], index: 5, kind: output, shape index: {0}]
  %s6 = inlined_call_operand.vmem [shape: f32[2,4,256,64], index: 6, kind: output, shape index: {1}]
  %s7 = inlined_call_operand.vmem [shape: f32[2,4,256,64], index: 7, kind: output, shape index: {2}]
  %8 = xla_tuple %s5, %s6, %s7
  %s9 = sld [smem:[#allocation0]]
  $region179: #{tpu_custom_call.1} parent=0
    _
  %s11 = ssub.s32 1, %s9
  %s12 = scalar_select 0, %s11, %s9
  $region1: #{tpu_custom_call.1} parent=0
    #allocation2 [shape = 'u8[262144]{0}', space=vmem, size = 0x40000, scoped, tag = 'input window, operand 0']
    #allocation3 [shape = 's32[2]{0}', space=sflag, size = 0x8, scoped, tag = 'scoped memory for tpu_custom_call.1']
    #allocation4 [shape = 'u8[786432]{0}', space=vmem, size = 0xc0000, scoped, tag = 'input window, operand 3, single buffered']
    #allocation5 [shape = 's32[1]{0}', space=sflag, size = 0x4, scoped, tag = 'scoped memory for tpu_custom_call.1']
    #allocation6 [shape = 'u8[524288]{0}', space=vmem, size = 0x80000, scoped, tag = 'output window, operand 0']
    #allocation7 [shape = 'u8[524288]{0}', space=vmem, size = 0x80000, scoped, tag = 'output window, operand 1']
    #allocation8 [shape = 'u8[524288]{0}', space=vmem, size = 0x80000, scoped, tag = 'output window, operand 2']
    %13 = vsyncpa [#allocation3], 0
    %s14 = scalar_lea.sflag [#allocation3], 1
    %15 = vsyncpa %s14, 0
    %16 = vsyncpa [#allocation5], 0
    loop: start=0, step=1, limit=6
    $region2: #{tpu_custom_call.1} parent=1 // loop_pre_header
      _
    $region3: #{tpu_custom_call.1} parent=1 // loop_header
      %s18 = sphi 0, %s22
      %p19 = scmp.ge.s32.totalorder %s18, 6
      %s25 = sphi 0, %s37
      %s26 = sphi 0, %s33
      %s27 = sphi 0, %s25
      %s28 = sphi 0, %s26
      %s29 = sphi 0, %s27
      %s30 = sphi 0, %s28
      %s42 = sphi 0, %s44
      %s45 = sphi 0, %s42
      %s46 = sphi 0, %s45
      %s62 = sphi 0, %s46
      %s66 = sphi 0, %s66
      %s68 = sphi 0, %s66
      %s69 = sphi 0, %s68
      %s83 = sphi 0, %s69
      %s87 = sphi 0, %s87
      %s89 = sphi 0, %s87
      %s90 = sphi 0, %s89
      %s104 = sphi 0, %s90
      %s108 = sphi 0, %s108
      %s110 = sphi 0, %s108
      %s111 = sphi 0, %s110
      %s125 = sphi 0, %s111
      %s129 = sphi 0, %s129
      %s131 = sphi 0, %s129
      %s132 = sphi 0, %s131
      %s146 = sphi 0, %s132
      %s154 = sphi 0, %s156
      %s157 = sphi 0, %s154
      %s158 = sphi 0, %s157
      %s174 = sphi 0, %s158
      %s182 = sphi 0, %s184
      %s185 = sphi 0, %s182
      %s186 = sphi 0, %s185
      %s202 = sphi 0, %s186
      %s210 = sphi 0, %s212
      %s213 = sphi 0, %s210
      %s214 = sphi 0, %s213
      %s230 = sphi 0, %s214
    $region4: #{tpu_custom_call.1} parent=1 // loop_header_branch
      %21 = sbr.rel (%p19) target = $region8
    $region5: #{tpu_custom_call.1} parent=1 // loop_body
      %s23 = ssub.s32 %s18, 1
      %s24 = ssub.s32 %s18, 2
      %s31 = sadd.s32 1, %s26
      %p32 = scmp.ge.s32.totalorder %s31, 2
      %s33 = scalar_select %p32, 0, %s31
      %s34 = sadd.s32 1, %s25
      %s35 = scalar_select %p32, %s34, %s25
      %p36 = scmp.ge.s32.totalorder %s35, 2
      %s37 = scalar_select %p36, 0, %s35
      %s38 = ssub.s32 %s25, %s37
      %s39 = ssub.s32 %s26, %s33
      %s40 = sor.u32 %s38, %s39
      %p41 = scmp.eq.s32.totalorder %s40, 0
      %s43 = sadd.s32 %s42, 1
      %s44 = scalar_select %p41, %s42, %s43
      %p47 = pneg %p41
      %p48 = scmp.eq.s32.totalorder %s18, 3
      %p49 = por %p47, %p48
      %p50 = scmp.ne.s32.totalorder %s42, %s45
      %p51 = scmp.eq.s32.totalorder %s18, 0
      %p52 = por %p50, %p51
      %p53 = scmp.ne.s32.totalorder %s42, %s45
      %p54 = scmp.eq.s32.totalorder %s23, 3
      %p55 = por %p53, %p54
      %p56 = scmp.ne.s32.totalorder %s45, %s46
      %p57 = scmp.eq.s32.totalorder %s23, 0
      %p58 = por %p56, %p57
      %p59 = scmp.ne.s32.totalorder %s45, %s46
      %p60 = scmp.eq.s32.totalorder %s24, 3
      %p61 = por %p59, %p60
      %p63 = scmp.ne.s32.totalorder %s46, %s62
      %p64 = scmp.eq.s32.totalorder %s24, 0
      %p65 = por %p63, %p64
      %s67 = sadd.s32 %s66, 1
      %p70 = scmp.eq.s32.totalorder %s18, 3
      %p71 = scmp.ne.s32.totalorder %s66, %s68
      %p72 = scmp.eq.s32.totalorder %s18, 0
      %p73 = por %p71, %p72
      %p74 = scmp.ne.s32.totalorder %s66, %s68
      %p75 = scmp.eq.s32.totalorder %s23, 3
      %p76 = por %p74, %p75
      %p77 = scmp.ne.s32.totalorder %s68, %s69
      %p78 = scmp.eq.s32.totalorder %s23, 0
      %p79 = por %p77, %p78
      %p80 = scmp.ne.s32.totalorder %s68, %s69
      %p81 = scmp.eq.s32.totalorder %s24, 3
      %p82 = por %p80, %p81
      %p84 = scmp.ne.s32.totalorder %s69, %s83
      %p85 = scmp.eq.s32.totalorder %s24, 0
      %p86 = por %p84, %p85
      %s88 = sadd.s32 %s87, 1
      %p91 = scmp.eq.s32.totalorder %s18, 3
      %p92 = scmp.ne.s32.totalorder %s87, %s89
      %p93 = scmp.eq.s32.totalorder %s18, 0
      %p94 = por %p92, %p93
      %p95 = scmp.ne.s32.totalorder %s87, %s89
      %p96 = scmp.eq.s32.totalorder %s23, 3
      %p97 = por %p95, %p96
      %p98 = scmp.ne.s32.totalorder %s89, %s90
      %p99 = scmp.eq.s32.totalorder %s23, 0
      %p100 = por %p98, %p99
      %p101 = scmp.ne.s32.totalorder %s89, %s90
      %p102 = scmp.eq.s32.totalorder %s24, 3
      %p103 = por %p101, %p102
      %p105 = scmp.ne.s32.totalorder %s90, %s104
      %p106 = scmp.eq.s32.totalorder %s24, 0
      %p107 = por %p105, %p106
      %s109 = sadd.s32 %s108, 1
      %p112 = scmp.eq.s32.totalorder %s18, 3
      %p113 = scmp.ne.s32.totalorder %s108, %s110
      %p114 = scmp.eq.s32.totalorder %s18, 0
      %p115 = por %p113, %p114
      %p116 = scmp.ne.s32.totalorder %s108, %s110
      %p117 = scmp.eq.s32.totalorder %s23, 3
      %p118 = por %p116, %p117
      %p119 = scmp.ne.s32.totalorder %s110, %s111
      %p120 = scmp.eq.s32.totalorder %s23, 0
      %p121 = por %p119, %p120
      %p122 = scmp.ne.s32.totalorder %s110, %s111
      %p123 = scmp.eq.s32.totalorder %s24, 3
      %p124 = por %p122, %p123
      %p126 = scmp.ne.s32.totalorder %s111, %s125
      %p127 = scmp.eq.s32.totalorder %s24, 0
      %p128 = por %p126, %p127
      %s130 = sadd.s32 %s129, 1
      %p133 = scmp.eq.s32.totalorder %s18, 3
      %p134 = scmp.ne.s32.totalorder %s129, %s131
      %p135 = scmp.eq.s32.totalorder %s18, 0
      %p136 = por %p134, %p135
      %p137 = scmp.ne.s32.totalorder %s129, %s131
      %p138 = scmp.eq.s32.totalorder %s23, 3
      %p139 = por %p137, %p138
      %p140 = scmp.ne.s32.totalorder %s131, %s132
      %p141 = scmp.eq.s32.totalorder %s23, 0
      %p142 = por %p140, %p141
      %p143 = scmp.ne.s32.totalorder %s131, %s132
      %p144 = scmp.eq.s32.totalorder %s24, 3
      %p145 = por %p143, %p144
      %p147 = scmp.ne.s32.totalorder %s132, %s146
      %p148 = scmp.eq.s32.totalorder %s24, 0
      %p149 = por %p147, %p148
      %s150 = ssub.s32 %s25, %s37
      %s151 = ssub.s32 %s26, %s33
      %s152 = sor.u32 %s150, %s151
      %p153 = scmp.eq.s32.totalorder %s152, 0
      %s155 = sadd.s32 %s154, 1
      %s156 = scalar_select %p153, %s154, %s155
      %p159 = pneg %p153
      %p160 = scmp.eq.s32.totalorder %s18, 3
      %p161 = por %p159, %p160
      %p162 = scmp.ne.s32.totalorder %s154, %s157
      %p163 = scmp.eq.s32.totalorder %s18, 0
      %p164 = por %p162, %p163
      %p165 = scmp.ne.s32.totalorder %s154, %s157
      %p166 = scmp.eq.s32.totalorder %s23, 3
      %p167 = por %p165, %p166
      %p168 = scmp.ne.s32.totalorder %s157, %s158
      %p169 = scmp.eq.s32.totalorder %s23, 0
      %p170 = por %p168, %p169
      %p171 = scmp.ne.s32.totalorder %s157, %s158
      %p172 = scmp.eq.s32.totalorder %s24, 3
      %p173 = por %p171, %p172
      %p175 = scmp.ne.s32.totalorder %s158, %s174
      %p176 = scmp.eq.s32.totalorder %s24, 0
      %p177 = por %p175, %p176
      %s178 = ssub.s32 %s25, %s37
      %s179 = ssub.s32 %s26, %s33
      %s180 = sor.u32 %s178, %s179
      %p181 = scmp.eq.s32.totalorder %s180, 0
      %s183 = sadd.s32 %s182, 1
      %s184 = scalar_select %p181, %s182, %s183
      %p187 = pneg %p181
      %p188 = scmp.eq.s32.totalorder %s18, 3
      %p189 = por %p187, %p188
      %p190 = scmp.ne.s32.totalorder %s182, %s185
      %p191 = scmp.eq.s32.totalorder %s18, 0
      %p192 = por %p190, %p191
      %p193 = scmp.ne.s32.totalorder %s182, %s185
      %p194 = scmp.eq.s32.totalorder %s23, 3
      %p195 = por %p193, %p194
      %p196 = scmp.ne.s32.totalorder %s185, %s186
      %p197 = scmp.eq.s32.totalorder %s23, 0
      %p198 = por %p196, %p197
      %p199 = scmp.ne.s32.totalorder %s185, %s186
      %p200 = scmp.eq.s32.totalorder %s24, 3
      %p201 = por %p199, %p200
      %p203 = scmp.ne.s32.totalorder %s186, %s202
      %p204 = scmp.eq.s32.totalorder %s24, 0
      %p205 = por %p203, %p204
      %s206 = ssub.s32 %s25, %s37
      %s207 = ssub.s32 %s26, %s33
      %s208 = sor.u32 %s206, %s207
      %p209 = scmp.eq.s32.totalorder %s208, 0
      %s211 = sadd.s32 %s210, 1
      %s212 = scalar_select %p209, %s210, %s211
      %p215 = pneg %p209
      %p216 = scmp.eq.s32.totalorder %s18, 3
      %p217 = por %p215, %p216
      %p218 = scmp.ne.s32.totalorder %s210, %s213
      %p219 = scmp.eq.s32.totalorder %s18, 0
      %p220 = por %p218, %p219
      %p221 = scmp.ne.s32.totalorder %s210, %s213
      %p222 = scmp.eq.s32.totalorder %s23, 3
      %p223 = por %p221, %p222
      %p224 = scmp.ne.s32.totalorder %s213, %s214
      %p225 = scmp.eq.s32.totalorder %s23, 0
      %p226 = por %p224, %p225
      %p227 = scmp.ne.s32.totalorder %s213, %s214
      %p228 = scmp.eq.s32.totalorder %s24, 3
      %p229 = por %p227, %p228
      %p231 = scmp.ne.s32.totalorder %s214, %s230
      %p232 = scmp.eq.s32.totalorder %s24, 0
      %p233 = por %p231, %p232
      %p234 = scmp.le.s32.totalorder 1, %s18
      %p235 = scmp.lt.s32.totalorder %s18, 5
      %p236 = pnand %p234, %p235
      %p237 = pneg %p236
      // Predicated region
      $region9: #{tpu_custom_call.1} parent=5 // pred_check
        _
      $region10: #{tpu_custom_call.1} parent=5 // pred_check_branch
        %239 = sbr.rel (%p236) target = $region12
      $region11: #{tpu_custom_call.1} parent=5 // pred_region
        %s240 = ssub.s32 %s18, 1
        // Predicated region
        $region13: #{tpu_custom_call.1} parent=11 // pred_check
          %p241 = pneg %p79
        $region14: #{tpu_custom_call.1} parent=11 // pred_check_branch
          %243 = sbr.rel (%p241) target = $region16
        $region15: #{tpu_custom_call.1} parent=11 // pred_region
          _
        $region16: #{tpu_custom_call.1} parent=11 // pred_fallthru
          _
        // Predicated region
        $region17: #{tpu_custom_call.1} parent=11 // pred_check
          %p244 = pneg %p100
        $region18: #{tpu_custom_call.1} parent=11 // pred_check_branch
          %246 = sbr.rel (%p244) target = $region20
        $region19: #{tpu_custom_call.1} parent=11 // pred_region
          _
        $region20: #{tpu_custom_call.1} parent=11 // pred_fallthru
          _
        // Predicated region
        $region21: #{tpu_custom_call.1} parent=11 // pred_check
          %p247 = pneg %p121
        $region22: #{tpu_custom_call.1} parent=11 // pred_check_branch
          %249 = sbr.rel (%p247) target = $region24
        $region23: #{tpu_custom_call.1} parent=11 // pred_region
          %s251 = ssub.s32 24576, 24576
          %252 = vsyncadd [#allocation5], %s251
          %s253 = sshll.u32 [#allocation4], 4
          %s254 = int_to_ptr.vmem [resolvable:$true] %s253
          %259 = dma.hbm_to_vmem [thread:$0]  %s3, 24576, %s254, [#allocation5], 768, 768, 48
        $region24: #{tpu_custom_call.1} parent=11 // pred_fallthru
          _
        // Predicated region
        $region25: #{tpu_custom_call.1} parent=11 // pred_check
          %p260 = pneg %p142
        $region26: #{tpu_custom_call.1} parent=11 // pred_check_branch
          %262 = sbr.rel (%p260) target = $region28
        $region27: #{tpu_custom_call.1} parent=11 // pred_region
          _
        $region28: #{tpu_custom_call.1} parent=11 // pred_fallthru
          _
      $region12: #{tpu_custom_call.1} parent=5 // pred_fallthru
        _
      %p263 = scmp.lt.s32.totalorder %s18, 4
      // Predicated region
      $region29: #{tpu_custom_call.1} parent=5 // pred_check
        %p264 = pneg %p263
      $region30: #{tpu_custom_call.1} parent=5 // pred_check_branch
        %266 = sbr.rel (%p264) target = $region32
      $region31: #{tpu_custom_call.1} parent=5 // pred_region
        // Predicated region
        $region33: #{tpu_custom_call.1} parent=31 // pred_check
          %p267 = pneg %p52
        $region34: #{tpu_custom_call.1} parent=31 // pred_check_branch
          %269 = sbr.rel (%p267) target = $region36
        $region35: #{tpu_custom_call.1} parent=31 // pred_region
          %s270 = sand.u32 %s42, 1
          %s271 = scalar_lea.sflag [#allocation3], %s270
          %s272 = sand.u32 %s42, 1
          %s273 = smul.addr %s272, 256
          %s274 = scalar_lea.vmem [#allocation2], %s273
          %s275 = smul.u32 16, %s26
          %s277 = ssub.s32 4096, 4096
          %278 = vsyncadd %s271, %s277
          %s279 = smul.addr %s275, 2
          %s280 = smul.addr %s25, 64
          %s281 = sadd.s32 %s279, %s280
          %s282 = smul.addr %s281, 128
          %s283 = scalar_lea.hbm %s0, %s282
          %s284 = sshll.u32 %s274, 4
          %s285 = int_to_ptr.vmem [resolvable:$true] %s284
          %290 = dma.hbm_to_vmem [thread:$0]  %s283, 4096, %s285, %s271, 256, 256, 16
        $region36: #{tpu_custom_call.1} parent=31 // pred_fallthru
          _
      $region32: #{tpu_custom_call.1} parent=5 // pred_fallthru
        _
      %p291 = scmp.le.s32.totalorder 1, %s18
      %p292 = scmp.lt.s32.totalorder %s18, 5
      %p293 = pnand %p291, %p292
      %p294 = pneg %p293
      // Predicated region
      $region37: #{tpu_custom_call.1} parent=5 // pred_check
        _
      $region38: #{tpu_custom_call.1} parent=5 // pred_check_branch
        %296 = sbr.rel (%p293) target = $region40
      $region39: #{tpu_custom_call.1} parent=5 // pred_region
        %s297 = ssub.s32 %s18, 1
        %s298 = sand.u32 %s45, 1
        %s299 = scalar_lea.sflag [#allocation3], %s298
        %s300 = sand.u32 %s45, 1
        %s301 = smul.addr %s300, 256
        %s302 = scalar_lea.vmem [#allocation2], %s301
        // Predicated region
        $region41: #{tpu_custom_call.1} parent=39 // pred_check
          %p303 = pneg %p58
        $region42: #{tpu_custom_call.1} parent=39 // pred_check_branch
          %305 = sbr.rel (%p303) target = $region44
        $region43: #{tpu_custom_call.1} parent=39 // pred_region
          %306 = dma.done %s299, 4096
        $region44: #{tpu_custom_call.1} parent=39 // pred_fallthru
          _
        // Predicated region
        $region45: #{tpu_custom_call.1} parent=39 // pred_check
          %p307 = pneg %p121
        $region46: #{tpu_custom_call.1} parent=39 // pred_check_branch
          %309 = sbr.rel (%p307) target = $region48
        $region47: #{tpu_custom_call.1} parent=39 // pred_region
          %310 = dma.done [#allocation5], 24576
        $region48: #{tpu_custom_call.1} parent=39 // pred_fallthru
          _
        %s311 = sand.u32 %s45, 1
        %s312 = scalar_lea.sflag [#allocation3], %s311
        %s313 = sand.u32 %s45, 1
        %s314 = smul.addr %s313, 256
        %s315 = scalar_lea.vmem [#allocation2], %s314
        %p316 = pneg %p58
        %p317 = pneg %p55
        %p318 = pneg %p79
        %p319 = pneg %p76
        %p320 = pneg %p100
        %p321 = pneg %p97
        %p322 = pneg %p121
        %p323 = pneg %p118
        %p324 = pneg %p142
        %p325 = pneg %p139
        %p326 = pneg %p170
        %p327 = pneg %p167
        %s328 = sand.u32 %s157, 1
        %s329 = sand.u32 %s157, 1
        %s330 = smul.addr %s329, 512
        %s331 = scalar_lea.vmem [#allocation6], %s330
        %p332 = pneg %p198
        %p333 = pneg %p195
        %s334 = sand.u32 %s185, 1
        %s335 = sand.u32 %s185, 1
        %s336 = smul.addr %s335, 512
        %s337 = scalar_lea.vmem [#allocation7], %s336
        %p338 = pneg %p226
        %p339 = pneg %p223
        %s340 = sand.u32 %s213, 1
        %s341 = sand.u32 %s213, 1
        %s342 = smul.addr %s341, 512
        %s343 = scalar_lea.vmem [#allocation8], %s342
        %s344 = smul.u32 16, %s28
        %s345 = smul.u32 16, %s28
        %s346 = smul.u32 16, %s28
        %s347 = smul.u32 16, %s28
        %v348 = vld [vmem:[%s302] sm:$0xff]
        %v349 = vld [vmem:[%s302 + $0x8] sm:$0xff]
        %v350 = vld [vmem:[%s302 + $0x10] sm:$0xff]
        %v351 = vld [vmem:[%s302 + $0x18] sm:$0xff]
        %v352 = vld [vmem:[%s302 + $0x20] sm:$0xff]
        %v353 = vld [vmem:[%s302 + $0x28] sm:$0xff]
        %v354 = vld [vmem:[%s302 + $0x30] sm:$0xff]
        %v355 = vld [vmem:[%s302 + $0x38] sm:$0xff]
        %v356 = vld [vmem:[%s302 + $0x40] sm:$0xff]
        %v357 = vld [vmem:[%s302 + $0x48] sm:$0xff]
        %v358 = vld [vmem:[%s302 + $0x50] sm:$0xff]
        %v359 = vld [vmem:[%s302 + $0x58] sm:$0xff]
        %v360 = vld [vmem:[%s302 + $0x60] sm:$0xff]
        %v361 = vld [vmem:[%s302 + $0x68] sm:$0xff]
        %v362 = vld [vmem:[%s302 + $0x70] sm:$0xff]
        %v363 = vld [vmem:[%s302 + $0x78] sm:$0xff]
        %v364 = vld [vmem:[%s302 + $0x80] sm:$0xff]
        %v365 = vld [vmem:[%s302 + $0x88] sm:$0xff]
        %v366 = vld [vmem:[%s302 + $0x90] sm:$0xff]
        %v367 = vld [vmem:[%s302 + $0x98] sm:$0xff]
        %v368 = vld [vmem:[%s302 + $0xa0] sm:$0xff]
        %v369 = vld [vmem:[%s302 + $0xa8] sm:$0xff]
        %v370 = vld [vmem:[%s302 + $0xb0] sm:$0xff]
        %v371 = vld [vmem:[%s302 + $0xb8] sm:$0xff]
        %v372 = vld [vmem:[%s302 + $0xc0] sm:$0xff]
        %v373 = vld [vmem:[%s302 + $0xc8] sm:$0xff]
        %v374 = vld [vmem:[%s302 + $0xd0] sm:$0xff]
        %v375 = vld [vmem:[%s302 + $0xd8] sm:$0xff]
        %v376 = vld [vmem:[%s302 + $0xe0] sm:$0xff]
        %v377 = vld [vmem:[%s302 + $0xe8] sm:$0xff]
        %v378 = vld [vmem:[%s302 + $0xf0] sm:$0xff]
        %v379 = vld [vmem:[%s302 + $0xf8] sm:$0xff]
        %v380 = vld [vmem:[%s1] sm:$0x3]
        %v381 = vld [vmem:[%s2] sm:$0x3]
        %v382 = vadd.f32 %v348, %v349
        %383 = vadd.xlane.f32.xlu0 %v382
        %v384 = vpop.xlane.xlu0 %383
        %v385 = vadd.f32 %v350, %v351
        %386 = vadd.xlane.f32.xlu0 %v385
        %v387 = vpop.xlane.xlu0 %386
        %v388 = vadd.f32 %v352, %v353
        %389 = vadd.xlane.f32.xlu0 %v388
        %v390 = vpop.xlane.xlu0 %389
        %v391 = vadd.f32 %v354, %v355
        %392 = vadd.xlane.f32.xlu0 %v391
        %v393 = vpop.xlane.xlu0 %392
        %v394 = vadd.f32 %v356, %v357
        %395 = vadd.xlane.f32.xlu0 %v394
        %v396 = vpop.xlane.xlu0 %395
        %v397 = vadd.f32 %v358, %v359
        %398 = vadd.xlane.f32.xlu0 %v397
        %v399 = vpop.xlane.xlu0 %398
        %v400 = vadd.f32 %v360, %v361
        %401 = vadd.xlane.f32.xlu0 %v400
        %v402 = vpop.xlane.xlu0 %401
        %v403 = vadd.f32 %v362, %v363
        %404 = vadd.xlane.f32.xlu0 %v403
        %v405 = vpop.xlane.xlu0 %404
        %v406 = vadd.f32 %v364, %v365
        %407 = vadd.xlane.f32.xlu0 %v406
        %v408 = vpop.xlane.xlu0 %407
        %v409 = vadd.f32 %v366, %v367
        %410 = vadd.xlane.f32.xlu0 %v409
        %v411 = vpop.xlane.xlu0 %410
        %v412 = vadd.f32 %v368, %v369
        %413 = vadd.xlane.f32.xlu0 %v412
        %v414 = vpop.xlane.xlu0 %413
        %v415 = vadd.f32 %v370, %v371
        %416 = vadd.xlane.f32.xlu0 %v415
        %v417 = vpop.xlane.xlu0 %416
        %v418 = vadd.f32 %v372, %v373
        %419 = vadd.xlane.f32.xlu0 %v418
        %v420 = vpop.xlane.xlu0 %419
        %v421 = vadd.f32 %v374, %v375
        %422 = vadd.xlane.f32.xlu0 %v421
        %v423 = vpop.xlane.xlu0 %422
        %v424 = vadd.f32 %v376, %v377
        %425 = vadd.xlane.f32.xlu0 %v424
        %v426 = vpop.xlane.xlu0 %425
        %v427 = vadd.f32 %v378, %v379
        %428 = vadd.xlane.f32.xlu0 %v427
        %v429 = vpop.xlane.xlu0 %428
        %v430 = vrcp.pop 256.0
        %v431 = vmul.f32 %v384, %v430
        %v432 = vmul.f32 %v387, %v430
        %v433 = vmul.f32 %v390, %v430
        %v434 = vmul.f32 %v393, %v430
        %v435 = vmul.f32 %v396, %v430
        %v436 = vmul.f32 %v399, %v430
        %v437 = vmul.f32 %v402, %v430
        %v438 = vmul.f32 %v405, %v430
        %v439 = vmul.f32 %v408, %v430
        %v440 = vmul.f32 %v411, %v430
        %v441 = vmul.f32 %v414, %v430
        %v442 = vmul.f32 %v417, %v430
        %v443 = vmul.f32 %v420, %v430
        %v444 = vmul.f32 %v423, %v430
        %v445 = vmul.f32 %v426, %v430
        %v446 = vmul.f32 %v429, %v430
        %v447 = vsub.f32 %v348, %v431
        %v448 = vsub.f32 %v349, %v431
        %v449 = vsub.f32 %v350, %v432
        %v450 = vsub.f32 %v351, %v432
        %v451 = vsub.f32 %v352, %v433
        %v452 = vsub.f32 %v353, %v433
        %v453 = vsub.f32 %v354, %v434
        %v454 = vsub.f32 %v355, %v434
        %v455 = vsub.f32 %v356, %v435
        %v456 = vsub.f32 %v357, %v435
        %v457 = vsub.f32 %v358, %v436
        %v458 = vsub.f32 %v359, %v436
        %v459 = vsub.f32 %v360, %v437
        %v460 = vsub.f32 %v361, %v437
        %v461 = vsub.f32 %v362, %v438
        %v462 = vsub.f32 %v363, %v438
        %v463 = vsub.f32 %v364, %v439
        %v464 = vsub.f32 %v365, %v439
        %v465 = vsub.f32 %v366, %v440
        %v466 = vsub.f32 %v367, %v440
        %v467 = vsub.f32 %v368, %v441
        %v468 = vsub.f32 %v369, %v441
        %v469 = vsub.f32 %v370, %v442
        %v470 = vsub.f32 %v371, %v442
        %v471 = vsub.f32 %v372, %v443
        %v472 = vsub.f32 %v373, %v443
        %v473 = vsub.f32 %v374, %v444
        %v474 = vsub.f32 %v375, %v444
        %v475 = vsub.f32 %v376, %v445
        %v476 = vsub.f32 %v377, %v445
        %v477 = vsub.f32 %v378, %v446
        %v478 = vsub.f32 %v379, %v446
        %v479 = vmul.f32 %v447, %v447
        %v480 = vmul.f32 %v448, %v448
        %v481 = vmul.f32 %v449, %v449
        %v482 = vmul.f32 %v450, %v450
        %v483 = vmul.f32 %v451, %v451
        %v484 = vmul.f32 %v452, %v452
        %v485 = vmul.f32 %v453, %v453
        %v486 = vmul.f32 %v454, %v454
        %v487 = vmul.f32 %v455, %v455
        %v488 = vmul.f32 %v456, %v456
        %v489 = vmul.f32 %v457, %v457
        %v490 = vmul.f32 %v458, %v458
        %v491 = vmul.f32 %v459, %v459
        %v492 = vmul.f32 %v460, %v460
        %v493 = vmul.f32 %v461, %v461
        %v494 = vmul.f32 %v462, %v462
        %v495 = vmul.f32 %v463, %v463
        %v496 = vmul.f32 %v464, %v464
        %v497 = vmul.f32 %v465, %v465
        %v498 = vmul.f32 %v466, %v466
        %v499 = vmul.f32 %v467, %v467
        %v500 = vmul.f32 %v468, %v468
        %v501 = vmul.f32 %v469, %v469
        %v502 = vmul.f32 %v470, %v470
        %v503 = vmul.f32 %v471, %v471
        %v504 = vmul.f32 %v472, %v472
        %v505 = vmul.f32 %v473, %v473
        %v506 = vmul.f32 %v474, %v474
        %v507 = vmul.f32 %v475, %v475
        %v508 = vmul.f32 %v476, %v476
        %v509 = vmul.f32 %v477, %v477
        %v510 = vmul.f32 %v478, %v478
        %v511 = vadd.f32 %v479, %v480
        %512 = vadd.xlane.f32.xlu0 %v511
        %v513 = vpop.xlane.xlu0 %512
        %v514 = vadd.f32 %v481, %v482
        %515 = vadd.xlane.f32.xlu0 %v514
        %v516 = vpop.xlane.xlu0 %515
        %v517 = vadd.f32 %v483, %v484
        %518 = vadd.xlane.f32.xlu0 %v517
        %v519 = vpop.xlane.xlu0 %518
        %v520 = vadd.f32 %v485, %v486
        %521 = vadd.xlane.f32.xlu0 %v520
        %v522 = vpop.xlane.xlu0 %521
        %v523 = vadd.f32 %v487, %v488
        %524 = vadd.xlane.f32.xlu0 %v523
        %v525 = vpop.xlane.xlu0 %524
        %v526 = vadd.f32 %v489, %v490
        %527 = vadd.xlane.f32.xlu0 %v526
        %v528 = vpop.xlane.xlu0 %527
        %v529 = vadd.f32 %v491, %v492
        %530 = vadd.xlane.f32.xlu0 %v529
        %v531 = vpop.xlane.xlu0 %530
        %v532 = vadd.f32 %v493, %v494
        %533 = vadd.xlane.f32.xlu0 %v532
        %v534 = vpop.xlane.xlu0 %533
        %v535 = vadd.f32 %v495, %v496
        %536 = vadd.xlane.f32.xlu0 %v535
        %v537 = vpop.xlane.xlu0 %536
        %v538 = vadd.f32 %v497, %v498
        %539 = vadd.xlane.f32.xlu0 %v538
        %v540 = vpop.xlane.xlu0 %539
        %v541 = vadd.f32 %v499, %v500
        %542 = vadd.xlane.f32.xlu0 %v541
        %v543 = vpop.xlane.xlu0 %542
        %v544 = vadd.f32 %v501, %v502
        %545 = vadd.xlane.f32.xlu0 %v544
        %v546 = vpop.xlane.xlu0 %545
        %v547 = vadd.f32 %v503, %v504
        %548 = vadd.xlane.f32.xlu0 %v547
        %v549 = vpop.xlane.xlu0 %548
        %v550 = vadd.f32 %v505, %v506
        %551 = vadd.xlane.f32.xlu0 %v550
        %v552 = vpop.xlane.xlu0 %551
        %v553 = vadd.f32 %v507, %v508
        %554 = vadd.xlane.f32.xlu0 %v553
        %v555 = vpop.xlane.xlu0 %554
        %v556 = vadd.f32 %v509, %v510
        %557 = vadd.xlane.f32.xlu0 %v556
        %v558 = vpop.xlane.xlu0 %557
        %v559 = vmul.f32 %v513, %v430
        %v560 = vmul.f32 %v516, %v430
        %v561 = vmul.f32 %v519, %v430
        %v562 = vmul.f32 %v522, %v430
        %v563 = vmul.f32 %v525, %v430
        %v564 = vmul.f32 %v528, %v430
        %v565 = vmul.f32 %v531, %v430
        %v566 = vmul.f32 %v534, %v430
        %v567 = vmul.f32 %v537, %v430
        %v568 = vmul.f32 %v540, %v430
        %v569 = vmul.f32 %v543, %v430
        %v570 = vmul.f32 %v546, %v430
        %v571 = vmul.f32 %v549, %v430
        %v572 = vmul.f32 %v552, %v430
        %v573 = vmul.f32 %v555, %v430
        %v574 = vmul.f32 %v558, %v430
        %v575 = vadd.f32 %v559, 1e-05
        %v576 = vadd.f32 %v560, 1e-05
        %v577 = vadd.f32 %v561, 1e-05
        %v578 = vadd.f32 %v562, 1e-05
        %v579 = vadd.f32 %v563, 1e-05
        %v580 = vadd.f32 %v564, 1e-05
        %v581 = vadd.f32 %v565, 1e-05
        %v582 = vadd.f32 %v566, 1e-05
        %v583 = vadd.f32 %v567, 1e-05
        %v584 = vadd.f32 %v568, 1e-05
        %v585 = vadd.f32 %v569, 1e-05
        %v586 = vadd.f32 %v570, 1e-05
        %v587 = vadd.f32 %v571, 1e-05
        %v588 = vadd.f32 %v572, 1e-05
        %v589 = vadd.f32 %v573, 1e-05
        %v590 = vadd.f32 %v574, 1e-05
        %v591 = vrsqrt.pop %v575
        %v592 = vrsqrt.pop %v576
        %v593 = vrsqrt.pop %v577
        %v594 = vrsqrt.pop %v578
        %v595 = vrsqrt.pop %v579
        %v596 = vrsqrt.pop %v580
        %v597 = vrsqrt.pop %v581
        %v598 = vrsqrt.pop %v582
        %v599 = vrsqrt.pop %v583
        %v600 = vrsqrt.pop %v584
        %v601 = vrsqrt.pop %v585
        %v602 = vrsqrt.pop %v586
        %v603 = vrsqrt.pop %v587
        %v604 = vrsqrt.pop %v588
        %v605 = vrsqrt.pop %v589
        %v606 = vrsqrt.pop %v590
        %v607 = vmul.f32 %v447, %v591
        %v608 = vmul.f32 %v448, %v591
        %v609 = vmul.f32 %v449, %v592
        %v610 = vmul.f32 %v450, %v592
        %v611 = vmul.f32 %v451, %v593
        %v612 = vmul.f32 %v452, %v593
        %v613 = vmul.f32 %v453, %v594
        %v614 = vmul.f32 %v454, %v594
        %v615 = vmul.f32 %v455, %v595
        %v616 = vmul.f32 %v456, %v595
        %v617 = vmul.f32 %v457, %v596
        %v618 = vmul.f32 %v458, %v596
        %v619 = vmul.f32 %v459, %v597
        %v620 = vmul.f32 %v460, %v597
        %v621 = vmul.f32 %v461, %v598
        %v622 = vmul.f32 %v462, %v598
        %v623 = vmul.f32 %v463, %v599
        %v624 = vmul.f32 %v464, %v599
        %v625 = vmul.f32 %v465, %v600
        %v626 = vmul.f32 %v466, %v600
        %v627 = vmul.f32 %v467, %v601
        %v628 = vmul.f32 %v468, %v601
        %v629 = vmul.f32 %v469, %v602
        %v630 = vmul.f32 %v470, %v602
        %v631 = vmul.f32 %v471, %v603
        %v632 = vmul.f32 %v472, %v603
        %v633 = vmul.f32 %v473, %v604
        %v634 = vmul.f32 %v474, %v604
        %v635 = vmul.f32 %v475, %v605
        %v636 = vmul.f32 %v476, %v605
        %v637 = vmul.f32 %v477, %v606
        %v638 = vmul.f32 %v478, %v606
        %v640 = vlaneseq
        %v641 = vshrl.u32 %v640, 7
        %v642 = vsub.s32 0, %v641
        %v643 = vrot.slane %v380, %v642
        %v644 = vlaneseq
        %v645 = vshrl.u32 %v644, 7
        %v646 = vsub.s32 1, %v645
        %v647 = vrot.slane %v380, %v646
        %v650 = vmul.f32 %v607, %v643
        %v651 = vmul.f32 %v608, %v647
        %v652 = vmul.f32 %v609, %v643
        %v653 = vmul.f32 %v610, %v647
        %v654 = vmul.f32 %v611, %v643
        %v655 = vmul.f32 %v612, %v647
        %v656 = vmul.f32 %v613, %v643
        %v657 = vmul.f32 %v614, %v647
        %v658 = vmul.f32 %v615, %v643
        %v659 = vmul.f32 %v616, %v647
        %v660 = vmul.f32 %v617, %v643
        %v661 = vmul.f32 %v618, %v647
        %v662 = vmul.f32 %v619, %v643
        %v663 = vmul.f32 %v620, %v647
        %v664 = vmul.f32 %v621, %v643
        %v665 = vmul.f32 %v622, %v647
        %v666 = vmul.f32 %v623, %v643
        %v667 = vmul.f32 %v624, %v647
        %v668 = vmul.f32 %v625, %v643
        %v669 = vmul.f32 %v626, %v647
        %v670 = vmul.f32 %v627, %v643
        %v671 = vmul.f32 %v628, %v647
        %v672 = vmul.f32 %v629, %v643
        %v673 = vmul.f32 %v630, %v647
        %v674 = vmul.f32 %v631, %v643
        %v675 = vmul.f32 %v632, %v647
        %v676 = vmul.f32 %v633, %v643
        %v677 = vmul.f32 %v634, %v647
        %v678 = vmul.f32 %v635, %v643
        %v679 = vmul.f32 %v636, %v647
        %v680 = vmul.f32 %v637, %v643
        %v681 = vmul.f32 %v638, %v647
        %v683 = vlaneseq
        %v684 = vshrl.u32 %v683, 7
        %v685 = vsub.s32 0, %v684
        %v686 = vrot.slane %v381, %v685
        %v687 = vlaneseq
        %v688 = vshrl.u32 %v687, 7
        %v689 = vsub.s32 1, %v688
        %v690 = vrot.slane %v381, %v689
        %v693 = vadd.f32 %v650, %v686
        %v694 = vadd.f32 %v651, %v690
        %v695 = vadd.f32 %v652, %v686
        %v696 = vadd.f32 %v653, %v690
        %v697 = vadd.f32 %v654, %v686
        %v698 = vadd.f32 %v655, %v690
        %v699 = vadd.f32 %v656, %v686
        %v700 = vadd.f32 %v657, %v690
        %v701 = vadd.f32 %v658, %v686
        %v702 = vadd.f32 %v659, %v690
        %v703 = vadd.f32 %v660, %v686
        %v704 = vadd.f32 %v661, %v690
        %v705 = vadd.f32 %v662, %v686
        %v706 = vadd.f32 %v663, %v690
        %v707 = vadd.f32 %v664, %v686
        %v708 = vadd.f32 %v665, %v690
        %v709 = vadd.f32 %v666, %v686
        %v710 = vadd.f32 %v667, %v690
        %v711 = vadd.f32 %v668, %v686
        %v712 = vadd.f32 %v669, %v690
        %v713 = vadd.f32 %v670, %v686
        %v714 = vadd.f32 %v671, %v690
        %v715 = vadd.f32 %v672, %v686
        %v716 = vadd.f32 %v673, %v690
        %v717 = vadd.f32 %v674, %v686
        %v718 = vadd.f32 %v675, %v690
        %v719 = vadd.f32 %v676, %v686
        %v720 = vadd.f32 %v677, %v690
        %v721 = vadd.f32 %v678, %v686
        %v722 = vadd.f32 %v679, %v690
        %v723 = vadd.f32 %v680, %v686
        %v724 = vadd.f32 %v681, %v690
        %v725 = vld [vmem:[#allocation4] sm:$0xff]
        %v726 = vld [vmem:[#allocation4 + $0x8] sm:$0xff]
        %v727 = vld [vmem:[#allocation4 + $0x10] sm:$0xff]
        %v728 = vld [vmem:[#allocation4 + $0x18] sm:$0xff]
        %v729 = vld [vmem:[#allocation4 + $0x20] sm:$0xff]
        %v730 = vld [vmem:[#allocation4 + $0x28] sm:$0xff]
        %v731 = vld [vmem:[#allocation4 + $0x30] sm:$0xff]
        %v732 = vld [vmem:[#allocation4 + $0x38] sm:$0xff]
        %v733 = vld [vmem:[#allocation4 + $0x40] sm:$0xff]
        %v734 = vld [vmem:[#allocation4 + $0x48] sm:$0xff]
        %v735 = vld [vmem:[#allocation4 + $0x50] sm:$0xff]
        %v736 = vld [vmem:[#allocation4 + $0x58] sm:$0xff]
        %v737 = vld [vmem:[#allocation4 + $0x60] sm:$0xff]
        %v738 = vld [vmem:[#allocation4 + $0x68] sm:$0xff]
        %v739 = vld [vmem:[#allocation4 + $0x70] sm:$0xff]
        %v740 = vld [vmem:[#allocation4 + $0x78] sm:$0xff]
        %v741 = vld [vmem:[#allocation4 + $0x80] sm:$0xff]
        %v742 = vld [vmem:[#allocation4 + $0x88] sm:$0xff]
        %v743 = vld [vmem:[#allocation4 + $0x90] sm:$0xff]
        %v744 = vld [vmem:[#allocation4 + $0x98] sm:$0xff]
        %v745 = vld [vmem:[#allocation4 + $0xa0] sm:$0xff]
        %v746 = vld [vmem:[#allocation4 + $0xa8] sm:$0xff]
        %v747 = vld [vmem:[#allocation4 + $0xb0] sm:$0xff]
        %v748 = vld [vmem:[#allocation4 + $0xb8] sm:$0xff]
        %v749 = vld [vmem:[#allocation4 + $0xc0] sm:$0xff]
        %v750 = vld [vmem:[#allocation4 + $0xc8] sm:$0xff]
        %v751 = vld [vmem:[#allocation4 + $0xd0] sm:$0xff]
        %v752 = vld [vmem:[#allocation4 + $0xd8] sm:$0xff]
        %v753 = vld [vmem:[#allocation4 + $0xe0] sm:$0xff]
        %v754 = vld [vmem:[#allocation4 + $0xe8] sm:$0xff]
        %v755 = vld [vmem:[#allocation4 + $0xf0] sm:$0xff]
        %v756 = vld [vmem:[#allocation4 + $0xf8] sm:$0xff]
        %v757 = vld [vmem:[#allocation4 + $0x100] sm:$0xff]
        %v758 = vld [vmem:[#allocation4 + $0x108] sm:$0xff]
        %v759 = vld [vmem:[#allocation4 + $0x110] sm:$0xff]
        %v760 = vld [vmem:[#allocation4 + $0x118] sm:$0xff]
        %v761 = vld [vmem:[#allocation4 + $0x120] sm:$0xff]
        %v762 = vld [vmem:[#allocation4 + $0x128] sm:$0xff]
        %v763 = vld [vmem:[#allocation4 + $0x130] sm:$0xff]
        %v764 = vld [vmem:[#allocation4 + $0x138] sm:$0xff]
        %v765 = vld [vmem:[#allocation4 + $0x140] sm:$0xff]
        %v766 = vld [vmem:[#allocation4 + $0x148] sm:$0xff]
        %v767 = vld [vmem:[#allocation4 + $0x150] sm:$0xff]
        %v768 = vld [vmem:[#allocation4 + $0x158] sm:$0xff]
        %v769 = vld [vmem:[#allocation4 + $0x160] sm:$0xff]
        %v770 = vld [vmem:[#allocation4 + $0x168] sm:$0xff]
        %v771 = vld [vmem:[#allocation4 + $0x170] sm:$0xff]
        %v772 = vld [vmem:[#allocation4 + $0x178] sm:$0xff]
        %v773 = vld [vmem:[#allocation4 + $0x180] sm:$0xff]
        %v774 = vld [vmem:[#allocation4 + $0x188] sm:$0xff]
        %v775 = vld [vmem:[#allocation4 + $0x190] sm:$0xff]
        %v776 = vld [vmem:[#allocation4 + $0x198] sm:$0xff]
        %v777 = vld [vmem:[#allocation4 + $0x1a0] sm:$0xff]
        %v778 = vld [vmem:[#allocation4 + $0x1a8] sm:$0xff]
        %v779 = vld [vmem:[#allocation4 + $0x1b0] sm:$0xff]
        %v780 = vld [vmem:[#allocation4 + $0x1b8] sm:$0xff]
        %v781 = vld [vmem:[#allocation4 + $0x1c0] sm:$0xff]
        %v782 = vld [vmem:[#allocation4 + $0x1c8] sm:$0xff]
        %v783 = vld [vmem:[#allocation4 + $0x1d0] sm:$0xff]
        %v784 = vld [vmem:[#allocation4 + $0x1d8] sm:$0xff]
        %v785 = vld [vmem:[#allocation4 + $0x1e0] sm:$0xff]
        %v786 = vld [vmem:[#allocation4 + $0x1e8] sm:$0xff]
        %v787 = vld [vmem:[#allocation4 + $0x1f0] sm:$0xff]
        %v788 = vld [vmem:[#allocation4 + $0x1f8] sm:$0xff]
        %v789 = vld [vmem:[#allocation4 + $0x200] sm:$0xff]
        %v790 = vld [vmem:[#allocation4 + $0x208] sm:$0xff]
        %v791 = vld [vmem:[#allocation4 + $0x210] sm:$0xff]
        %v792 = vld [vmem:[#allocation4 + $0x218] sm:$0xff]
        %v793 = vld [vmem:[#allocation4 + $0x220] sm:$0xff]
        %v794 = vld [vmem:[#allocation4 + $0x228] sm:$0xff]
        %v795 = vld [vmem:[#allocation4 + $0x230] sm:$0xff]
        %v796 = vld [vmem:[#allocation4 + $0x238] sm:$0xff]
        %v797 = vld [vmem:[#allocation4 + $0x240] sm:$0xff]
        %v798 = vld [vmem:[#allocation4 + $0x248] sm:$0xff]
        %v799 = vld [vmem:[#allocation4 + $0x250] sm:$0xff]
        %v800 = vld [vmem:[#allocation4 + $0x258] sm:$0xff]
        %v801 = vld [vmem:[#allocation4 + $0x260] sm:$0xff]
        %v802 = vld [vmem:[#allocation4 + $0x268] sm:$0xff]
        %v803 = vld [vmem:[#allocation4 + $0x270] sm:$0xff]
        %v804 = vld [vmem:[#allocation4 + $0x278] sm:$0xff]
        %v805 = vld [vmem:[#allocation4 + $0x280] sm:$0xff]
        %v806 = vld [vmem:[#allocation4 + $0x288] sm:$0xff]
        %v807 = vld [vmem:[#allocation4 + $0x290] sm:$0xff]
        %v808 = vld [vmem:[#allocation4 + $0x298] sm:$0xff]
        %v809 = vld [vmem:[#allocation4 + $0x2a0] sm:$0xff]
        %v810 = vld [vmem:[#allocation4 + $0x2a8] sm:$0xff]
        %v811 = vld [vmem:[#allocation4 + $0x2b0] sm:$0xff]
        %v812 = vld [vmem:[#allocation4 + $0x2b8] sm:$0xff]
        %v813 = vld [vmem:[#allocation4 + $0x2c0] sm:$0xff]
        %v814 = vld [vmem:[#allocation4 + $0x2c8] sm:$0xff]
        %v815 = vld [vmem:[#allocation4 + $0x2d0] sm:$0xff]
        %v816 = vld [vmem:[#allocation4 + $0x2d8] sm:$0xff]
        %v817 = vld [vmem:[#allocation4 + $0x2e0] sm:$0xff]
        %v818 = vld [vmem:[#allocation4 + $0x2e8] sm:$0xff]
        %v819 = vld [vmem:[#allocation4 + $0x2f0] sm:$0xff]
        %v820 = vld [vmem:[#allocation4 + $0x2f8] sm:$0xff]
        %v821 = vld [vmem:[#allocation4 + $0x300] sm:$0xff]
        %v822 = vld [vmem:[#allocation4 + $0x308] sm:$0xff]
        %v823 = vld [vmem:[#allocation4 + $0x310] sm:$0xff]
        %v824 = vld [vmem:[#allocation4 + $0x318] sm:$0xff]
        %v825 = vld [vmem:[#allocation4 + $0x320] sm:$0xff]
        %v826 = vld [vmem:[#allocation4 + $0x328] sm:$0xff]
        %v827 = vld [vmem:[#allocation4 + $0x330] sm:$0xff]
        %v828 = vld [vmem:[#allocation4 + $0x338] sm:$0xff]
        %v829 = vld [vmem:[#allocation4 + $0x340] sm:$0xff]
        %v830 = vld [vmem:[#allocation4 + $0x348] sm:$0xff]
        %v831 = vld [vmem:[#allocation4 + $0x350] sm:$0xff]
        %v832 = vld [vmem:[#allocation4 + $0x358] sm:$0xff]
        %v833 = vld [vmem:[#allocation4 + $0x360] sm:$0xff]
        %v834 = vld [vmem:[#allocation4 + $0x368] sm:$0xff]
        %v835 = vld [vmem:[#allocation4 + $0x370] sm:$0xff]
        %v836 = vld [vmem:[#allocation4 + $0x378] sm:$0xff]
        %v837 = vld [vmem:[#allocation4 + $0x380] sm:$0xff]
        %v838 = vld [vmem:[#allocation4 + $0x388] sm:$0xff]
        %v839 = vld [vmem:[#allocation4 + $0x390] sm:$0xff]
        %v840 = vld [vmem:[#allocation4 + $0x398] sm:$0xff]
        %v841 = vld [vmem:[#allocation4 + $0x3a0] sm:$0xff]
        %v842 = vld [vmem:[#allocation4 + $0x3a8] sm:$0xff]
        %v843 = vld [vmem:[#allocation4 + $0x3b0] sm:$0xff]
        %v844 = vld [vmem:[#allocation4 + $0x3b8] sm:$0xff]
        %v845 = vld [vmem:[#allocation4 + $0x3c0] sm:$0xff]
        %v846 = vld [vmem:[#allocation4 + $0x3c8] sm:$0xff]
        %v847 = vld [vmem:[#allocation4 + $0x3d0] sm:$0xff]
        %v848 = vld [vmem:[#allocation4 + $0x3d8] sm:$0xff]
        %v849 = vld [vmem:[#allocation4 + $0x3e0] sm:$0xff]
        %v850 = vld [vmem:[#allocation4 + $0x3e8] sm:$0xff]
        %v851 = vld [vmem:[#allocation4 + $0x3f0] sm:$0xff]
        %v852 = vld [vmem:[#allocation4 + $0x3f8] sm:$0xff]
        %v853 = vld [vmem:[#allocation4 + $0x400] sm:$0xff]
        %v854 = vld [vmem:[#allocation4 + $0x408] sm:$0xff]
        %v855 = vld [vmem:[#allocation4 + $0x410] sm:$0xff]
        %v856 = vld [vmem:[#allocation4 + $0x418] sm:$0xff]
        %v857 = vld [vmem:[#allocation4 + $0x420] sm:$0xff]
        %v858 = vld [vmem:[#allocation4 + $0x428] sm:$0xff]
        %v859 = vld [vmem:[#allocation4 + $0x430] sm:$0xff]
        %v860 = vld [vmem:[#allocation4 + $0x438] sm:$0xff]
        %v861 = vld [vmem:[#allocation4 + $0x440] sm:$0xff]
        %v862 = vld [vmem:[#allocation4 + $0x448] sm:$0xff]
        %v863 = vld [vmem:[#allocation4 + $0x450] sm:$0xff]
        %v864 = vld [vmem:[#allocation4 + $0x458] sm:$0xff]
        %v865 = vld [vmem:[#allocation4 + $0x460] sm:$0xff]
        %v866 = vld [vmem:[#allocation4 + $0x468] sm:$0xff]
        %v867 = vld [vmem:[#allocation4 + $0x470] sm:$0xff]
        %v868 = vld [vmem:[#allocation4 + $0x478] sm:$0xff]
        %v869 = vld [vmem:[#allocation4 + $0x480] sm:$0xff]
        %v870 = vld [vmem:[#allocation4 + $0x488] sm:$0xff]
        %v871 = vld [vmem:[#allocation4 + $0x490] sm:$0xff]
        %v872 = vld [vmem:[#allocation4 + $0x498] sm:$0xff]
        %v873 = vld [vmem:[#allocation4 + $0x4a0] sm:$0xff]
        %v874 = vld [vmem:[#allocation4 + $0x4a8] sm:$0xff]
        %v875 = vld [vmem:[#allocation4 + $0x4b0] sm:$0xff]
        %v876 = vld [vmem:[#allocation4 + $0x4b8] sm:$0xff]
        %v877 = vld [vmem:[#allocation4 + $0x4c0] sm:$0xff]
        %v878 = vld [vmem:[#allocation4 + $0x4c8] sm:$0xff]
        %v879 = vld [vmem:[#allocation4 + $0x4d0] sm:$0xff]
        %v880 = vld [vmem:[#allocation4 + $0x4d8] sm:$0xff]
        %v881 = vld [vmem:[#allocation4 + $0x4e0] sm:$0xff]
        %v882 = vld [vmem:[#allocation4 + $0x4e8] sm:$0xff]
        %v883 = vld [vmem:[#allocation4 + $0x4f0] sm:$0xff]
        %v884 = vld [vmem:[#allocation4 + $0x4f8] sm:$0xff]
        %v885 = vld [vmem:[#allocation4 + $0x500] sm:$0xff]
        %v886 = vld [vmem:[#allocation4 + $0x508] sm:$0xff]
        %v887 = vld [vmem:[#allocation4 + $0x510] sm:$0xff]
        %v888 = vld [vmem:[#allocation4 + $0x518] sm:$0xff]
        %v889 = vld [vmem:[#allocation4 + $0x520] sm:$0xff]
        %v890 = vld [vmem:[#allocation4 + $0x528] sm:$0xff]
        %v891 = vld [vmem:[#allocation4 + $0x530] sm:$0xff]
        %v892 = vld [vmem:[#allocation4 + $0x538] sm:$0xff]
        %v893 = vld [vmem:[#allocation4 + $0x540] sm:$0xff]
        %v894 = vld [vmem:[#allocation4 + $0x548] sm:$0xff]
        %v895 = vld [vmem:[#allocation4 + $0x550] sm:$0xff]
        %v896 = vld [vmem:[#allocation4 + $0x558] sm:$0xff]
        %v897 = vld [vmem:[#allocation4 + $0x560] sm:$0xff]
        %v898 = vld [vmem:[#allocation4 + $0x568] sm:$0xff]
        %v899 = vld [vmem:[#allocation4 + $0x570] sm:$0xff]
        %v900 = vld [vmem:[#allocation4 + $0x578] sm:$0xff]
        %v901 = vld [vmem:[#allocation4 + $0x580] sm:$0xff]
        %v902 = vld [vmem:[#allocation4 + $0x588] sm:$0xff]
        %v903 = vld [vmem:[#allocation4 + $0x590] sm:$0xff]
        %v904 = vld [vmem:[#allocation4 + $0x598] sm:$0xff]
        %v905 = vld [vmem:[#allocation4 + $0x5a0] sm:$0xff]
        %v906 = vld [vmem:[#allocation4 + $0x5a8] sm:$0xff]
        %v907 = vld [vmem:[#allocation4 + $0x5b0] sm:$0xff]
        %v908 = vld [vmem:[#allocation4 + $0x5b8] sm:$0xff]
        %v909 = vld [vmem:[#allocation4 + $0x5c0] sm:$0xff]
        %v910 = vld [vmem:[#allocation4 + $0x5c8] sm:$0xff]
        %v911 = vld [vmem:[#allocation4 + $0x5d0] sm:$0xff]
        %v912 = vld [vmem:[#allocation4 + $0x5d8] sm:$0xff]
        %v913 = vld [vmem:[#allocation4 + $0x5e0] sm:$0xff]
        %v914 = vld [vmem:[#allocation4 + $0x5e8] sm:$0xff]
        %v915 = vld [vmem:[#allocation4 + $0x5f0] sm:$0xff]
        %v916 = vld [vmem:[#allocation4 + $0x5f8] sm:$0xff]
        %v917 = vld [vmem:[%s4] sm:$0x3f]
        %v919 = vlaneseq
        %v920 = vshrl.u32 %v919, 7
        %v921 = vsub.s32 0, %v920
        %v922 = vrot.slane %v917, %v921
        %v923 = vlaneseq
        %v924 = vshrl.u32 %v923, 7
        %v925 = vsub.s32 1, %v924
        %v926 = vrot.slane %v917, %v925
        %v927 = vlaneseq
        %v928 = vshrl.u32 %v927, 7
        %v929 = vsub.s32 2, %v928
        %v930 = vrot.slane %v917, %v929
        %v931 = vlaneseq
        %v932 = vshrl.u32 %v931, 7
        %v933 = vsub.s32 3, %v932
        %v934 = vrot.slane %v917, %v933
        %v935 = vlaneseq
        %v936 = vshrl.u32 %v935, 7
        %v937 = vsub.s32 4, %v936
        %v938 = vrot.slane %v917, %v937
        %v939 = vlaneseq
        %v940 = vshrl.u32 %v939, 7
        %v941 = vsub.s32 5, %v940
        %v942 = vrot.slane %v917, %v941
        %949 = vmatprep.subr.mxu0 %v726
        %950 = vmatpush1.msra.mxu0 %v725
        %951 = vmatprep.subr.mxu0 %v732
        %952 = vmatpush1.msra.mxu0 %v731
        %953 = vmatprep.subr.mxu0 %v738
        %954 = vmatpush1.msra.mxu0 %v737
        %955 = vmatprep.subr.mxu0 %v744
        %956 = vmatpush1.msra.mxu0 %v743
        %957 = vmatprep.subr.mxu0 %v750
        %958 = vmatpush1.msra.mxu0 %v749
        %959 = vmatprep.subr.mxu0 %v756
        %960 = vmatpush1.msra.mxu0 %v755
        %961 = vmatprep.subr.mxu0 %v762
        %962 = vmatpush1.msra.mxu0 %v761
        %963 = vmatprep.subr.mxu0 %v768
        %964 = vmatpush1.msra.mxu0 %v767
        %965 = vmatprep.subr.mxu0 %v774
        %966 = vmatpush1.msra.mxu0 %v773
        %967 = vmatprep.subr.mxu0 %v780
        %968 = vmatpush1.msra.mxu0 %v779
        %969 = vmatprep.subr.mxu0 %v786
        %970 = vmatpush1.msra.mxu0 %v785
        %971 = vmatprep.subr.mxu0 %v792
        %972 = vmatpush1.msra.mxu0 %v791
        %973 = vmatprep.subr.mxu0 %v798
        %974 = vmatpush1.msra.mxu0 %v797
        %975 = vmatprep.subr.mxu0 %v804
        %976 = vmatpush1.msra.mxu0 %v803
        %977 = vmatprep.subr.mxu0 %v810
        %978 = vmatpush1.msra.mxu0 %v809
        %979 = vmatprep.subr.mxu0 %v816
        %980 = vmatpush1.msra.mxu0 %v815
        %981 = vmatprep.subr.mxu0 %v822
        %982 = vmatpush1.msra.mxu0 %v821
        %983 = vmatprep.subr.mxu0 %v828
        %984 = vmatpush1.msra.mxu0 %v827
        %985 = vmatprep.subr.mxu0 %v834
        %986 = vmatpush1.msra.mxu0 %v833
        %987 = vmatprep.subr.mxu0 %v840
        %988 = vmatpush1.msra.mxu0 %v839
        %989 = vmatprep.subr.mxu0 %v846
        %990 = vmatpush1.msra.mxu0 %v845
        %991 = vmatprep.subr.mxu0 %v852
        %992 = vmatpush1.msra.mxu0 %v851
        %993 = vmatprep.subr.mxu0 %v858
        %994 = vmatpush1.msra.mxu0 %v857
        %995 = vmatprep.subr.mxu0 %v864
        %996 = vmatpush1.msra.mxu0 %v863
        %997 = vmatprep.subr.mxu0 %v870
        %998 = vmatpush1.msra.mxu0 %v869
        %999 = vmatprep.subr.mxu0 %v876
        %1000 = vmatpush1.msra.mxu0 %v875
        %1001 = vmatprep.subr.mxu0 %v882
        %1002 = vmatpush1.msra.mxu0 %v881
        %1003 = vmatprep.subr.mxu0 %v888
        %1004 = vmatpush1.msra.mxu0 %v887
        %1005 = vmatprep.subr.mxu0 %v894
        %1006 = vmatpush1.msra.mxu0 %v893
        %1007 = vmatprep.subr.mxu0 %v900
        %1008 = vmatpush1.msra.mxu0 %v899
        %1009 = vmatprep.subr.mxu0 %v906
        %1010 = vmatpush1.msra.mxu0 %v905
        %1011 = vmatprep.subr.mxu0 %v912
        %1012 = vmatpush1.msra.mxu0 %v911
        %1013 = vmatprep.mubr.f32.mxu0 %v694
        %1014 = vmatmul.mubr.f32.gmra.mrb[0].mxu0 %v693
        %v1015 = vpop.f32.mrb[0].mxu0
        %v1016 = vadd.f32 %v922, %v1015
        %v1017 = vpop.f32.mrb[0].mxu0
        %v1018 = vadd.f32 %v926, %v1017
        %1019 = vmatprep.mubr.f32.mxu0 %v696
        %1020 = vmatmul.mubr.f32.gmra.mrb[0].mxu0 %v695
        %v1021 = vpop.f32.mrb[0].mxu0
        %v1022 = vadd.f32 %v922, %v1021
        %v1023 = vpop.f32.mrb[0].mxu0
        %v1024 = vadd.f32 %v926, %v1023
        %1025 = vmatprep.mubr.f32.mxu0 %v698
        %1026 = vmatmul.mubr.f32.gmra.mrb[0].mxu0 %v697
        %v1027 = vpop.f32.mrb[0].mxu0
        %v1028 = vadd.f32 %v922, %v1027
        %v1029 = vpop.f32.mrb[0].mxu0
        %v1030 = vadd.f32 %v926, %v1029
        %1031 = vmatprep.mubr.f32.mxu0 %v700
        %1032 = vmatmul.mubr.f32.gmra.mrb[0].mxu0 %v699
        %v1033 = vpop.f32.mrb[0].mxu0
        %v1034 = vadd.f32 %v922, %v1033
        %v1035 = vpop.f32.mrb[0].mxu0
        %v1036 = vadd.f32 %v926, %v1035
        %1037 = vmatprep.mubr.f32.mxu0 %v702
        %1038 = vmatmul.mubr.f32.gmra.mrb[0].mxu0 %v701
        %v1039 = vpop.f32.mrb[0].mxu0
        %v1040 = vadd.f32 %v922, %v1039
        %v1041 = vpop.f32.mrb[0].mxu0
        %v1042 = vadd.f32 %v926, %v1041
        %1043 = vmatprep.mubr.f32.mxu0 %v704
        %1044 = vmatmul.mubr.f32.gmra.mrb[0].mxu0 %v703
        %v1045 = vpop.f32.mrb[0].mxu0
        %v1046 = vadd.f32 %v922, %v1045
        %v1047 = vpop.f32.mrb[0].mxu0
        %v1048 = vadd.f32 %v926, %v1047
        %1049 = vmatprep.mubr.f32.mxu0 %v706
        %1050 = vmatmul.mubr.f32.gmra.mrb[0].mxu0 %v705
        %v1051 = vpop.f32.mrb[0].mxu0
        %v1052 = vadd.f32 %v922, %v1051
        %v1053 = vpop.f32.mrb[0].mxu0
        %v1054 = vadd.f32 %v926, %v1053
        %1055 = vmatprep.mubr.f32.mxu0 %v708
        %1056 = vmatmul.mubr.f32.gmra.mrb[0].mxu0 %v707
        %v1057 = vpop.f32.mrb[0].mxu0
        %v1058 = vadd.f32 %v922, %v1057
        %v1059 = vpop.f32.mrb[0].mxu0
        %v1060 = vadd.f32 %v926, %v1059
        %1061 = vmatprep.mubr.f32.mxu0 %v710
        %1062 = vmatmul.mubr.f32.gmra.mrb[0].mxu0 %v709
        %v1063 = vpop.f32.mrb[0].mxu0
        %v1064 = vadd.f32 %v922, %v1063
        %v1065 = vpop.f32.mrb[0].mxu0
        %v1066 = vadd.f32 %v926, %v1065
        %1067 = vmatprep.mubr.f32.mxu0 %v712
        %1068 = vmatmul.mubr.f32.gmra.mrb[0].mxu0 %v711
        %v1069 = vpop.f32.mrb[0].mxu0
        %v1070 = vadd.f32 %v922, %v1069
        %v1071 = vpop.f32.mrb[0].mxu0
        %v1072 = vadd.f32 %v926, %v1071
        %1073 = vmatprep.mubr.f32.mxu0 %v714
        %1074 = vmatmul.mubr.f32.gmra.mrb[0].mxu0 %v713
        %v1075 = vpop.f32.mrb[0].mxu0
        %v1076 = vadd.f32 %v922, %v1075
        %v1077 = vpop.f32.mrb[0].mxu0
        %v1078 = vadd.f32 %v926, %v1077
        %1079 = vmatprep.mubr.f32.mxu0 %v716
        %1080 = vmatmul.mubr.f32.gmra.mrb[0].mxu0 %v715
        %v1081 = vpop.f32.mrb[0].mxu0
        %v1082 = vadd.f32 %v922, %v1081
        %v1083 = vpop.f32.mrb[0].mxu0
        %v1084 = vadd.f32 %v926, %v1083
        %1085 = vmatprep.mubr.f32.mxu0 %v718
        %1086 = vmatmul.mubr.f32.gmra.mrb[0].mxu0 %v717
        %v1087 = vpop.f32.mrb[0].mxu0
        %v1088 = vadd.f32 %v922, %v1087
        %v1089 = vpop.f32.mrb[0].mxu0
        %v1090 = vadd.f32 %v926, %v1089
        %1091 = vmatprep.mubr.f32.mxu0 %v720
        %1092 = vmatmul.mubr.f32.gmra.mrb[0].mxu0 %v719
        %v1093 = vpop.f32.mrb[0].mxu0
        %v1094 = vadd.f32 %v922, %v1093
        %v1095 = vpop.f32.mrb[0].mxu0
        %v1096 = vadd.f32 %v926, %v1095
        %1097 = vmatprep.mubr.f32.mxu0 %v722
        %1098 = vmatmul.mubr.f32.gmra.mrb[0].mxu0 %v721
        %v1099 = vpop.f32.mrb[0].mxu0
        %v1100 = vadd.f32 %v922, %v1099
        %v1101 = vpop.f32.mrb[0].mxu0
        %v1102 = vadd.f32 %v926, %v1101
        %1103 = vmatprep.mubr.f32.mxu0 %v724
        %1104 = vmatmul.mubr.f32.gmra.mrb[0].mxu0 %v723
        %v1105 = vpop.f32.mrb[0].mxu0
        %v1106 = vadd.f32 %v922, %v1105
        %v1107 = vpop.f32.mrb[0].mxu0
        %v1108 = vadd.f32 %v926, %v1107
        %1109 = vdwg.mxu0
        %1110 = vmatprep.subr.mxu0 %v728
        %1111 = vmatpush1.msra.mxu0 %v727
        %1112 = vmatprep.subr.mxu0 %v734
        %1113 = vmatpush1.msra.mxu0 %v733
        %1114 = vmatprep.subr.mxu0 %v740
        %1115 = vmatpush1.msra.mxu0 %v739
        %1116 = vmatprep.subr.mxu0 %v746
        %1117 = vmatpush1.msra.mxu0 %v745
        %1118 = vmatprep.subr.mxu0 %v752
        %1119 = vmatpush1.msra.mxu0 %v751
        %1120 = vmatprep.subr.mxu0 %v758
        %1121 = vmatpush1.msra.mxu0 %v757
        %1122 = vmatprep.subr.mxu0 %v764
        %1123 = vmatpush1.msra.mxu0 %v763
        %1124 = vmatprep.subr.mxu0 %v770
        %1125 = vmatpush1.msra.mxu0 %v769
        %1126 = vmatprep.subr.mxu0 %v776
        %1127 = vmatpush1.msra.mxu0 %v775
        %1128 = vmatprep.subr.mxu0 %v782
        %1129 = vmatpush1.msra.mxu0 %v781
        %1130 = vmatprep.subr.mxu0 %v788
        %1131 = vmatpush1.msra.mxu0 %v787
        %1132 = vmatprep.subr.mxu0 %v794
        %1133 = vmatpush1.msra.mxu0 %v793
        %1134 = vmatprep.subr.mxu0 %v800
        %1135 = vmatpush1.msra.mxu0 %v799
        %1136 = vmatprep.subr.mxu0 %v806
        %1137 = vmatpush1.msra.mxu0 %v805
        %1138 = vmatprep.subr.mxu0 %v812
        %1139 = vmatpush1.msra.mxu0 %v811
        %1140 = vmatprep.subr.mxu0 %v818
        %1141 = vmatpush1.msra.mxu0 %v817
        %1142 = vmatprep.subr.mxu0 %v824
        %1143 = vmatpush1.msra.mxu0 %v823
        %1144 = vmatprep.subr.mxu0 %v830
        %1145 = vmatpush1.msra.mxu0 %v829
        %1146 = vmatprep.subr.mxu0 %v836
        %1147 = vmatpush1.msra.mxu0 %v835
        %1148 = vmatprep.subr.mxu0 %v842
        %1149 = vmatpush1.msra.mxu0 %v841
        %1150 = vmatprep.subr.mxu0 %v848
        %1151 = vmatpush1.msra.mxu0 %v847
        %1152 = vmatprep.subr.mxu0 %v854
        %1153 = vmatpush1.msra.mxu0 %v853
        %1154 = vmatprep.subr.mxu0 %v860
        %1155 = vmatpush1.msra.mxu0 %v859
        %1156 = vmatprep.subr.mxu0 %v866
        %1157 = vmatpush1.msra.mxu0 %v865
        %1158 = vmatprep.subr.mxu0 %v872
        %1159 = vmatpush1.msra.mxu0 %v871
        %1160 = vmatprep.subr.mxu0 %v878
        %1161 = vmatpush1.msra.mxu0 %v877
        %1162 = vmatprep.subr.mxu0 %v884
        %1163 = vmatpush1.msra.mxu0 %v883
        %1164 = vmatprep.subr.mxu0 %v890
        %1165 = vmatpush1.msra.mxu0 %v889
        %1166 = vmatprep.subr.mxu0 %v896
        %1167 = vmatpush1.msra.mxu0 %v895
        %1168 = vmatprep.subr.mxu0 %v902
        %1169 = vmatpush1.msra.mxu0 %v901
        %1170 = vmatprep.subr.mxu0 %v908
        %1171 = vmatpush1.msra.mxu0 %v907
        %1172 = vmatprep.subr.mxu0 %v914
        %1173 = vmatpush1.msra.mxu0 %v913
        %1174 = vmatprep.mubr.f32.mxu0 %v694
        %1175 = vmatmul.mubr.f32.gmra.mrb[0].mxu0 %v693
        %v1176 = vpop.f32.mrb[0].mxu0
        %v1177 = vadd.f32 %v930, %v1176
        %v1178 = vpop.f32.mrb[0].mxu0
        %v1179 = vadd.f32 %v934, %v1178
        %1180 = vmatprep.mubr.f32.mxu0 %v696
        %1181 = vmatmul.mubr.f32.gmra.mrb[0].mxu0 %v695
        %v1182 = vpop.f32.mrb[0].mxu0
        %v1183 = vadd.f32 %v930, %v1182
        %v1184 = vpop.f32.mrb[0].mxu0
        %v1185 = vadd.f32 %v934, %v1184
        %1186 = vmatprep.mubr.f32.mxu0 %v698
        %1187 = vmatmul.mubr.f32.gmra.mrb[0].mxu0 %v697
        %v1188 = vpop.f32.mrb[0].mxu0
        %v1189 = vadd.f32 %v930, %v1188
        %v1190 = vpop.f32.mrb[0].mxu0
        %v1191 = vadd.f32 %v934, %v1190
        %1192 = vmatprep.mubr.f32.mxu0 %v700
        %1193 = vmatmul.mubr.f32.gmra.mrb[0].mxu0 %v699
        %v1194 = vpop.f32.mrb[0].mxu0
        %v1195 = vadd.f32 %v930, %v1194
        %v1196 = vpop.f32.mrb[0].mxu0
        %v1197 = vadd.f32 %v934, %v1196
        %1198 = vmatprep.mubr.f32.mxu0 %v702
        %1199 = vmatmul.mubr.f32.gmra.mrb[0].mxu0 %v701
        %v1200 = vpop.f32.mrb[0].mxu0
        %v1201 = vadd.f32 %v930, %v1200
        %v1202 = vpop.f32.mrb[0].mxu0
        %v1203 = vadd.f32 %v934, %v1202
        %1204 = vmatprep.mubr.f32.mxu0 %v704
        %1205 = vmatmul.mubr.f32.gmra.mrb[0].mxu0 %v703
        %v1206 = vpop.f32.mrb[0].mxu0
        %v1207 = vadd.f32 %v930, %v1206
        %v1208 = vpop.f32.mrb[0].mxu0
        %v1209 = vadd.f32 %v934, %v1208
        %1210 = vmatprep.mubr.f32.mxu0 %v706
        %1211 = vmatmul.mubr.f32.gmra.mrb[0].mxu0 %v705
        %v1212 = vpop.f32.mrb[0].mxu0
        %v1213 = vadd.f32 %v930, %v1212
        %v1214 = vpop.f32.mrb[0].mxu0
        %v1215 = vadd.f32 %v934, %v1214
        %1216 = vmatprep.mubr.f32.mxu0 %v708
        %1217 = vmatmul.mubr.f32.gmra.mrb[0].mxu0 %v707
        %v1218 = vpop.f32.mrb[0].mxu0
        %v1219 = vadd.f32 %v930, %v1218
        %v1220 = vpop.f32.mrb[0].mxu0
        %v1221 = vadd.f32 %v934, %v1220
        %1222 = vmatprep.mubr.f32.mxu0 %v710
        %1223 = vmatmul.mubr.f32.gmra.mrb[0].mxu0 %v709
        %v1224 = vpop.f32.mrb[0].mxu0
        %v1225 = vadd.f32 %v930, %v1224
        %v1226 = vpop.f32.mrb[0].mxu0
        %v1227 = vadd.f32 %v934, %v1226
        %1228 = vmatprep.mubr.f32.mxu0 %v712
        %1229 = vmatmul.mubr.f32.gmra.mrb[0].mxu0 %v711
        %v1230 = vpop.f32.mrb[0].mxu0
        %v1231 = vadd.f32 %v930, %v1230
        %v1232 = vpop.f32.mrb[0].mxu0
        %v1233 = vadd.f32 %v934, %v1232
        %1234 = vmatprep.mubr.f32.mxu0 %v714
        %1235 = vmatmul.mubr.f32.gmra.mrb[0].mxu0 %v713
        %v1236 = vpop.f32.mrb[0].mxu0
        %v1237 = vadd.f32 %v930, %v1236
        %v1238 = vpop.f32.mrb[0].mxu0
        %v1239 = vadd.f32 %v934, %v1238
        %1240 = vmatprep.mubr.f32.mxu0 %v716
        %1241 = vmatmul.mubr.f32.gmra.mrb[0].mxu0 %v715
        %v1242 = vpop.f32.mrb[0].mxu0
        %v1243 = vadd.f32 %v930, %v1242
        %v1244 = vpop.f32.mrb[0].mxu0
        %v1245 = vadd.f32 %v934, %v1244
        %1246 = vmatprep.mubr.f32.mxu0 %v718
        %1247 = vmatmul.mubr.f32.gmra.mrb[0].mxu0 %v717
        %v1248 = vpop.f32.mrb[0].mxu0
        %v1249 = vadd.f32 %v930, %v1248
        %v1250 = vpop.f32.mrb[0].mxu0
        %v1251 = vadd.f32 %v934, %v1250
        %1252 = vmatprep.mubr.f32.mxu0 %v720
        %1253 = vmatmul.mubr.f32.gmra.mrb[0].mxu0 %v719
        %v1254 = vpop.f32.mrb[0].mxu0
        %v1255 = vadd.f32 %v930, %v1254
        %v1256 = vpop.f32.mrb[0].mxu0
        %v1257 = vadd.f32 %v934, %v1256
        %1258 = vmatprep.mubr.f32.mxu0 %v722
        %1259 = vmatmul.mubr.f32.gmra.mrb[0].mxu0 %v721
        %v1260 = vpop.f32.mrb[0].mxu0
        %v1261 = vadd.f32 %v930, %v1260
        %v1262 = vpop.f32.mrb[0].mxu0
        %v1263 = vadd.f32 %v934, %v1262
        %1264 = vmatprep.mubr.f32.mxu0 %v724
        %1265 = vmatmul.mubr.f32.gmra.mrb[0].mxu0 %v723
        %v1266 = vpop.f32.mrb[0].mxu0
        %v1267 = vadd.f32 %v930, %v1266
        %v1268 = vpop.f32.mrb[0].mxu0
        %v1269 = vadd.f32 %v934, %v1268
        %1270 = vdwg.mxu0
        %1271 = vmatprep.subr.mxu0 %v730
        %1272 = vmatpush1.msra.mxu0 %v729
        %1273 = vmatprep.subr.mxu0 %v736
        %1274 = vmatpush1.msra.mxu0 %v735
        %1275 = vmatprep.subr.mxu0 %v742
        %1276 = vmatpush1.msra.mxu0 %v741
        %1277 = vmatprep.subr.mxu0 %v748
        %1278 = vmatpush1.msra.mxu0 %v747
        %1279 = vmatprep.subr.mxu0 %v754
        %1280 = vmatpush1.msra.mxu0 %v753
        %1281 = vmatprep.subr.mxu0 %v760
        %1282 = vmatpush1.msra.mxu0 %v759
        %1283 = vmatprep.subr.mxu0 %v766
        %1284 = vmatpush1.msra.mxu0 %v765
        %1285 = vmatprep.subr.mxu0 %v772
        %1286 = vmatpush1.msra.mxu0 %v771
        %1287 = vmatprep.subr.mxu0 %v778
        %1288 = vmatpush1.msra.mxu0 %v777
        %1289 = vmatprep.subr.mxu0 %v784
        %1290 = vmatpush1.msra.mxu0 %v783
        %1291 = vmatprep.subr.mxu0 %v790
        %1292 = vmatpush1.msra.mxu0 %v789
        %1293 = vmatprep.subr.mxu0 %v796
        %1294 = vmatpush1.msra.mxu0 %v795
        %1295 = vmatprep.subr.mxu0 %v802
        %1296 = vmatpush1.msra.mxu0 %v801
        %1297 = vmatprep.subr.mxu0 %v808
        %1298 = vmatpush1.msra.mxu0 %v807
        %1299 = vmatprep.subr.mxu0 %v814
        %1300 = vmatpush1.msra.mxu0 %v813
        %1301 = vmatprep.subr.mxu0 %v820
        %1302 = vmatpush1.msra.mxu0 %v819
        %1303 = vmatprep.subr.mxu0 %v826
        %1304 = vmatpush1.msra.mxu0 %v825
        %1305 = vmatprep.subr.mxu0 %v832
        %1306 = vmatpush1.msra.mxu0 %v831
        %1307 = vmatprep.subr.mxu0 %v838
        %1308 = vmatpush1.msra.mxu0 %v837
        %1309 = vmatprep.subr.mxu0 %v844
        %1310 = vmatpush1.msra.mxu0 %v843
        %1311 = vmatprep.subr.mxu0 %v850
        %1312 = vmatpush1.msra.mxu0 %v849
        %1313 = vmatprep.subr.mxu0 %v856
        %1314 = vmatpush1.msra.mxu0 %v855
        %1315 = vmatprep.subr.mxu0 %v862
        %1316 = vmatpush1.msra.mxu0 %v861
        %1317 = vmatprep.subr.mxu0 %v868
        %1318 = vmatpush1.msra.mxu0 %v867
        %1319 = vmatprep.subr.mxu0 %v874
        %1320 = vmatpush1.msra.mxu0 %v873
        %1321 = vmatprep.subr.mxu0 %v880
        %1322 = vmatpush1.msra.mxu0 %v879
        %1323 = vmatprep.subr.mxu0 %v886
        %1324 = vmatpush1.msra.mxu0 %v885
        %1325 = vmatprep.subr.mxu0 %v892
        %1326 = vmatpush1.msra.mxu0 %v891
        %1327 = vmatprep.subr.mxu0 %v898
        %1328 = vmatpush1.msra.mxu0 %v897
        %1329 = vmatprep.subr.mxu0 %v904
        %1330 = vmatpush1.msra.mxu0 %v903
        %1331 = vmatprep.subr.mxu0 %v910
        %1332 = vmatpush1.msra.mxu0 %v909
        %1333 = vmatprep.subr.mxu0 %v916
        %1334 = vmatpush1.msra.mxu0 %v915
        %1335 = vmatprep.mubr.f32.mxu0 %v694
        %1336 = vmatmul.mubr.f32.gmra.mrb[0].mxu0 %v693
        %v1337 = vpop.f32.mrb[0].mxu0
        %v1338 = vadd.f32 %v938, %v1337
        %v1339 = vpop.f32.mrb[0].mxu0
        %v1340 = vadd.f32 %v942, %v1339
        %1341 = vmatprep.mubr.f32.mxu0 %v696
        %1342 = vmatmul.mubr.f32.gmra.mrb[0].mxu0 %v695
        %v1343 = vpop.f32.mrb[0].mxu0
        %v1344 = vadd.f32 %v938, %v1343
        %v1345 = vpop.f32.mrb[0].mxu0
        %v1346 = vadd.f32 %v942, %v1345
        %1347 = vmatprep.mubr.f32.mxu0 %v698
        %1348 = vmatmul.mubr.f32.gmra.mrb[0].mxu0 %v697
        %v1349 = vpop.f32.mrb[0].mxu0
        %v1350 = vadd.f32 %v938, %v1349
        %v1351 = vpop.f32.mrb[0].mxu0
        %v1352 = vadd.f32 %v942, %v1351
        %1353 = vmatprep.mubr.f32.mxu0 %v700
        %1354 = vmatmul.mubr.f32.gmra.mrb[0].mxu0 %v699
        %v1355 = vpop.f32.mrb[0].mxu0
        %v1356 = vadd.f32 %v938, %v1355
        %v1357 = vpop.f32.mrb[0].mxu0
        %v1358 = vadd.f32 %v942, %v1357
        %1359 = vmatprep.mubr.f32.mxu0 %v702
        %1360 = vmatmul.mubr.f32.gmra.mrb[0].mxu0 %v701
        %v1361 = vpop.f32.mrb[0].mxu0
        %v1362 = vadd.f32 %v938, %v1361
        %v1363 = vpop.f32.mrb[0].mxu0
        %v1364 = vadd.f32 %v942, %v1363
        %1365 = vmatprep.mubr.f32.mxu0 %v704
        %1366 = vmatmul.mubr.f32.gmra.mrb[0].mxu0 %v703
        %v1367 = vpop.f32.mrb[0].mxu0
        %v1368 = vadd.f32 %v938, %v1367
        %v1369 = vpop.f32.mrb[0].mxu0
        %v1370 = vadd.f32 %v942, %v1369
        %1371 = vmatprep.mubr.f32.mxu0 %v706
        %1372 = vmatmul.mubr.f32.gmra.mrb[0].mxu0 %v705
        %v1373 = vpop.f32.mrb[0].mxu0
        %v1374 = vadd.f32 %v938, %v1373
        %v1375 = vpop.f32.mrb[0].mxu0
        %v1376 = vadd.f32 %v942, %v1375
        %1377 = vmatprep.mubr.f32.mxu0 %v708
        %1378 = vmatmul.mubr.f32.gmra.mrb[0].mxu0 %v707
        %v1379 = vpop.f32.mrb[0].mxu0
        %v1380 = vadd.f32 %v938, %v1379
        %v1381 = vpop.f32.mrb[0].mxu0
        %v1382 = vadd.f32 %v942, %v1381
        %1383 = vmatprep.mubr.f32.mxu0 %v710
        %1384 = vmatmul.mubr.f32.gmra.mrb[0].mxu0 %v709
        %v1385 = vpop.f32.mrb[0].mxu0
        %v1386 = vadd.f32 %v938, %v1385
        %v1387 = vpop.f32.mrb[0].mxu0
        %v1388 = vadd.f32 %v942, %v1387
        %1389 = vmatprep.mubr.f32.mxu0 %v712
        %1390 = vmatmul.mubr.f32.gmra.mrb[0].mxu0 %v711
        %v1391 = vpop.f32.mrb[0].mxu0
        %v1392 = vadd.f32 %v938, %v1391
        %v1393 = vpop.f32.mrb[0].mxu0
        %v1394 = vadd.f32 %v942, %v1393
        %1395 = vmatprep.mubr.f32.mxu0 %v714
        %1396 = vmatmul.mubr.f32.gmra.mrb[0].mxu0 %v713
        %v1397 = vpop.f32.mrb[0].mxu0
        %v1398 = vadd.f32 %v938, %v1397
        %v1399 = vpop.f32.mrb[0].mxu0
        %v1400 = vadd.f32 %v942, %v1399
        %1401 = vmatprep.mubr.f32.mxu0 %v716
        %1402 = vmatmul.mubr.f32.gmra.mrb[0].mxu0 %v715
        %v1403 = vpop.f32.mrb[0].mxu0
        %v1404 = vadd.f32 %v938, %v1403
        %v1405 = vpop.f32.mrb[0].mxu0
        %v1406 = vadd.f32 %v942, %v1405
        %1407 = vmatprep.mubr.f32.mxu0 %v718
        %1408 = vmatmul.mubr.f32.gmra.mrb[0].mxu0 %v717
        %v1409 = vpop.f32.mrb[0].mxu0
        %v1410 = vadd.f32 %v938, %v1409
        %v1411 = vpop.f32.mrb[0].mxu0
        %v1412 = vadd.f32 %v942, %v1411
        %1413 = vmatprep.mubr.f32.mxu0 %v720
        %1414 = vmatmul.mubr.f32.gmra.mrb[0].mxu0 %v719
        %v1415 = vpop.f32.mrb[0].mxu0
        %v1416 = vadd.f32 %v938, %v1415
        %v1417 = vpop.f32.mrb[0].mxu0
        %v1418 = vadd.f32 %v942, %v1417
        %1419 = vmatprep.mubr.f32.mxu0 %v722
        %1420 = vmatmul.mubr.f32.gmra.mrb[0].mxu0 %v721
        %v1421 = vpop.f32.mrb[0].mxu0
        %v1422 = vadd.f32 %v938, %v1421
        %v1423 = vpop.f32.mrb[0].mxu0
        %v1424 = vadd.f32 %v942, %v1423
        %1425 = vmatprep.mubr.f32.mxu0 %v724
        %1426 = vmatmul.mubr.f32.gmra.mrb[0].mxu0 %v723
        %v1427 = vpop.f32.mrb[0].mxu0
        %v1428 = vadd.f32 %v938, %v1427
        %v1429 = vpop.f32.mrb[0].mxu0
        %v1430 = vadd.f32 %v942, %v1429
        %1431 = vdwg.mxu0
        %v1432 = vmul.f32 %v1016, 0.125
        %v1433 = vmul.f32 %v1022, 0.125
        %v1434 = vmul.f32 %v1028, 0.125
        %v1435 = vmul.f32 %v1034, 0.125
        %v1436 = vmul.f32 %v1040, 0.125
        %v1437 = vmul.f32 %v1046, 0.125
        %v1438 = vmul.f32 %v1052, 0.125
        %v1439 = vmul.f32 %v1058, 0.125
        %v1440 = vmul.f32 %v1064, 0.125
        %v1441 = vmul.f32 %v1070, 0.125
        %v1442 = vmul.f32 %v1076, 0.125
        %v1443 = vmul.f32 %v1082, 0.125
        %v1444 = vmul.f32 %v1088, 0.125
        %v1445 = vmul.f32 %v1094, 0.125
        %v1446 = vmul.f32 %v1100, 0.125
        %v1447 = vmul.f32 %v1106, 0.125
        %vm1448 = vcmask 523264
        %1449 = vst.msk [vmem:[%s331] sm:$0xff] %vm1448, %v1432
        %1450 = vst.msk [vmem:[%s331 + $0x8] sm:$0xff] %vm1448, %v1433
        %1451 = vst.msk [vmem:[%s331 + $0x10] sm:$0xff] %vm1448, %v1434
        %1452 = vst.msk [vmem:[%s331 + $0x18] sm:$0xff] %vm1448, %v1435
        %1453 = vst.msk [vmem:[%s331 + $0x20] sm:$0xff] %vm1448, %v1436
        %1454 = vst.msk [vmem:[%s331 + $0x28] sm:$0xff] %vm1448, %v1437
        %1455 = vst.msk [vmem:[%s331 + $0x30] sm:$0xff] %vm1448, %v1438
        %1456 = vst.msk [vmem:[%s331 + $0x38] sm:$0xff] %vm1448, %v1439
        %1457 = vst.msk [vmem:[%s331 + $0x40] sm:$0xff] %vm1448, %v1440
        %1458 = vst.msk [vmem:[%s331 + $0x48] sm:$0xff] %vm1448, %v1441
        %1459 = vst.msk [vmem:[%s331 + $0x50] sm:$0xff] %vm1448, %v1442
        %1460 = vst.msk [vmem:[%s331 + $0x58] sm:$0xff] %vm1448, %v1443
        %1461 = vst.msk [vmem:[%s331 + $0x60] sm:$0xff] %vm1448, %v1444
        %1462 = vst.msk [vmem:[%s331 + $0x68] sm:$0xff] %vm1448, %v1445
        %1463 = vst.msk [vmem:[%s331 + $0x70] sm:$0xff] %vm1448, %v1446
        %1464 = vst.msk [vmem:[%s331 + $0x78] sm:$0xff] %vm1448, %v1447
        %1465 = vst.msk [vmem:[%s337] sm:$0xff] %vm1448, %v1177
        %1466 = vst.msk [vmem:[%s337 + $0x8] sm:$0xff] %vm1448, %v1183
        %1467 = vst.msk [vmem:[%s337 + $0x10] sm:$0xff] %vm1448, %v1189
        %1468 = vst.msk [vmem:[%s337 + $0x18] sm:$0xff] %vm1448, %v1195
        %1469 = vst.msk [vmem:[%s337 + $0x20] sm:$0xff] %vm1448, %v1201
        %1470 = vst.msk [vmem:[%s337 + $0x28] sm:$0xff] %vm1448, %v1207
        %1471 = vst.msk [vmem:[%s337 + $0x30] sm:$0xff] %vm1448, %v1213
        %1472 = vst.msk [vmem:[%s337 + $0x38] sm:$0xff] %vm1448, %v1219
        %1473 = vst.msk [vmem:[%s337 + $0x40] sm:$0xff] %vm1448, %v1225
        %1474 = vst.msk [vmem:[%s337 + $0x48] sm:$0xff] %vm1448, %v1231
        %1475 = vst.msk [vmem:[%s337 + $0x50] sm:$0xff] %vm1448, %v1237
        %1476 = vst.msk [vmem:[%s337 + $0x58] sm:$0xff] %vm1448, %v1243
        %1477 = vst.msk [vmem:[%s337 + $0x60] sm:$0xff] %vm1448, %v1249
        %1478 = vst.msk [vmem:[%s337 + $0x68] sm:$0xff] %vm1448, %v1255
        %1479 = vst.msk [vmem:[%s337 + $0x70] sm:$0xff] %vm1448, %v1261
        %1480 = vst.msk [vmem:[%s337 + $0x78] sm:$0xff] %vm1448, %v1267
        %1481 = vst.msk [vmem:[%s343] sm:$0xff] %vm1448, %v1338
        %1482 = vst.msk [vmem:[%s343 + $0x8] sm:$0xff] %vm1448, %v1344
        %1483 = vst.msk [vmem:[%s343 + $0x10] sm:$0xff] %vm1448, %v1350
        %1484 = vst.msk [vmem:[%s343 + $0x18] sm:$0xff] %vm1448, %v1356
        %1485 = vst.msk [vmem:[%s343 + $0x20] sm:$0xff] %vm1448, %v1362
        %1486 = vst.msk [vmem:[%s343 + $0x28] sm:$0xff] %vm1448, %v1368
        %1487 = vst.msk [vmem:[%s343 + $0x30] sm:$0xff] %vm1448, %v1374
        %1488 = vst.msk [vmem:[%s343 + $0x38] sm:$0xff] %vm1448, %v1380
        %1489 = vst.msk [vmem:[%s343 + $0x40] sm:$0xff] %vm1448, %v1386
        %1490 = vst.msk [vmem:[%s343 + $0x48] sm:$0xff] %vm1448, %v1392
        %1491 = vst.msk [vmem:[%s343 + $0x50] sm:$0xff] %vm1448, %v1398
        %1492 = vst.msk [vmem:[%s343 + $0x58] sm:$0xff] %vm1448, %v1404
        %1493 = vst.msk [vmem:[%s343 + $0x60] sm:$0xff] %vm1448, %v1410
        %1494 = vst.msk [vmem:[%s343 + $0x68] sm:$0xff] %vm1448, %v1416
        %1495 = vst.msk [vmem:[%s343 + $0x70] sm:$0xff] %vm1448, %v1422
        %1496 = vst.msk [vmem:[%s343 + $0x78] sm:$0xff] %vm1448, %v1428
        %1513 = vrot.lane.b32.xlu0 %v1432, 64
        %v1514 = vpop.permute.xlu0 %1513
        %1515 = vrot.lane.b32.xlu0 %v1433, 64
        %v1516 = vpop.permute.xlu0 %1515
        %1517 = vrot.lane.b32.xlu0 %v1434, 64
        %v1518 = vpop.permute.xlu0 %1517
        %1519 = vrot.lane.b32.xlu0 %v1435, 64
        %v1520 = vpop.permute.xlu0 %1519
        %1521 = vrot.lane.b32.xlu0 %v1436, 64
        %v1522 = vpop.permute.xlu0 %1521
        %1523 = vrot.lane.b32.xlu0 %v1437, 64
        %v1524 = vpop.permute.xlu0 %1523
        %1525 = vrot.lane.b32.xlu0 %v1438, 64
        %v1526 = vpop.permute.xlu0 %1525
        %1527 = vrot.lane.b32.xlu0 %v1439, 64
        %v1528 = vpop.permute.xlu0 %1527
        %1529 = vrot.lane.b32.xlu0 %v1440, 64
        %v1530 = vpop.permute.xlu0 %1529
        %1531 = vrot.lane.b32.xlu0 %v1441, 64
        %v1532 = vpop.permute.xlu0 %1531
        %1533 = vrot.lane.b32.xlu0 %v1442, 64
        %v1534 = vpop.permute.xlu0 %1533
        %1535 = vrot.lane.b32.xlu0 %v1443, 64
        %v1536 = vpop.permute.xlu0 %1535
        %1537 = vrot.lane.b32.xlu0 %v1444, 64
        %v1538 = vpop.permute.xlu0 %1537
        %1539 = vrot.lane.b32.xlu0 %v1445, 64
        %v1540 = vpop.permute.xlu0 %1539
        %1541 = vrot.lane.b32.xlu0 %v1446, 64
        %v1542 = vpop.permute.xlu0 %1541
        %1543 = vrot.lane.b32.xlu0 %v1447, 64
        %v1544 = vpop.permute.xlu0 %1543
        %s1561 = scalar_lea.vmem %s331, 128 [#allocation6]
        %1562 = vst.msk [vmem:[%s1561] sm:$0xff] %vm1448, %v1514
        %1563 = vst.msk [vmem:[%s1561 + $0x8] sm:$0xff] %vm1448, %v1516
        %1564 = vst.msk [vmem:[%s1561 + $0x10] sm:$0xff] %vm1448, %v1518
        %1565 = vst.msk [vmem:[%s1561 + $0x18] sm:$0xff] %vm1448, %v1520
        %1566 = vst.msk [vmem:[%s1561 + $0x20] sm:$0xff] %vm1448, %v1522
        %1567 = vst.msk [vmem:[%s1561 + $0x28] sm:$0xff] %vm1448, %v1524
        %1568 = vst.msk [vmem:[%s1561 + $0x30] sm:$0xff] %vm1448, %v1526
        %1569 = vst.msk [vmem:[%s1561 + $0x38] sm:$0xff] %vm1448, %v1528
        %1570 = vst.msk [vmem:[%s1561 + $0x40] sm:$0xff] %vm1448, %v1530
        %1571 = vst.msk [vmem:[%s1561 + $0x48] sm:$0xff] %vm1448, %v1532
        %1572 = vst.msk [vmem:[%s1561 + $0x50] sm:$0xff] %vm1448, %v1534
        %1573 = vst.msk [vmem:[%s1561 + $0x58] sm:$0xff] %vm1448, %v1536
        %1574 = vst.msk [vmem:[%s1561 + $0x60] sm:$0xff] %vm1448, %v1538
        %1575 = vst.msk [vmem:[%s1561 + $0x68] sm:$0xff] %vm1448, %v1540
        %1576 = vst.msk [vmem:[%s1561 + $0x70] sm:$0xff] %vm1448, %v1542
        %1577 = vst.msk [vmem:[%s1561 + $0x78] sm:$0xff] %vm1448, %v1544
        %1594 = vrot.lane.b32.xlu0 %v1177, 64
        %v1595 = vpop.permute.xlu0 %1594
        %1596 = vrot.lane.b32.xlu0 %v1183, 64
        %v1597 = vpop.permute.xlu0 %1596
        %1598 = vrot.lane.b32.xlu0 %v1189, 64
        %v1599 = vpop.permute.xlu0 %1598
        %1600 = vrot.lane.b32.xlu0 %v1195, 64
        %v1601 = vpop.permute.xlu0 %1600
        %1602 = vrot.lane.b32.xlu0 %v1201, 64
        %v1603 = vpop.permute.xlu0 %1602
        %1604 = vrot.lane.b32.xlu0 %v1207, 64
        %v1605 = vpop.permute.xlu0 %1604
        %1606 = vrot.lane.b32.xlu0 %v1213, 64
        %v1607 = vpop.permute.xlu0 %1606
        %1608 = vrot.lane.b32.xlu0 %v1219, 64
        %v1609 = vpop.permute.xlu0 %1608
        %1610 = vrot.lane.b32.xlu0 %v1225, 64
        %v1611 = vpop.permute.xlu0 %1610
        %1612 = vrot.lane.b32.xlu0 %v1231, 64
        %v1613 = vpop.permute.xlu0 %1612
        %1614 = vrot.lane.b32.xlu0 %v1237, 64
        %v1615 = vpop.permute.xlu0 %1614
        %1616 = vrot.lane.b32.xlu0 %v1243, 64
        %v1617 = vpop.permute.xlu0 %1616
        %1618 = vrot.lane.b32.xlu0 %v1249, 64
        %v1619 = vpop.permute.xlu0 %1618
        %1620 = vrot.lane.b32.xlu0 %v1255, 64
        %v1621 = vpop.permute.xlu0 %1620
        %1622 = vrot.lane.b32.xlu0 %v1261, 64
        %v1623 = vpop.permute.xlu0 %1622
        %1624 = vrot.lane.b32.xlu0 %v1267, 64
        %v1625 = vpop.permute.xlu0 %1624
        %s1642 = scalar_lea.vmem %s337, 128 [#allocation7]
        %1643 = vst.msk [vmem:[%s1642] sm:$0xff] %vm1448, %v1595
        %1644 = vst.msk [vmem:[%s1642 + $0x8] sm:$0xff] %vm1448, %v1597
        %1645 = vst.msk [vmem:[%s1642 + $0x10] sm:$0xff] %vm1448, %v1599
        %1646 = vst.msk [vmem:[%s1642 + $0x18] sm:$0xff] %vm1448, %v1601
        %1647 = vst.msk [vmem:[%s1642 + $0x20] sm:$0xff] %vm1448, %v1603
        %1648 = vst.msk [vmem:[%s1642 + $0x28] sm:$0xff] %vm1448, %v1605
        %1649 = vst.msk [vmem:[%s1642 + $0x30] sm:$0xff] %vm1448, %v1607
        %1650 = vst.msk [vmem:[%s1642 + $0x38] sm:$0xff] %vm1448, %v1609
        %1651 = vst.msk [vmem:[%s1642 + $0x40] sm:$0xff] %vm1448, %v1611
        %1652 = vst.msk [vmem:[%s1642 + $0x48] sm:$0xff] %vm1448, %v1613
        %1653 = vst.msk [vmem:[%s1642 + $0x50] sm:$0xff] %vm1448, %v1615
        %1654 = vst.msk [vmem:[%s1642 + $0x58] sm:$0xff] %vm1448, %v1617
        %1655 = vst.msk [vmem:[%s1642 + $0x60] sm:$0xff] %vm1448, %v1619
        %1656 = vst.msk [vmem:[%s1642 + $0x68] sm:$0xff] %vm1448, %v1621
        %1657 = vst.msk [vmem:[%s1642 + $0x70] sm:$0xff] %vm1448, %v1623
        %1658 = vst.msk [vmem:[%s1642 + $0x78] sm:$0xff] %vm1448, %v1625
        %1675 = vrot.lane.b32.xlu0 %v1338, 64
        %v1676 = vpop.permute.xlu0 %1675
        %1677 = vrot.lane.b32.xlu0 %v1344, 64
        %v1678 = vpop.permute.xlu0 %1677
        %1679 = vrot.lane.b32.xlu0 %v1350, 64
        %v1680 = vpop.permute.xlu0 %1679
        %1681 = vrot.lane.b32.xlu0 %v1356, 64
        %v1682 = vpop.permute.xlu0 %1681
        %1683 = vrot.lane.b32.xlu0 %v1362, 64
        %v1684 = vpop.permute.xlu0 %1683
        %1685 = vrot.lane.b32.xlu0 %v1368, 64
        %v1686 = vpop.permute.xlu0 %1685
        %1687 = vrot.lane.b32.xlu0 %v1374, 64
        %v1688 = vpop.permute.xlu0 %1687
        %1689 = vrot.lane.b32.xlu0 %v1380, 64
        %v1690 = vpop.permute.xlu0 %1689
        %1691 = vrot.lane.b32.xlu0 %v1386, 64
        %v1692 = vpop.permute.xlu0 %1691
        %1693 = vrot.lane.b32.xlu0 %v1392, 64
        %v1694 = vpop.permute.xlu0 %1693
        %1695 = vrot.lane.b32.xlu0 %v1398, 64
        %v1696 = vpop.permute.xlu0 %1695
        %1697 = vrot.lane.b32.xlu0 %v1404, 64
        %v1698 = vpop.permute.xlu0 %1697
        %1699 = vrot.lane.b32.xlu0 %v1410, 64
        %v1700 = vpop.permute.xlu0 %1699
        %1701 = vrot.lane.b32.xlu0 %v1416, 64
        %v1702 = vpop.permute.xlu0 %1701
        %1703 = vrot.lane.b32.xlu0 %v1422, 64
        %v1704 = vpop.permute.xlu0 %1703
        %1705 = vrot.lane.b32.xlu0 %v1428, 64
        %v1706 = vpop.permute.xlu0 %1705
        %s1723 = scalar_lea.vmem %s343, 128 [#allocation8]
        %1724 = vst.msk [vmem:[%s1723] sm:$0xff] %vm1448, %v1676
        %1725 = vst.msk [vmem:[%s1723 + $0x8] sm:$0xff] %vm1448, %v1678
        %1726 = vst.msk [vmem:[%s1723 + $0x10] sm:$0xff] %vm1448, %v1680
        %1727 = vst.msk [vmem:[%s1723 + $0x18] sm:$0xff] %vm1448, %v1682
        %1728 = vst.msk [vmem:[%s1723 + $0x20] sm:$0xff] %vm1448, %v1684
        %1729 = vst.msk [vmem:[%s1723 + $0x28] sm:$0xff] %vm1448, %v1686
        %1730 = vst.msk [vmem:[%s1723 + $0x30] sm:$0xff] %vm1448, %v1688
        %1731 = vst.msk [vmem:[%s1723 + $0x38] sm:$0xff] %vm1448, %v1690
        %1732 = vst.msk [vmem:[%s1723 + $0x40] sm:$0xff] %vm1448, %v1692
        %1733 = vst.msk [vmem:[%s1723 + $0x48] sm:$0xff] %vm1448, %v1694
        %1734 = vst.msk [vmem:[%s1723 + $0x50] sm:$0xff] %vm1448, %v1696
        %1735 = vst.msk [vmem:[%s1723 + $0x58] sm:$0xff] %vm1448, %v1698
        %1736 = vst.msk [vmem:[%s1723 + $0x60] sm:$0xff] %vm1448, %v1700
        %1737 = vst.msk [vmem:[%s1723 + $0x68] sm:$0xff] %vm1448, %v1702
        %1738 = vst.msk [vmem:[%s1723 + $0x70] sm:$0xff] %vm1448, %v1704
        %1739 = vst.msk [vmem:[%s1723 + $0x78] sm:$0xff] %vm1448, %v1706
        %v1740 = vmul.f32 %v1018, 0.125
        %v1741 = vmul.f32 %v1024, 0.125
        %v1742 = vmul.f32 %v1030, 0.125
        %v1743 = vmul.f32 %v1036, 0.125
        %v1744 = vmul.f32 %v1042, 0.125
        %v1745 = vmul.f32 %v1048, 0.125
        %v1746 = vmul.f32 %v1054, 0.125
        %v1747 = vmul.f32 %v1060, 0.125
        %v1748 = vmul.f32 %v1066, 0.125
        %v1749 = vmul.f32 %v1072, 0.125
        %v1750 = vmul.f32 %v1078, 0.125
        %v1751 = vmul.f32 %v1084, 0.125
        %v1752 = vmul.f32 %v1090, 0.125
        %v1753 = vmul.f32 %v1096, 0.125
        %v1754 = vmul.f32 %v1102, 0.125
        %v1755 = vmul.f32 %v1108, 0.125
        %s1756 = scalar_lea.vmem %s331, 256 [#allocation6]
        %1757 = vst.msk [vmem:[%s1756] sm:$0xff] %vm1448, %v1740
        %1758 = vst.msk [vmem:[%s1756 + $0x8] sm:$0xff] %vm1448, %v1741
        %1759 = vst.msk [vmem:[%s1756 + $0x10] sm:$0xff] %vm1448, %v1742
        %1760 = vst.msk [vmem:[%s1756 + $0x18] sm:$0xff] %vm1448, %v1743
        %1761 = vst.msk [vmem:[%s1756 + $0x20] sm:$0xff] %vm1448, %v1744
        %1762 = vst.msk [vmem:[%s1756 + $0x28] sm:$0xff] %vm1448, %v1745
        %1763 = vst.msk [vmem:[%s1756 + $0x30] sm:$0xff] %vm1448, %v1746
        %1764 = vst.msk [vmem:[%s1756 + $0x38] sm:$0xff] %vm1448, %v1747
        %1765 = vst.msk [vmem:[%s1756 + $0x40] sm:$0xff] %vm1448, %v1748
        %1766 = vst.msk [vmem:[%s1756 + $0x48] sm:$0xff] %vm1448, %v1749
        %1767 = vst.msk [vmem:[%s1756 + $0x50] sm:$0xff] %vm1448, %v1750
        %1768 = vst.msk [vmem:[%s1756 + $0x58] sm:$0xff] %vm1448, %v1751
        %1769 = vst.msk [vmem:[%s1756 + $0x60] sm:$0xff] %vm1448, %v1752
        %1770 = vst.msk [vmem:[%s1756 + $0x68] sm:$0xff] %vm1448, %v1753
        %1771 = vst.msk [vmem:[%s1756 + $0x70] sm:$0xff] %vm1448, %v1754
        %1772 = vst.msk [vmem:[%s1756 + $0x78] sm:$0xff] %vm1448, %v1755
        %s1773 = scalar_lea.vmem %s337, 256 [#allocation7]
        %1774 = vst.msk [vmem:[%s1773] sm:$0xff] %vm1448, %v1179
        %1775 = vst.msk [vmem:[%s1773 + $0x8] sm:$0xff] %vm1448, %v1185
        %1776 = vst.msk [vmem:[%s1773 + $0x10] sm:$0xff] %vm1448, %v1191
        %1777 = vst.msk [vmem:[%s1773 + $0x18] sm:$0xff] %vm1448, %v1197
        %1778 = vst.msk [vmem:[%s1773 + $0x20] sm:$0xff] %vm1448, %v1203
        %1779 = vst.msk [vmem:[%s1773 + $0x28] sm:$0xff] %vm1448, %v1209
        %1780 = vst.msk [vmem:[%s1773 + $0x30] sm:$0xff] %vm1448, %v1215
        %1781 = vst.msk [vmem:[%s1773 + $0x38] sm:$0xff] %vm1448, %v1221
        %1782 = vst.msk [vmem:[%s1773 + $0x40] sm:$0xff] %vm1448, %v1227
        %1783 = vst.msk [vmem:[%s1773 + $0x48] sm:$0xff] %vm1448, %v1233
        %1784 = vst.msk [vmem:[%s1773 + $0x50] sm:$0xff] %vm1448, %v1239
        %1785 = vst.msk [vmem:[%s1773 + $0x58] sm:$0xff] %vm1448, %v1245
        %1786 = vst.msk [vmem:[%s1773 + $0x60] sm:$0xff] %vm1448, %v1251
        %1787 = vst.msk [vmem:[%s1773 + $0x68] sm:$0xff] %vm1448, %v1257
        %1788 = vst.msk [vmem:[%s1773 + $0x70] sm:$0xff] %vm1448, %v1263
        %1789 = vst.msk [vmem:[%s1773 + $0x78] sm:$0xff] %vm1448, %v1269
        %s1790 = scalar_lea.vmem %s343, 256 [#allocation8]
        %1791 = vst.msk [vmem:[%s1790] sm:$0xff] %vm1448, %v1340
        %1792 = vst.msk [vmem:[%s1790 + $0x8] sm:$0xff] %vm1448, %v1346
        %1793 = vst.msk [vmem:[%s1790 + $0x10] sm:$0xff] %vm1448, %v1352
        %1794 = vst.msk [vmem:[%s1790 + $0x18] sm:$0xff] %vm1448, %v1358
        %1795 = vst.msk [vmem:[%s1790 + $0x20] sm:$0xff] %vm1448, %v1364
        %1796 = vst.msk [vmem:[%s1790 + $0x28] sm:$0xff] %vm1448, %v1370
        %1797 = vst.msk [vmem:[%s1790 + $0x30] sm:$0xff] %vm1448, %v1376
        %1798 = vst.msk [vmem:[%s1790 + $0x38] sm:$0xff] %vm1448, %v1382
        %1799 = vst.msk [vmem:[%s1790 + $0x40] sm:$0xff] %vm1448, %v1388
        %1800 = vst.msk [vmem:[%s1790 + $0x48] sm:$0xff] %vm1448, %v1394
        %1801 = vst.msk [vmem:[%s1790 + $0x50] sm:$0xff] %vm1448, %v1400
        %1802 = vst.msk [vmem:[%s1790 + $0x58] sm:$0xff] %vm1448, %v1406
        %1803 = vst.msk [vmem:[%s1790 + $0x60] sm:$0xff] %vm1448, %v1412
        %1804 = vst.msk [vmem:[%s1790 + $0x68] sm:$0xff] %vm1448, %v1418
        %1805 = vst.msk [vmem:[%s1790 + $0x70] sm:$0xff] %vm1448, %v1424
        %1806 = vst.msk [vmem:[%s1790 + $0x78] sm:$0xff] %vm1448, %v1430
        %1823 = vrot.lane.b32.xlu0 %v1740, 64
        %v1824 = vpop.permute.xlu0 %1823
        %1825 = vrot.lane.b32.xlu0 %v1741, 64
        %v1826 = vpop.permute.xlu0 %1825
        %1827 = vrot.lane.b32.xlu0 %v1742, 64
        %v1828 = vpop.permute.xlu0 %1827
        %1829 = vrot.lane.b32.xlu0 %v1743, 64
        %v1830 = vpop.permute.xlu0 %1829
        %1831 = vrot.lane.b32.xlu0 %v1744, 64
        %v1832 = vpop.permute.xlu0 %1831
        %1833 = vrot.lane.b32.xlu0 %v1745, 64
        %v1834 = vpop.permute.xlu0 %1833
        %1835 = vrot.lane.b32.xlu0 %v1746, 64
        %v1836 = vpop.permute.xlu0 %1835
        %1837 = vrot.lane.b32.xlu0 %v1747, 64
        %v1838 = vpop.permute.xlu0 %1837
        %1839 = vrot.lane.b32.xlu0 %v1748, 64
        %v1840 = vpop.permute.xlu0 %1839
        %1841 = vrot.lane.b32.xlu0 %v1749, 64
        %v1842 = vpop.permute.xlu0 %1841
        %1843 = vrot.lane.b32.xlu0 %v1750, 64
        %v1844 = vpop.permute.xlu0 %1843
        %1845 = vrot.lane.b32.xlu0 %v1751, 64
        %v1846 = vpop.permute.xlu0 %1845
        %1847 = vrot.lane.b32.xlu0 %v1752, 64
        %v1848 = vpop.permute.xlu0 %1847
        %1849 = vrot.lane.b32.xlu0 %v1753, 64
        %v1850 = vpop.permute.xlu0 %1849
        %1851 = vrot.lane.b32.xlu0 %v1754, 64
        %v1852 = vpop.permute.xlu0 %1851
        %1853 = vrot.lane.b32.xlu0 %v1755, 64
        %v1854 = vpop.permute.xlu0 %1853
        %s1871 = scalar_lea.vmem %s331, 384 [#allocation6]
        %1872 = vst.msk [vmem:[%s1871] sm:$0xff] %vm1448, %v1824
        %1873 = vst.msk [vmem:[%s1871 + $0x8] sm:$0xff] %vm1448, %v1826
        %1874 = vst.msk [vmem:[%s1871 + $0x10] sm:$0xff] %vm1448, %v1828
        %1875 = vst.msk [vmem:[%s1871 + $0x18] sm:$0xff] %vm1448, %v1830
        %1876 = vst.msk [vmem:[%s1871 + $0x20] sm:$0xff] %vm1448, %v1832
        %1877 = vst.msk [vmem:[%s1871 + $0x28] sm:$0xff] %vm1448, %v1834
        %1878 = vst.msk [vmem:[%s1871 + $0x30] sm:$0xff] %vm1448, %v1836
        %1879 = vst.msk [vmem:[%s1871 + $0x38] sm:$0xff] %vm1448, %v1838
        %1880 = vst.msk [vmem:[%s1871 + $0x40] sm:$0xff] %vm1448, %v1840
        %1881 = vst.msk [vmem:[%s1871 + $0x48] sm:$0xff] %vm1448, %v1842
        %1882 = vst.msk [vmem:[%s1871 + $0x50] sm:$0xff] %vm1448, %v1844
        %1883 = vst.msk [vmem:[%s1871 + $0x58] sm:$0xff] %vm1448, %v1846
        %1884 = vst.msk [vmem:[%s1871 + $0x60] sm:$0xff] %vm1448, %v1848
        %1885 = vst.msk [vmem:[%s1871 + $0x68] sm:$0xff] %vm1448, %v1850
        %1886 = vst.msk [vmem:[%s1871 + $0x70] sm:$0xff] %vm1448, %v1852
        %1887 = vst.msk [vmem:[%s1871 + $0x78] sm:$0xff] %vm1448, %v1854
        %1904 = vrot.lane.b32.xlu0 %v1179, 64
        %v1905 = vpop.permute.xlu0 %1904
        %1906 = vrot.lane.b32.xlu0 %v1185, 64
        %v1907 = vpop.permute.xlu0 %1906
        %1908 = vrot.lane.b32.xlu0 %v1191, 64
        %v1909 = vpop.permute.xlu0 %1908
        %1910 = vrot.lane.b32.xlu0 %v1197, 64
        %v1911 = vpop.permute.xlu0 %1910
        %1912 = vrot.lane.b32.xlu0 %v1203, 64
        %v1913 = vpop.permute.xlu0 %1912
        %1914 = vrot.lane.b32.xlu0 %v1209, 64
        %v1915 = vpop.permute.xlu0 %1914
        %1916 = vrot.lane.b32.xlu0 %v1215, 64
        %v1917 = vpop.permute.xlu0 %1916
        %1918 = vrot.lane.b32.xlu0 %v1221, 64
        %v1919 = vpop.permute.xlu0 %1918
        %1920 = vrot.lane.b32.xlu0 %v1227, 64
        %v1921 = vpop.permute.xlu0 %1920
        %1922 = vrot.lane.b32.xlu0 %v1233, 64
        %v1923 = vpop.permute.xlu0 %1922
        %1924 = vrot.lane.b32.xlu0 %v1239, 64
        %v1925 = vpop.permute.xlu0 %1924
        %1926 = vrot.lane.b32.xlu0 %v1245, 64
        %v1927 = vpop.permute.xlu0 %1926
        %1928 = vrot.lane.b32.xlu0 %v1251, 64
        %v1929 = vpop.permute.xlu0 %1928
        %1930 = vrot.lane.b32.xlu0 %v1257, 64
        %v1931 = vpop.permute.xlu0 %1930
        %1932 = vrot.lane.b32.xlu0 %v1263, 64
        %v1933 = vpop.permute.xlu0 %1932
        %1934 = vrot.lane.b32.xlu0 %v1269, 64
        %v1935 = vpop.permute.xlu0 %1934
        %s1952 = scalar_lea.vmem %s337, 384 [#allocation7]
        %1953 = vst.msk [vmem:[%s1952] sm:$0xff] %vm1448, %v1905
        %1954 = vst.msk [vmem:[%s1952 + $0x8] sm:$0xff] %vm1448, %v1907
        %1955 = vst.msk [vmem:[%s1952 + $0x10] sm:$0xff] %vm1448, %v1909
        %1956 = vst.msk [vmem:[%s1952 + $0x18] sm:$0xff] %vm1448, %v1911
        %1957 = vst.msk [vmem:[%s1952 + $0x20] sm:$0xff] %vm1448, %v1913
        %1958 = vst.msk [vmem:[%s1952 + $0x28] sm:$0xff] %vm1448, %v1915
        %1959 = vst.msk [vmem:[%s1952 + $0x30] sm:$0xff] %vm1448, %v1917
        %1960 = vst.msk [vmem:[%s1952 + $0x38] sm:$0xff] %vm1448, %v1919
        %1961 = vst.msk [vmem:[%s1952 + $0x40] sm:$0xff] %vm1448, %v1921
        %1962 = vst.msk [vmem:[%s1952 + $0x48] sm:$0xff] %vm1448, %v1923
        %1963 = vst.msk [vmem:[%s1952 + $0x50] sm:$0xff] %vm1448, %v1925
        %1964 = vst.msk [vmem:[%s1952 + $0x58] sm:$0xff] %vm1448, %v1927
        %1965 = vst.msk [vmem:[%s1952 + $0x60] sm:$0xff] %vm1448, %v1929
        %1966 = vst.msk [vmem:[%s1952 + $0x68] sm:$0xff] %vm1448, %v1931
        %1967 = vst.msk [vmem:[%s1952 + $0x70] sm:$0xff] %vm1448, %v1933
        %1968 = vst.msk [vmem:[%s1952 + $0x78] sm:$0xff] %vm1448, %v1935
        %1985 = vrot.lane.b32.xlu0 %v1340, 64
        %v1986 = vpop.permute.xlu0 %1985
        %1987 = vrot.lane.b32.xlu0 %v1346, 64
        %v1988 = vpop.permute.xlu0 %1987
        %1989 = vrot.lane.b32.xlu0 %v1352, 64
        %v1990 = vpop.permute.xlu0 %1989
        %1991 = vrot.lane.b32.xlu0 %v1358, 64
        %v1992 = vpop.permute.xlu0 %1991
        %1993 = vrot.lane.b32.xlu0 %v1364, 64
        %v1994 = vpop.permute.xlu0 %1993
        %1995 = vrot.lane.b32.xlu0 %v1370, 64
        %v1996 = vpop.permute.xlu0 %1995
        %1997 = vrot.lane.b32.xlu0 %v1376, 64
        %v1998 = vpop.permute.xlu0 %1997
        %1999 = vrot.lane.b32.xlu0 %v1382, 64
        %v2000 = vpop.permute.xlu0 %1999
        %2001 = vrot.lane.b32.xlu0 %v1388, 64
        %v2002 = vpop.permute.xlu0 %2001
        %2003 = vrot.lane.b32.xlu0 %v1394, 64
        %v2004 = vpop.permute.xlu0 %2003
        %2005 = vrot.lane.b32.xlu0 %v1400, 64
        %v2006 = vpop.permute.xlu0 %2005
        %2007 = vrot.lane.b32.xlu0 %v1406, 64
        %v2008 = vpop.permute.xlu0 %2007
        %2009 = vrot.lane.b32.xlu0 %v1412, 64
        %v2010 = vpop.permute.xlu0 %2009
        %2011 = vrot.lane.b32.xlu0 %v1418, 64
        %v2012 = vpop.permute.xlu0 %2011
        %2013 = vrot.lane.b32.xlu0 %v1424, 64
        %v2014 = vpop.permute.xlu0 %2013
        %2015 = vrot.lane.b32.xlu0 %v1430, 64
        %v2016 = vpop.permute.xlu0 %2015
        %s2033 = scalar_lea.vmem %s343, 384 [#allocation8]
        %2034 = vst.msk [vmem:[%s2033] sm:$0xff] %vm1448, %v1986
        %2035 = vst.msk [vmem:[%s2033 + $0x8] sm:$0xff] %vm1448, %v1988
        %2036 = vst.msk [vmem:[%s2033 + $0x10] sm:$0xff] %vm1448, %v1990
        %2037 = vst.msk [vmem:[%s2033 + $0x18] sm:$0xff] %vm1448, %v1992
        %2038 = vst.msk [vmem:[%s2033 + $0x20] sm:$0xff] %vm1448, %v1994
        %2039 = vst.msk [vmem:[%s2033 + $0x28] sm:$0xff] %vm1448, %v1996
        %2040 = vst.msk [vmem:[%s2033 + $0x30] sm:$0xff] %vm1448, %v1998
        %2041 = vst.msk [vmem:[%s2033 + $0x38] sm:$0xff] %vm1448, %v2000
        %2042 = vst.msk [vmem:[%s2033 + $0x40] sm:$0xff] %vm1448, %v2002
        %2043 = vst.msk [vmem:[%s2033 + $0x48] sm:$0xff] %vm1448, %v2004
        %2044 = vst.msk [vmem:[%s2033 + $0x50] sm:$0xff] %vm1448, %v2006
        %2045 = vst.msk [vmem:[%s2033 + $0x58] sm:$0xff] %vm1448, %v2008
        %2046 = vst.msk [vmem:[%s2033 + $0x60] sm:$0xff] %vm1448, %v2010
        %2047 = vst.msk [vmem:[%s2033 + $0x68] sm:$0xff] %vm1448, %v2012
        %2048 = vst.msk [vmem:[%s2033 + $0x70] sm:$0xff] %vm1448, %v2014
        %2049 = vst.msk [vmem:[%s2033 + $0x78] sm:$0xff] %vm1448, %v2016
        %s2050 = sand.u32 %s157, 1
        %s2051 = sand.u32 %s157, 1
        %s2052 = smul.addr %s2051, 512
        %s2053 = scalar_lea.vmem [#allocation6], %s2052
        %s2054 = sand.u32 %s185, 1
        %s2055 = sand.u32 %s185, 1
        %s2056 = smul.addr %s2055, 512
        %s2057 = scalar_lea.vmem [#allocation7], %s2056
        %s2058 = sand.u32 %s213, 1
        %s2059 = sand.u32 %s213, 1
        %s2060 = smul.addr %s2059, 512
        %s2061 = scalar_lea.vmem [#allocation8], %s2060
        // Predicated region
        $region49: #{tpu_custom_call.1} parent=39 // pred_check
          %p2062 = pneg %p167
        $region50: #{tpu_custom_call.1} parent=39 // pred_check_branch
          %2064 = sbr.rel (%p2062) target = $region52
        $region51: #{tpu_custom_call.1} parent=39 // pred_region
          %s2065 = smul.u32 16, %s28
          %s2066 = smul.addr %s27, 128
          %s2067 = sadd.s32 %s2065, %s2066
          %s2068 = smul.addr %s2067, 8
          %s2069 = scalar_lea.vmem %s5, %s2068
          // Predicated region
          $region53: #{tpu_custom_call.1} parent=51 // pred_check
            _
          $region54: #{tpu_custom_call.1} parent=51 // pred_check_branch
            %2071 = sbr.rel (0) target = $region56
          $region55: #{tpu_custom_call.1} parent=51 // pred_region
            // Predicated region
            $region57: #{tpu_custom_call.1} parent=55 // pred_check
              _
            $region58: #{tpu_custom_call.1} parent=55 // pred_check_branch
              %2073 = sbr.rel (0) target = $region60
            $region59: #{tpu_custom_call.1} parent=55 // pred_region
              // Predicated region
              $region72: #{tpu_custom_call.1} parent=59 // pred_check
                _
              $region73: #{tpu_custom_call.1} parent=59 // pred_check_branch
                %2214 = sbr.rel (0) target = $region75
              $region74: #{tpu_custom_call.1} parent=59 // pred_region
                loop: start=0, step=1, limit=1
                $region76: #{tpu_custom_call.1} parent=74 // loop_pre_header
                  _
                $region77: #{tpu_custom_call.1} parent=74 // loop_header
                  %s2216 = sphi 0, %s2220
                  %p2217 = scmp.ge.s32.totalorder %s2216, 1
                  %s2221 = sphi %s2053, %s2053
                  %s2222 = sphi %s2069, %s2069
                $region78: #{tpu_custom_call.1} parent=74 // loop_header_branch
                  %2219 = sbr.rel (%p2217) target = $region82
                $region79: #{tpu_custom_call.1} parent=74 // loop_body
                  %v2223 = vld [vmem:[%s2221] sm:$0xff]
                  %2224 = vst [vmem:[%s2222] sm:$0xff] %v2223
                  %v2225 = vld [vmem:[%s2221 + $0x8] sm:$0xff]
                  %2226 = vst [vmem:[%s2222 + $0x8] sm:$0xff] %v2225
                  %v2227 = vld [vmem:[%s2221 + $0x10] sm:$0xff]
                  %2228 = vst [vmem:[%s2222 + $0x10] sm:$0xff] %v2227
                  %v2229 = vld [vmem:[%s2221 + $0x18] sm:$0xff]
                  %2230 = vst [vmem:[%s2222 + $0x18] sm:$0xff] %v2229
                  %v2231 = vld [vmem:[%s2221 + $0x20] sm:$0xff]
                  %2232 = vst [vmem:[%s2222 + $0x20] sm:$0xff] %v2231
                  %v2233 = vld [vmem:[%s2221 + $0x28] sm:$0xff]
                  %2234 = vst [vmem:[%s2222 + $0x28] sm:$0xff] %v2233
                  %v2235 = vld [vmem:[%s2221 + $0x30] sm:$0xff]
                  %2236 = vst [vmem:[%s2222 + $0x30] sm:$0xff] %v2235
                  %v2237 = vld [vmem:[%s2221 + $0x38] sm:$0xff]
                  %2238 = vst [vmem:[%s2222 + $0x38] sm:$0xff] %v2237
                  %v2239 = vld [vmem:[%s2221 + $0x40] sm:$0xff]
                  %2240 = vst [vmem:[%s2222 + $0x40] sm:$0xff] %v2239
                  %v2241 = vld [vmem:[%s2221 + $0x48] sm:$0xff]
                  %2242 = vst [vmem:[%s2222 + $0x48] sm:$0xff] %v2241
                  %v2243 = vld [vmem:[%s2221 + $0x50] sm:$0xff]
                  %2244 = vst [vmem:[%s2222 + $0x50] sm:$0xff] %v2243
                  %v2245 = vld [vmem:[%s2221 + $0x58] sm:$0xff]
                  %2246 = vst [vmem:[%s2222 + $0x58] sm:$0xff] %v2245
                  %v2247 = vld [vmem:[%s2221 + $0x60] sm:$0xff]
                  %2248 = vst [vmem:[%s2222 + $0x60] sm:$0xff] %v2247
                  %v2249 = vld [vmem:[%s2221 + $0x68] sm:$0xff]
                  %2250 = vst [vmem:[%s2222 + $0x68] sm:$0xff] %v2249
                  %v2251 = vld [vmem:[%s2221 + $0x70] sm:$0xff]
                  %2252 = vst [vmem:[%s2222 + $0x70] sm:$0xff] %v2251
                  %v2253 = vld [vmem:[%s2221 + $0x78] sm:$0xff]
                  %2254 = vst [vmem:[%s2222 + $0x78] sm:$0xff] %v2253
                  %v2255 = vld [vmem:[%s2221 + $0x80] sm:$0xff]
                  %2256 = vst [vmem:[%s2222 + $0x100] sm:$0xff] %v2255
                  %v2257 = vld [vmem:[%s2221 + $0x88] sm:$0xff]
                  %2258 = vst [vmem:[%s2222 + $0x108] sm:$0xff] %v2257
                  %v2259 = vld [vmem:[%s2221 + $0x90] sm:$0xff]
                  %2260 = vst [vmem:[%s2222 + $0x110] sm:$0xff] %v2259
                  %v2261 = vld [vmem:[%s2221 + $0x98] sm:$0xff]
                  %2262 = vst [vmem:[%s2222 + $0x118] sm:$0xff] %v2261
                  %v2263 = vld [vmem:[%s2221 + $0xa0] sm:$0xff]
                  %2264 = vst [vmem:[%s2222 + $0x120] sm:$0xff] %v2263
                  %v2265 = vld [vmem:[%s2221 + $0xa8] sm:$0xff]
                  %2266 = vst [vmem:[%s2222 + $0x128] sm:$0xff] %v2265
                  %v2267 = vld [vmem:[%s2221 + $0xb0] sm:$0xff]
                  %2268 = vst [vmem:[%s2222 + $0x130] sm:$0xff] %v2267
                  %v2269 = vld [vmem:[%s2221 + $0xb8] sm:$0xff]
                  %2270 = vst [vmem:[%s2222 + $0x138] sm:$0xff] %v2269
                  %v2271 = vld [vmem:[%s2221 + $0xc0] sm:$0xff]
                  %2272 = vst [vmem:[%s2222 + $0x140] sm:$0xff] %v2271
                  %v2273 = vld [vmem:[%s2221 + $0xc8] sm:$0xff]
                  %2274 = vst [vmem:[%s2222 + $0x148] sm:$0xff] %v2273
                  %v2275 = vld [vmem:[%s2221 + $0xd0] sm:$0xff]
                  %2276 = vst [vmem:[%s2222 + $0x150] sm:$0xff] %v2275
                  %v2277 = vld [vmem:[%s2221 + $0xd8] sm:$0xff]
                  %2278 = vst [vmem:[%s2222 + $0x158] sm:$0xff] %v2277
                  %v2279 = vld [vmem:[%s2221 + $0xe0] sm:$0xff]
                  %2280 = vst [vmem:[%s2222 + $0x160] sm:$0xff] %v2279
                  %v2281 = vld [vmem:[%s2221 + $0xe8] sm:$0xff]
                  %2282 = vst [vmem:[%s2222 + $0x168] sm:$0xff] %v2281
                  %v2283 = vld [vmem:[%s2221 + $0xf0] sm:$0xff]
                  %2284 = vst [vmem:[%s2222 + $0x170] sm:$0xff] %v2283
                  %v2285 = vld [vmem:[%s2221 + $0xf8] sm:$0xff]
                  %2286 = vst [vmem:[%s2222 + $0x178] sm:$0xff] %v2285
                  %v2287 = vld [vmem:[%s2221 + $0x100] sm:$0xff]
                  %2288 = vst [vmem:[%s2222 + $0x200] sm:$0xff] %v2287
                  %v2289 = vld [vmem:[%s2221 + $0x108] sm:$0xff]
                  %2290 = vst [vmem:[%s2222 + $0x208] sm:$0xff] %v2289
                  %v2291 = vld [vmem:[%s2221 + $0x110] sm:$0xff]
                  %2292 = vst [vmem:[%s2222 + $0x210] sm:$0xff] %v2291
                  %v2293 = vld [vmem:[%s2221 + $0x118] sm:$0xff]
                  %2294 = vst [vmem:[%s2222 + $0x218] sm:$0xff] %v2293
                  %v2295 = vld [vmem:[%s2221 + $0x120] sm:$0xff]
                  %2296 = vst [vmem:[%s2222 + $0x220] sm:$0xff] %v2295
                  %v2297 = vld [vmem:[%s2221 + $0x128] sm:$0xff]
                  %2298 = vst [vmem:[%s2222 + $0x228] sm:$0xff] %v2297
                  %v2299 = vld [vmem:[%s2221 + $0x130] sm:$0xff]
                  %2300 = vst [vmem:[%s2222 + $0x230] sm:$0xff] %v2299
                  %v2301 = vld [vmem:[%s2221 + $0x138] sm:$0xff]
                  %2302 = vst [vmem:[%s2222 + $0x238] sm:$0xff] %v2301
                  %v2303 = vld [vmem:[%s2221 + $0x140] sm:$0xff]
                  %2304 = vst [vmem:[%s2222 + $0x240] sm:$0xff] %v2303
                  %v2305 = vld [vmem:[%s2221 + $0x148] sm:$0xff]
                  %2306 = vst [vmem:[%s2222 + $0x248] sm:$0xff] %v2305
                  %v2307 = vld [vmem:[%s2221 + $0x150] sm:$0xff]
                  %2308 = vst [vmem:[%s2222 + $0x250] sm:$0xff] %v2307
                  %v2309 = vld [vmem:[%s2221 + $0x158] sm:$0xff]
                  %2310 = vst [vmem:[%s2222 + $0x258] sm:$0xff] %v2309
                  %v2311 = vld [vmem:[%s2221 + $0x160] sm:$0xff]
                  %2312 = vst [vmem:[%s2222 + $0x260] sm:$0xff] %v2311
                  %v2313 = vld [vmem:[%s2221 + $0x168] sm:$0xff]
                  %2314 = vst [vmem:[%s2222 + $0x268] sm:$0xff] %v2313
                  %v2315 = vld [vmem:[%s2221 + $0x170] sm:$0xff]
                  %2316 = vst [vmem:[%s2222 + $0x270] sm:$0xff] %v2315
                  %v2317 = vld [vmem:[%s2221 + $0x178] sm:$0xff]
                  %2318 = vst [vmem:[%s2222 + $0x278] sm:$0xff] %v2317
                  %v2319 = vld [vmem:[%s2221 + $0x180] sm:$0xff]
                  %2320 = vst [vmem:[%s2222 + $0x300] sm:$0xff] %v2319
                  %v2321 = vld [vmem:[%s2221 + $0x188] sm:$0xff]
                  %2322 = vst [vmem:[%s2222 + $0x308] sm:$0xff] %v2321
                  %v2323 = vld [vmem:[%s2221 + $0x190] sm:$0xff]
                  %2324 = vst [vmem:[%s2222 + $0x310] sm:$0xff] %v2323
                  %v2325 = vld [vmem:[%s2221 + $0x198] sm:$0xff]
                  %2326 = vst [vmem:[%s2222 + $0x318] sm:$0xff] %v2325
                  %v2327 = vld [vmem:[%s2221 + $0x1a0] sm:$0xff]
                  %2328 = vst [vmem:[%s2222 + $0x320] sm:$0xff] %v2327
                  %v2329 = vld [vmem:[%s2221 + $0x1a8] sm:$0xff]
                  %2330 = vst [vmem:[%s2222 + $0x328] sm:$0xff] %v2329
                  %v2331 = vld [vmem:[%s2221 + $0x1b0] sm:$0xff]
                  %2332 = vst [vmem:[%s2222 + $0x330] sm:$0xff] %v2331
                  %v2333 = vld [vmem:[%s2221 + $0x1b8] sm:$0xff]
                  %2334 = vst [vmem:[%s2222 + $0x338] sm:$0xff] %v2333
                  %v2335 = vld [vmem:[%s2221 + $0x1c0] sm:$0xff]
                  %2336 = vst [vmem:[%s2222 + $0x340] sm:$0xff] %v2335
                  %v2337 = vld [vmem:[%s2221 + $0x1c8] sm:$0xff]
                  %2338 = vst [vmem:[%s2222 + $0x348] sm:$0xff] %v2337
                  %v2339 = vld [vmem:[%s2221 + $0x1d0] sm:$0xff]
                  %2340 = vst [vmem:[%s2222 + $0x350] sm:$0xff] %v2339
                  %v2341 = vld [vmem:[%s2221 + $0x1d8] sm:$0xff]
                  %2342 = vst [vmem:[%s2222 + $0x358] sm:$0xff] %v2341
                  %v2343 = vld [vmem:[%s2221 + $0x1e0] sm:$0xff]
                  %2344 = vst [vmem:[%s2222 + $0x360] sm:$0xff] %v2343
                  %v2345 = vld [vmem:[%s2221 + $0x1e8] sm:$0xff]
                  %2346 = vst [vmem:[%s2222 + $0x368] sm:$0xff] %v2345
                  %v2347 = vld [vmem:[%s2221 + $0x1f0] sm:$0xff]
                  %2348 = vst [vmem:[%s2222 + $0x370] sm:$0xff] %v2347
                  %v2349 = vld [vmem:[%s2221 + $0x1f8] sm:$0xff]
                  %2350 = vst [vmem:[%s2222 + $0x378] sm:$0xff] %v2349
                $region80: #{tpu_custom_call.1} parent=74 // loop_footer
                  %s2220 = sadd.s32 1, %s2216
                $region81: #{tpu_custom_call.1} parent=74 // loop_footer_branch
                  %2215 = sbr.rel target = $region77
                $region82: #{tpu_custom_call.1} parent=74 // loop_exit
                  _
              $region75: #{tpu_custom_call.1} parent=59 // pred_fallthru
                _
              // Predicated region
              $region83: #{tpu_custom_call.1} parent=59 // pred_check
                _
              $region84: #{tpu_custom_call.1} parent=59 // pred_check_branch
                %2352 = sbr.rel target = $region86
              $region85: #{tpu_custom_call.1} parent=59 // pred_region
                _
              $region86: #{tpu_custom_call.1} parent=59 // pred_fallthru
                _
            $region60: #{tpu_custom_call.1} parent=55 // pred_fallthru
              _
            // Predicated region
            $region61: #{tpu_custom_call.1} parent=55 // pred_check
              _
            $region62: #{tpu_custom_call.1} parent=55 // pred_check_branch
              %2075 = sbr.rel target = $region64
            $region63: #{tpu_custom_call.1} parent=55 // pred_region
              loop: start=0, step=1, limit=1
              $region65: #{tpu_custom_call.1} parent=63 // loop_pre_header
                _
              $region66: #{tpu_custom_call.1} parent=63 // loop_header
                %s2078 = sphi 0, %s2082
                %p2079 = scmp.ge.s32.totalorder %s2078, 1
                %s2083 = sphi %s2053, %s2053
                %s2084 = sphi %s2069, %s2069
              $region67: #{tpu_custom_call.1} parent=63 // loop_header_branch
                %2081 = sbr.rel (%p2079) target = $region71
              $region68: #{tpu_custom_call.1} parent=63 // loop_body
                %v2085 = vld [vmem:[%s2083] sm:$0xff]
                %2086 = vst [vmem:[%s2084] sm:$0xff] %v2085
                %v2087 = vld [vmem:[%s2083 + $0x8] sm:$0xff]
                %2088 = vst [vmem:[%s2084 + $0x8] sm:$0xff] %v2087
                %v2089 = vld [vmem:[%s2083 + $0x10] sm:$0xff]
                %2090 = vst [vmem:[%s2084 + $0x10] sm:$0xff] %v2089
                %v2091 = vld [vmem:[%s2083 + $0x18] sm:$0xff]
                %2092 = vst [vmem:[%s2084 + $0x18] sm:$0xff] %v2091
                %v2093 = vld [vmem:[%s2083 + $0x20] sm:$0xff]
                %2094 = vst [vmem:[%s2084 + $0x20] sm:$0xff] %v2093
                %v2095 = vld [vmem:[%s2083 + $0x28] sm:$0xff]
                %2096 = vst [vmem:[%s2084 + $0x28] sm:$0xff] %v2095
                %v2097 = vld [vmem:[%s2083 + $0x30] sm:$0xff]
                %2098 = vst [vmem:[%s2084 + $0x30] sm:$0xff] %v2097
                %v2099 = vld [vmem:[%s2083 + $0x38] sm:$0xff]
                %2100 = vst [vmem:[%s2084 + $0x38] sm:$0xff] %v2099
                %v2101 = vld [vmem:[%s2083 + $0x40] sm:$0xff]
                %2102 = vst [vmem:[%s2084 + $0x40] sm:$0xff] %v2101
                %v2103 = vld [vmem:[%s2083 + $0x48] sm:$0xff]
                %2104 = vst [vmem:[%s2084 + $0x48] sm:$0xff] %v2103
                %v2105 = vld [vmem:[%s2083 + $0x50] sm:$0xff]
                %2106 = vst [vmem:[%s2084 + $0x50] sm:$0xff] %v2105
                %v2107 = vld [vmem:[%s2083 + $0x58] sm:$0xff]
                %2108 = vst [vmem:[%s2084 + $0x58] sm:$0xff] %v2107
                %v2109 = vld [vmem:[%s2083 + $0x60] sm:$0xff]
                %2110 = vst [vmem:[%s2084 + $0x60] sm:$0xff] %v2109
                %v2111 = vld [vmem:[%s2083 + $0x68] sm:$0xff]
                %2112 = vst [vmem:[%s2084 + $0x68] sm:$0xff] %v2111
                %v2113 = vld [vmem:[%s2083 + $0x70] sm:$0xff]
                %2114 = vst [vmem:[%s2084 + $0x70] sm:$0xff] %v2113
                %v2115 = vld [vmem:[%s2083 + $0x78] sm:$0xff]
                %2116 = vst [vmem:[%s2084 + $0x78] sm:$0xff] %v2115
                %v2117 = vld [vmem:[%s2083 + $0x80] sm:$0xff]
                %2118 = vst [vmem:[%s2084 + $0x100] sm:$0xff] %v2117
                %v2119 = vld [vmem:[%s2083 + $0x88] sm:$0xff]
                %2120 = vst [vmem:[%s2084 + $0x108] sm:$0xff] %v2119
                %v2121 = vld [vmem:[%s2083 + $0x90] sm:$0xff]
                %2122 = vst [vmem:[%s2084 + $0x110] sm:$0xff] %v2121
                %v2123 = vld [vmem:[%s2083 + $0x98] sm:$0xff]
                %2124 = vst [vmem:[%s2084 + $0x118] sm:$0xff] %v2123
                %v2125 = vld [vmem:[%s2083 + $0xa0] sm:$0xff]
                %2126 = vst [vmem:[%s2084 + $0x120] sm:$0xff] %v2125
                %v2127 = vld [vmem:[%s2083 + $0xa8] sm:$0xff]
                %2128 = vst [vmem:[%s2084 + $0x128] sm:$0xff] %v2127
                %v2129 = vld [vmem:[%s2083 + $0xb0] sm:$0xff]
                %2130 = vst [vmem:[%s2084 + $0x130] sm:$0xff] %v2129
                %v2131 = vld [vmem:[%s2083 + $0xb8] sm:$0xff]
                %2132 = vst [vmem:[%s2084 + $0x138] sm:$0xff] %v2131
                %v2133 = vld [vmem:[%s2083 + $0xc0] sm:$0xff]
                %2134 = vst [vmem:[%s2084 + $0x140] sm:$0xff] %v2133
                %v2135 = vld [vmem:[%s2083 + $0xc8] sm:$0xff]
                %2136 = vst [vmem:[%s2084 + $0x148] sm:$0xff] %v2135
                %v2137 = vld [vmem:[%s2083 + $0xd0] sm:$0xff]
                %2138 = vst [vmem:[%s2084 + $0x150] sm:$0xff] %v2137
                %v2139 = vld [vmem:[%s2083 + $0xd8] sm:$0xff]
                %2140 = vst [vmem:[%s2084 + $0x158] sm:$0xff] %v2139
                %v2141 = vld [vmem:[%s2083 + $0xe0] sm:$0xff]
                %2142 = vst [vmem:[%s2084 + $0x160] sm:$0xff] %v2141
                %v2143 = vld [vmem:[%s2083 + $0xe8] sm:$0xff]
                %2144 = vst [vmem:[%s2084 + $0x168] sm:$0xff] %v2143
                %v2145 = vld [vmem:[%s2083 + $0xf0] sm:$0xff]
                %2146 = vst [vmem:[%s2084 + $0x170] sm:$0xff] %v2145
                %v2147 = vld [vmem:[%s2083 + $0xf8] sm:$0xff]
                %2148 = vst [vmem:[%s2084 + $0x178] sm:$0xff] %v2147
                %v2149 = vld [vmem:[%s2083 + $0x100] sm:$0xff]
                %2150 = vst [vmem:[%s2084 + $0x200] sm:$0xff] %v2149
                %v2151 = vld [vmem:[%s2083 + $0x108] sm:$0xff]
                %2152 = vst [vmem:[%s2084 + $0x208] sm:$0xff] %v2151
                %v2153 = vld [vmem:[%s2083 + $0x110] sm:$0xff]
                %2154 = vst [vmem:[%s2084 + $0x210] sm:$0xff] %v2153
                %v2155 = vld [vmem:[%s2083 + $0x118] sm:$0xff]
                %2156 = vst [vmem:[%s2084 + $0x218] sm:$0xff] %v2155
                %v2157 = vld [vmem:[%s2083 + $0x120] sm:$0xff]
                %2158 = vst [vmem:[%s2084 + $0x220] sm:$0xff] %v2157
                %v2159 = vld [vmem:[%s2083 + $0x128] sm:$0xff]
                %2160 = vst [vmem:[%s2084 + $0x228] sm:$0xff] %v2159
                %v2161 = vld [vmem:[%s2083 + $0x130] sm:$0xff]
                %2162 = vst [vmem:[%s2084 + $0x230] sm:$0xff] %v2161
                %v2163 = vld [vmem:[%s2083 + $0x138] sm:$0xff]
                %2164 = vst [vmem:[%s2084 + $0x238] sm:$0xff] %v2163
                %v2165 = vld [vmem:[%s2083 + $0x140] sm:$0xff]
                %2166 = vst [vmem:[%s2084 + $0x240] sm:$0xff] %v2165
                %v2167 = vld [vmem:[%s2083 + $0x148] sm:$0xff]
                %2168 = vst [vmem:[%s2084 + $0x248] sm:$0xff] %v2167
                %v2169 = vld [vmem:[%s2083 + $0x150] sm:$0xff]
                %2170 = vst [vmem:[%s2084 + $0x250] sm:$0xff] %v2169
                %v2171 = vld [vmem:[%s2083 + $0x158] sm:$0xff]
                %2172 = vst [vmem:[%s2084 + $0x258] sm:$0xff] %v2171
                %v2173 = vld [vmem:[%s2083 + $0x160] sm:$0xff]
                %2174 = vst [vmem:[%s2084 + $0x260] sm:$0xff] %v2173
                %v2175 = vld [vmem:[%s2083 + $0x168] sm:$0xff]
                %2176 = vst [vmem:[%s2084 + $0x268] sm:$0xff] %v2175
                %v2177 = vld [vmem:[%s2083 + $0x170] sm:$0xff]
                %2178 = vst [vmem:[%s2084 + $0x270] sm:$0xff] %v2177
                %v2179 = vld [vmem:[%s2083 + $0x178] sm:$0xff]
                %2180 = vst [vmem:[%s2084 + $0x278] sm:$0xff] %v2179
                %v2181 = vld [vmem:[%s2083 + $0x180] sm:$0xff]
                %2182 = vst [vmem:[%s2084 + $0x300] sm:$0xff] %v2181
                %v2183 = vld [vmem:[%s2083 + $0x188] sm:$0xff]
                %2184 = vst [vmem:[%s2084 + $0x308] sm:$0xff] %v2183
                %v2185 = vld [vmem:[%s2083 + $0x190] sm:$0xff]
                %2186 = vst [vmem:[%s2084 + $0x310] sm:$0xff] %v2185
                %v2187 = vld [vmem:[%s2083 + $0x198] sm:$0xff]
                %2188 = vst [vmem:[%s2084 + $0x318] sm:$0xff] %v2187
                %v2189 = vld [vmem:[%s2083 + $0x1a0] sm:$0xff]
                %2190 = vst [vmem:[%s2084 + $0x320] sm:$0xff] %v2189
                %v2191 = vld [vmem:[%s2083 + $0x1a8] sm:$0xff]
                %2192 = vst [vmem:[%s2084 + $0x328] sm:$0xff] %v2191
                %v2193 = vld [vmem:[%s2083 + $0x1b0] sm:$0xff]
                %2194 = vst [vmem:[%s2084 + $0x330] sm:$0xff] %v2193
                %v2195 = vld [vmem:[%s2083 + $0x1b8] sm:$0xff]
                %2196 = vst [vmem:[%s2084 + $0x338] sm:$0xff] %v2195
                %v2197 = vld [vmem:[%s2083 + $0x1c0] sm:$0xff]
                %2198 = vst [vmem:[%s2084 + $0x340] sm:$0xff] %v2197
                %v2199 = vld [vmem:[%s2083 + $0x1c8] sm:$0xff]
                %2200 = vst [vmem:[%s2084 + $0x348] sm:$0xff] %v2199
                %v2201 = vld [vmem:[%s2083 + $0x1d0] sm:$0xff]
                %2202 = vst [vmem:[%s2084 + $0x350] sm:$0xff] %v2201
                %v2203 = vld [vmem:[%s2083 + $0x1d8] sm:$0xff]
                %2204 = vst [vmem:[%s2084 + $0x358] sm:$0xff] %v2203
                %v2205 = vld [vmem:[%s2083 + $0x1e0] sm:$0xff]
                %2206 = vst [vmem:[%s2084 + $0x360] sm:$0xff] %v2205
                %v2207 = vld [vmem:[%s2083 + $0x1e8] sm:$0xff]
                %2208 = vst [vmem:[%s2084 + $0x368] sm:$0xff] %v2207
                %v2209 = vld [vmem:[%s2083 + $0x1f0] sm:$0xff]
                %2210 = vst [vmem:[%s2084 + $0x370] sm:$0xff] %v2209
                %v2211 = vld [vmem:[%s2083 + $0x1f8] sm:$0xff]
                %2212 = vst [vmem:[%s2084 + $0x378] sm:$0xff] %v2211
              $region69: #{tpu_custom_call.1} parent=63 // loop_footer
                %s2082 = sadd.s32 1, %s2078
              $region70: #{tpu_custom_call.1} parent=63 // loop_footer_branch
                %2077 = sbr.rel target = $region66
              $region71: #{tpu_custom_call.1} parent=63 // loop_exit
                _
            $region64: #{tpu_custom_call.1} parent=55 // pred_fallthru
              _
          $region56: #{tpu_custom_call.1} parent=51 // pred_fallthru
            _
          %2353 = vnop
        $region52: #{tpu_custom_call.1} parent=39 // pred_fallthru
          _
        // Predicated region
        $region87: #{tpu_custom_call.1} parent=39 // pred_check
          %p2354 = pneg %p195
        $region88: #{tpu_custom_call.1} parent=39 // pred_check_branch
          %2356 = sbr.rel (%p2354) target = $region90
        $region89: #{tpu_custom_call.1} parent=39 // pred_region
          %s2357 = smul.u32 16, %s28
          %s2358 = smul.addr %s27, 128
          %s2359 = sadd.s32 %s2357, %s2358
          %s2360 = smul.addr %s2359, 8
          %s2361 = scalar_lea.vmem %s6, %s2360
          // Predicated region
          $region91: #{tpu_custom_call.1} parent=89 // pred_check
            _
          $region92: #{tpu_custom_call.1} parent=89 // pred_check_branch
            %2363 = sbr.rel (0) target = $region94
          $region93: #{tpu_custom_call.1} parent=89 // pred_region
            // Predicated region
            $region95: #{tpu_custom_call.1} parent=93 // pred_check
              _
            $region96: #{tpu_custom_call.1} parent=93 // pred_check_branch
              %2365 = sbr.rel (0) target = $region98
            $region97: #{tpu_custom_call.1} parent=93 // pred_region
              // Predicated region
              $region110: #{tpu_custom_call.1} parent=97 // pred_check
                _
              $region111: #{tpu_custom_call.1} parent=97 // pred_check_branch
                %2506 = sbr.rel (0) target = $region113
              $region112: #{tpu_custom_call.1} parent=97 // pred_region
                loop: start=0, step=1, limit=1
                $region114: #{tpu_custom_call.1} parent=112 // loop_pre_header
                  _
                $region115: #{tpu_custom_call.1} parent=112 // loop_header
                  %s2508 = sphi 0, %s2512
                  %p2509 = scmp.ge.s32.totalorder %s2508, 1
                  %s2513 = sphi %s2057, %s2057
                  %s2514 = sphi %s2361, %s2361
                $region116: #{tpu_custom_call.1} parent=112 // loop_header_branch
                  %2511 = sbr.rel (%p2509) target = $region120
                $region117: #{tpu_custom_call.1} parent=112 // loop_body
                  %v2515 = vld [vmem:[%s2513] sm:$0xff]
                  %2516 = vst [vmem:[%s2514] sm:$0xff] %v2515
                  %v2517 = vld [vmem:[%s2513 + $0x8] sm:$0xff]
                  %2518 = vst [vmem:[%s2514 + $0x8] sm:$0xff] %v2517
                  %v2519 = vld [vmem:[%s2513 + $0x10] sm:$0xff]
                  %2520 = vst [vmem:[%s2514 + $0x10] sm:$0xff] %v2519
                  %v2521 = vld [vmem:[%s2513 + $0x18] sm:$0xff]
                  %2522 = vst [vmem:[%s2514 + $0x18] sm:$0xff] %v2521
                  %v2523 = vld [vmem:[%s2513 + $0x20] sm:$0xff]
                  %2524 = vst [vmem:[%s2514 + $0x20] sm:$0xff] %v2523
                  %v2525 = vld [vmem:[%s2513 + $0x28] sm:$0xff]
                  %2526 = vst [vmem:[%s2514 + $0x28] sm:$0xff] %v2525
                  %v2527 = vld [vmem:[%s2513 + $0x30] sm:$0xff]
                  %2528 = vst [vmem:[%s2514 + $0x30] sm:$0xff] %v2527
                  %v2529 = vld [vmem:[%s2513 + $0x38] sm:$0xff]
                  %2530 = vst [vmem:[%s2514 + $0x38] sm:$0xff] %v2529
                  %v2531 = vld [vmem:[%s2513 + $0x40] sm:$0xff]
                  %2532 = vst [vmem:[%s2514 + $0x40] sm:$0xff] %v2531
                  %v2533 = vld [vmem:[%s2513 + $0x48] sm:$0xff]
                  %2534 = vst [vmem:[%s2514 + $0x48] sm:$0xff] %v2533
                  %v2535 = vld [vmem:[%s2513 + $0x50] sm:$0xff]
                  %2536 = vst [vmem:[%s2514 + $0x50] sm:$0xff] %v2535
                  %v2537 = vld [vmem:[%s2513 + $0x58] sm:$0xff]
                  %2538 = vst [vmem:[%s2514 + $0x58] sm:$0xff] %v2537
                  %v2539 = vld [vmem:[%s2513 + $0x60] sm:$0xff]
                  %2540 = vst [vmem:[%s2514 + $0x60] sm:$0xff] %v2539
                  %v2541 = vld [vmem:[%s2513 + $0x68] sm:$0xff]
                  %2542 = vst [vmem:[%s2514 + $0x68] sm:$0xff] %v2541
                  %v2543 = vld [vmem:[%s2513 + $0x70] sm:$0xff]
                  %2544 = vst [vmem:[%s2514 + $0x70] sm:$0xff] %v2543
                  %v2545 = vld [vmem:[%s2513 + $0x78] sm:$0xff]
                  %2546 = vst [vmem:[%s2514 + $0x78] sm:$0xff] %v2545
                  %v2547 = vld [vmem:[%s2513 + $0x80] sm:$0xff]
                  %2548 = vst [vmem:[%s2514 + $0x100] sm:$0xff] %v2547
                  %v2549 = vld [vmem:[%s2513 + $0x88] sm:$0xff]
                  %2550 = vst [vmem:[%s2514 + $0x108] sm:$0xff] %v2549
                  %v2551 = vld [vmem:[%s2513 + $0x90] sm:$0xff]
                  %2552 = vst [vmem:[%s2514 + $0x110] sm:$0xff] %v2551
                  %v2553 = vld [vmem:[%s2513 + $0x98] sm:$0xff]
                  %2554 = vst [vmem:[%s2514 + $0x118] sm:$0xff] %v2553
                  %v2555 = vld [vmem:[%s2513 + $0xa0] sm:$0xff]
                  %2556 = vst [vmem:[%s2514 + $0x120] sm:$0xff] %v2555
                  %v2557 = vld [vmem:[%s2513 + $0xa8] sm:$0xff]
                  %2558 = vst [vmem:[%s2514 + $0x128] sm:$0xff] %v2557
                  %v2559 = vld [vmem:[%s2513 + $0xb0] sm:$0xff]
                  %2560 = vst [vmem:[%s2514 + $0x130] sm:$0xff] %v2559
                  %v2561 = vld [vmem:[%s2513 + $0xb8] sm:$0xff]
                  %2562 = vst [vmem:[%s2514 + $0x138] sm:$0xff] %v2561
                  %v2563 = vld [vmem:[%s2513 + $0xc0] sm:$0xff]
                  %2564 = vst [vmem:[%s2514 + $0x140] sm:$0xff] %v2563
                  %v2565 = vld [vmem:[%s2513 + $0xc8] sm:$0xff]
                  %2566 = vst [vmem:[%s2514 + $0x148] sm:$0xff] %v2565
                  %v2567 = vld [vmem:[%s2513 + $0xd0] sm:$0xff]
                  %2568 = vst [vmem:[%s2514 + $0x150] sm:$0xff] %v2567
                  %v2569 = vld [vmem:[%s2513 + $0xd8] sm:$0xff]
                  %2570 = vst [vmem:[%s2514 + $0x158] sm:$0xff] %v2569
                  %v2571 = vld [vmem:[%s2513 + $0xe0] sm:$0xff]
                  %2572 = vst [vmem:[%s2514 + $0x160] sm:$0xff] %v2571
                  %v2573 = vld [vmem:[%s2513 + $0xe8] sm:$0xff]
                  %2574 = vst [vmem:[%s2514 + $0x168] sm:$0xff] %v2573
                  %v2575 = vld [vmem:[%s2513 + $0xf0] sm:$0xff]
                  %2576 = vst [vmem:[%s2514 + $0x170] sm:$0xff] %v2575
                  %v2577 = vld [vmem:[%s2513 + $0xf8] sm:$0xff]
                  %2578 = vst [vmem:[%s2514 + $0x178] sm:$0xff] %v2577
                  %v2579 = vld [vmem:[%s2513 + $0x100] sm:$0xff]
                  %2580 = vst [vmem:[%s2514 + $0x200] sm:$0xff] %v2579
                  %v2581 = vld [vmem:[%s2513 + $0x108] sm:$0xff]
                  %2582 = vst [vmem:[%s2514 + $0x208] sm:$0xff] %v2581
                  %v2583 = vld [vmem:[%s2513 + $0x110] sm:$0xff]
                  %2584 = vst [vmem:[%s2514 + $0x210] sm:$0xff] %v2583
                  %v2585 = vld [vmem:[%s2513 + $0x118] sm:$0xff]
                  %2586 = vst [vmem:[%s2514 + $0x218] sm:$0xff] %v2585
                  %v2587 = vld [vmem:[%s2513 + $0x120] sm:$0xff]
                  %2588 = vst [vmem:[%s2514 + $0x220] sm:$0xff] %v2587
                  %v2589 = vld [vmem:[%s2513 + $0x128] sm:$0xff]
                  %2590 = vst [vmem:[%s2514 + $0x228] sm:$0xff] %v2589
                  %v2591 = vld [vmem:[%s2513 + $0x130] sm:$0xff]
                  %2592 = vst [vmem:[%s2514 + $0x230] sm:$0xff] %v2591
                  %v2593 = vld [vmem:[%s2513 + $0x138] sm:$0xff]
                  %2594 = vst [vmem:[%s2514 + $0x238] sm:$0xff] %v2593
                  %v2595 = vld [vmem:[%s2513 + $0x140] sm:$0xff]
                  %2596 = vst [vmem:[%s2514 + $0x240] sm:$0xff] %v2595
                  %v2597 = vld [vmem:[%s2513 + $0x148] sm:$0xff]
                  %2598 = vst [vmem:[%s2514 + $0x248] sm:$0xff] %v2597
                  %v2599 = vld [vmem:[%s2513 + $0x150] sm:$0xff]
                  %2600 = vst [vmem:[%s2514 + $0x250] sm:$0xff] %v2599
                  %v2601 = vld [vmem:[%s2513 + $0x158] sm:$0xff]
                  %2602 = vst [vmem:[%s2514 + $0x258] sm:$0xff] %v2601
                  %v2603 = vld [vmem:[%s2513 + $0x160] sm:$0xff]
                  %2604 = vst [vmem:[%s2514 + $0x260] sm:$0xff] %v2603
                  %v2605 = vld [vmem:[%s2513 + $0x168] sm:$0xff]
                  %2606 = vst [vmem:[%s2514 + $0x268] sm:$0xff] %v2605
                  %v2607 = vld [vmem:[%s2513 + $0x170] sm:$0xff]
                  %2608 = vst [vmem:[%s2514 + $0x270] sm:$0xff] %v2607
                  %v2609 = vld [vmem:[%s2513 + $0x178] sm:$0xff]
                  %2610 = vst [vmem:[%s2514 + $0x278] sm:$0xff] %v2609
                  %v2611 = vld [vmem:[%s2513 + $0x180] sm:$0xff]
                  %2612 = vst [vmem:[%s2514 + $0x300] sm:$0xff] %v2611
                  %v2613 = vld [vmem:[%s2513 + $0x188] sm:$0xff]
                  %2614 = vst [vmem:[%s2514 + $0x308] sm:$0xff] %v2613
                  %v2615 = vld [vmem:[%s2513 + $0x190] sm:$0xff]
                  %2616 = vst [vmem:[%s2514 + $0x310] sm:$0xff] %v2615
                  %v2617 = vld [vmem:[%s2513 + $0x198] sm:$0xff]
                  %2618 = vst [vmem:[%s2514 + $0x318] sm:$0xff] %v2617
                  %v2619 = vld [vmem:[%s2513 + $0x1a0] sm:$0xff]
                  %2620 = vst [vmem:[%s2514 + $0x320] sm:$0xff] %v2619
                  %v2621 = vld [vmem:[%s2513 + $0x1a8] sm:$0xff]
                  %2622 = vst [vmem:[%s2514 + $0x328] sm:$0xff] %v2621
                  %v2623 = vld [vmem:[%s2513 + $0x1b0] sm:$0xff]
                  %2624 = vst [vmem:[%s2514 + $0x330] sm:$0xff] %v2623
                  %v2625 = vld [vmem:[%s2513 + $0x1b8] sm:$0xff]
                  %2626 = vst [vmem:[%s2514 + $0x338] sm:$0xff] %v2625
                  %v2627 = vld [vmem:[%s2513 + $0x1c0] sm:$0xff]
                  %2628 = vst [vmem:[%s2514 + $0x340] sm:$0xff] %v2627
                  %v2629 = vld [vmem:[%s2513 + $0x1c8] sm:$0xff]
                  %2630 = vst [vmem:[%s2514 + $0x348] sm:$0xff] %v2629
                  %v2631 = vld [vmem:[%s2513 + $0x1d0] sm:$0xff]
                  %2632 = vst [vmem:[%s2514 + $0x350] sm:$0xff] %v2631
                  %v2633 = vld [vmem:[%s2513 + $0x1d8] sm:$0xff]
                  %2634 = vst [vmem:[%s2514 + $0x358] sm:$0xff] %v2633
                  %v2635 = vld [vmem:[%s2513 + $0x1e0] sm:$0xff]
                  %2636 = vst [vmem:[%s2514 + $0x360] sm:$0xff] %v2635
                  %v2637 = vld [vmem:[%s2513 + $0x1e8] sm:$0xff]
                  %2638 = vst [vmem:[%s2514 + $0x368] sm:$0xff] %v2637
                  %v2639 = vld [vmem:[%s2513 + $0x1f0] sm:$0xff]
                  %2640 = vst [vmem:[%s2514 + $0x370] sm:$0xff] %v2639
                  %v2641 = vld [vmem:[%s2513 + $0x1f8] sm:$0xff]
                  %2642 = vst [vmem:[%s2514 + $0x378] sm:$0xff] %v2641
                $region118: #{tpu_custom_call.1} parent=112 // loop_footer
                  %s2512 = sadd.s32 1, %s2508
                $region119: #{tpu_custom_call.1} parent=112 // loop_footer_branch
                  %2507 = sbr.rel target = $region115
                $region120: #{tpu_custom_call.1} parent=112 // loop_exit
                  _
              $region113: #{tpu_custom_call.1} parent=97 // pred_fallthru
                _
              // Predicated region
              $region121: #{tpu_custom_call.1} parent=97 // pred_check
                _
              $region122: #{tpu_custom_call.1} parent=97 // pred_check_branch
                %2644 = sbr.rel target = $region124
              $region123: #{tpu_custom_call.1} parent=97 // pred_region
                _
              $region124: #{tpu_custom_call.1} parent=97 // pred_fallthru
                _
            $region98: #{tpu_custom_call.1} parent=93 // pred_fallthru
              _
            // Predicated region
            $region99: #{tpu_custom_call.1} parent=93 // pred_check
              _
            $region100: #{tpu_custom_call.1} parent=93 // pred_check_branch
              %2367 = sbr.rel target = $region102
            $region101: #{tpu_custom_call.1} parent=93 // pred_region
              loop: start=0, step=1, limit=1
              $region103: #{tpu_custom_call.1} parent=101 // loop_pre_header
                _
              $region104: #{tpu_custom_call.1} parent=101 // loop_header
                %s2370 = sphi 0, %s2374
                %p2371 = scmp.ge.s32.totalorder %s2370, 1
                %s2375 = sphi %s2057, %s2057
                %s2376 = sphi %s2361, %s2361
              $region105: #{tpu_custom_call.1} parent=101 // loop_header_branch
                %2373 = sbr.rel (%p2371) target = $region109
              $region106: #{tpu_custom_call.1} parent=101 // loop_body
                %v2377 = vld [vmem:[%s2375] sm:$0xff]
                %2378 = vst [vmem:[%s2376] sm:$0xff] %v2377
                %v2379 = vld [vmem:[%s2375 + $0x8] sm:$0xff]
                %2380 = vst [vmem:[%s2376 + $0x8] sm:$0xff] %v2379
                %v2381 = vld [vmem:[%s2375 + $0x10] sm:$0xff]
                %2382 = vst [vmem:[%s2376 + $0x10] sm:$0xff] %v2381
                %v2383 = vld [vmem:[%s2375 + $0x18] sm:$0xff]
                %2384 = vst [vmem:[%s2376 + $0x18] sm:$0xff] %v2383
                %v2385 = vld [vmem:[%s2375 + $0x20] sm:$0xff]
                %2386 = vst [vmem:[%s2376 + $0x20] sm:$0xff] %v2385
                %v2387 = vld [vmem:[%s2375 + $0x28] sm:$0xff]
                %2388 = vst [vmem:[%s2376 + $0x28] sm:$0xff] %v2387
                %v2389 = vld [vmem:[%s2375 + $0x30] sm:$0xff]
                %2390 = vst [vmem:[%s2376 + $0x30] sm:$0xff] %v2389
                %v2391 = vld [vmem:[%s2375 + $0x38] sm:$0xff]
                %2392 = vst [vmem:[%s2376 + $0x38] sm:$0xff] %v2391
                %v2393 = vld [vmem:[%s2375 + $0x40] sm:$0xff]
                %2394 = vst [vmem:[%s2376 + $0x40] sm:$0xff] %v2393
                %v2395 = vld [vmem:[%s2375 + $0x48] sm:$0xff]
                %2396 = vst [vmem:[%s2376 + $0x48] sm:$0xff] %v2395
                %v2397 = vld [vmem:[%s2375 + $0x50] sm:$0xff]
                %2398 = vst [vmem:[%s2376 + $0x50] sm:$0xff] %v2397
                %v2399 = vld [vmem:[%s2375 + $0x58] sm:$0xff]
                %2400 = vst [vmem:[%s2376 + $0x58] sm:$0xff] %v2399
                %v2401 = vld [vmem:[%s2375 + $0x60] sm:$0xff]
                %2402 = vst [vmem:[%s2376 + $0x60] sm:$0xff] %v2401
                %v2403 = vld [vmem:[%s2375 + $0x68] sm:$0xff]
                %2404 = vst [vmem:[%s2376 + $0x68] sm:$0xff] %v2403
                %v2405 = vld [vmem:[%s2375 + $0x70] sm:$0xff]
                %2406 = vst [vmem:[%s2376 + $0x70] sm:$0xff] %v2405
                %v2407 = vld [vmem:[%s2375 + $0x78] sm:$0xff]
                %2408 = vst [vmem:[%s2376 + $0x78] sm:$0xff] %v2407
                %v2409 = vld [vmem:[%s2375 + $0x80] sm:$0xff]
                %2410 = vst [vmem:[%s2376 + $0x100] sm:$0xff] %v2409
                %v2411 = vld [vmem:[%s2375 + $0x88] sm:$0xff]
                %2412 = vst [vmem:[%s2376 + $0x108] sm:$0xff] %v2411
                %v2413 = vld [vmem:[%s2375 + $0x90] sm:$0xff]
                %2414 = vst [vmem:[%s2376 + $0x110] sm:$0xff] %v2413
                %v2415 = vld [vmem:[%s2375 + $0x98] sm:$0xff]
                %2416 = vst [vmem:[%s2376 + $0x118] sm:$0xff] %v2415
                %v2417 = vld [vmem:[%s2375 + $0xa0] sm:$0xff]
                %2418 = vst [vmem:[%s2376 + $0x120] sm:$0xff] %v2417
                %v2419 = vld [vmem:[%s2375 + $0xa8] sm:$0xff]
                %2420 = vst [vmem:[%s2376 + $0x128] sm:$0xff] %v2419
                %v2421 = vld [vmem:[%s2375 + $0xb0] sm:$0xff]
                %2422 = vst [vmem:[%s2376 + $0x130] sm:$0xff] %v2421
                %v2423 = vld [vmem:[%s2375 + $0xb8] sm:$0xff]
                %2424 = vst [vmem:[%s2376 + $0x138] sm:$0xff] %v2423
                %v2425 = vld [vmem:[%s2375 + $0xc0] sm:$0xff]
                %2426 = vst [vmem:[%s2376 + $0x140] sm:$0xff] %v2425
                %v2427 = vld [vmem:[%s2375 + $0xc8] sm:$0xff]
                %2428 = vst [vmem:[%s2376 + $0x148] sm:$0xff] %v2427
                %v2429 = vld [vmem:[%s2375 + $0xd0] sm:$0xff]
                %2430 = vst [vmem:[%s2376 + $0x150] sm:$0xff] %v2429
                %v2431 = vld [vmem:[%s2375 + $0xd8] sm:$0xff]
                %2432 = vst [vmem:[%s2376 + $0x158] sm:$0xff] %v2431
                %v2433 = vld [vmem:[%s2375 + $0xe0] sm:$0xff]
                %2434 = vst [vmem:[%s2376 + $0x160] sm:$0xff] %v2433
                %v2435 = vld [vmem:[%s2375 + $0xe8] sm:$0xff]
                %2436 = vst [vmem:[%s2376 + $0x168] sm:$0xff] %v2435
                %v2437 = vld [vmem:[%s2375 + $0xf0] sm:$0xff]
                %2438 = vst [vmem:[%s2376 + $0x170] sm:$0xff] %v2437
                %v2439 = vld [vmem:[%s2375 + $0xf8] sm:$0xff]
                %2440 = vst [vmem:[%s2376 + $0x178] sm:$0xff] %v2439
                %v2441 = vld [vmem:[%s2375 + $0x100] sm:$0xff]
                %2442 = vst [vmem:[%s2376 + $0x200] sm:$0xff] %v2441
                %v2443 = vld [vmem:[%s2375 + $0x108] sm:$0xff]
                %2444 = vst [vmem:[%s2376 + $0x208] sm:$0xff] %v2443
                %v2445 = vld [vmem:[%s2375 + $0x110] sm:$0xff]
                %2446 = vst [vmem:[%s2376 + $0x210] sm:$0xff] %v2445
                %v2447 = vld [vmem:[%s2375 + $0x118] sm:$0xff]
                %2448 = vst [vmem:[%s2376 + $0x218] sm:$0xff] %v2447
                %v2449 = vld [vmem:[%s2375 + $0x120] sm:$0xff]
                %2450 = vst [vmem:[%s2376 + $0x220] sm:$0xff] %v2449
                %v2451 = vld [vmem:[%s2375 + $0x128] sm:$0xff]
                %2452 = vst [vmem:[%s2376 + $0x228] sm:$0xff] %v2451
                %v2453 = vld [vmem:[%s2375 + $0x130] sm:$0xff]
                %2454 = vst [vmem:[%s2376 + $0x230] sm:$0xff] %v2453
                %v2455 = vld [vmem:[%s2375 + $0x138] sm:$0xff]
                %2456 = vst [vmem:[%s2376 + $0x238] sm:$0xff] %v2455
                %v2457 = vld [vmem:[%s2375 + $0x140] sm:$0xff]
                %2458 = vst [vmem:[%s2376 + $0x240] sm:$0xff] %v2457
                %v2459 = vld [vmem:[%s2375 + $0x148] sm:$0xff]
                %2460 = vst [vmem:[%s2376 + $0x248] sm:$0xff] %v2459
                %v2461 = vld [vmem:[%s2375 + $0x150] sm:$0xff]
                %2462 = vst [vmem:[%s2376 + $0x250] sm:$0xff] %v2461
                %v2463 = vld [vmem:[%s2375 + $0x158] sm:$0xff]
                %2464 = vst [vmem:[%s2376 + $0x258] sm:$0xff] %v2463
                %v2465 = vld [vmem:[%s2375 + $0x160] sm:$0xff]
                %2466 = vst [vmem:[%s2376 + $0x260] sm:$0xff] %v2465
                %v2467 = vld [vmem:[%s2375 + $0x168] sm:$0xff]
                %2468 = vst [vmem:[%s2376 + $0x268] sm:$0xff] %v2467
                %v2469 = vld [vmem:[%s2375 + $0x170] sm:$0xff]
                %2470 = vst [vmem:[%s2376 + $0x270] sm:$0xff] %v2469
                %v2471 = vld [vmem:[%s2375 + $0x178] sm:$0xff]
                %2472 = vst [vmem:[%s2376 + $0x278] sm:$0xff] %v2471
                %v2473 = vld [vmem:[%s2375 + $0x180] sm:$0xff]
                %2474 = vst [vmem:[%s2376 + $0x300] sm:$0xff] %v2473
                %v2475 = vld [vmem:[%s2375 + $0x188] sm:$0xff]
                %2476 = vst [vmem:[%s2376 + $0x308] sm:$0xff] %v2475
                %v2477 = vld [vmem:[%s2375 + $0x190] sm:$0xff]
                %2478 = vst [vmem:[%s2376 + $0x310] sm:$0xff] %v2477
                %v2479 = vld [vmem:[%s2375 + $0x198] sm:$0xff]
                %2480 = vst [vmem:[%s2376 + $0x318] sm:$0xff] %v2479
                %v2481 = vld [vmem:[%s2375 + $0x1a0] sm:$0xff]
                %2482 = vst [vmem:[%s2376 + $0x320] sm:$0xff] %v2481
                %v2483 = vld [vmem:[%s2375 + $0x1a8] sm:$0xff]
                %2484 = vst [vmem:[%s2376 + $0x328] sm:$0xff] %v2483
                %v2485 = vld [vmem:[%s2375 + $0x1b0] sm:$0xff]
                %2486 = vst [vmem:[%s2376 + $0x330] sm:$0xff] %v2485
                %v2487 = vld [vmem:[%s2375 + $0x1b8] sm:$0xff]
                %2488 = vst [vmem:[%s2376 + $0x338] sm:$0xff] %v2487
                %v2489 = vld [vmem:[%s2375 + $0x1c0] sm:$0xff]
                %2490 = vst [vmem:[%s2376 + $0x340] sm:$0xff] %v2489
                %v2491 = vld [vmem:[%s2375 + $0x1c8] sm:$0xff]
                %2492 = vst [vmem:[%s2376 + $0x348] sm:$0xff] %v2491
                %v2493 = vld [vmem:[%s2375 + $0x1d0] sm:$0xff]
                %2494 = vst [vmem:[%s2376 + $0x350] sm:$0xff] %v2493
                %v2495 = vld [vmem:[%s2375 + $0x1d8] sm:$0xff]
                %2496 = vst [vmem:[%s2376 + $0x358] sm:$0xff] %v2495
                %v2497 = vld [vmem:[%s2375 + $0x1e0] sm:$0xff]
                %2498 = vst [vmem:[%s2376 + $0x360] sm:$0xff] %v2497
                %v2499 = vld [vmem:[%s2375 + $0x1e8] sm:$0xff]
                %2500 = vst [vmem:[%s2376 + $0x368] sm:$0xff] %v2499
                %v2501 = vld [vmem:[%s2375 + $0x1f0] sm:$0xff]
                %2502 = vst [vmem:[%s2376 + $0x370] sm:$0xff] %v2501
                %v2503 = vld [vmem:[%s2375 + $0x1f8] sm:$0xff]
                %2504 = vst [vmem:[%s2376 + $0x378] sm:$0xff] %v2503
              $region107: #{tpu_custom_call.1} parent=101 // loop_footer
                %s2374 = sadd.s32 1, %s2370
              $region108: #{tpu_custom_call.1} parent=101 // loop_footer_branch
                %2369 = sbr.rel target = $region104
              $region109: #{tpu_custom_call.1} parent=101 // loop_exit
                _
            $region102: #{tpu_custom_call.1} parent=93 // pred_fallthru
              _
          $region94: #{tpu_custom_call.1} parent=89 // pred_fallthru
            _
          %2645 = vnop
        $region90: #{tpu_custom_call.1} parent=39 // pred_fallthru
          _
        // Predicated region
        $region125: #{tpu_custom_call.1} parent=39 // pred_check
          %p2646 = pneg %p223
        $region126: #{tpu_custom_call.1} parent=39 // pred_check_branch
          %2648 = sbr.rel (%p2646) target = $region128
        $region127: #{tpu_custom_call.1} parent=39 // pred_region
          %s2649 = smul.u32 16, %s28
          %s2650 = smul.addr %s27, 128
          %s2651 = sadd.s32 %s2649, %s2650
          %s2652 = smul.addr %s2651, 8
          %s2653 = scalar_lea.vmem %s7, %s2652
          // Predicated region
          $region129: #{tpu_custom_call.1} parent=127 // pred_check
            _
          $region130: #{tpu_custom_call.1} parent=127 // pred_check_branch
            %2655 = sbr.rel (0) target = $region132
          $region131: #{tpu_custom_call.1} parent=127 // pred_region
            // Predicated region
            $region133: #{tpu_custom_call.1} parent=131 // pred_check
              _
            $region134: #{tpu_custom_call.1} parent=131 // pred_check_branch
              %2657 = sbr.rel (0) target = $region136
            $region135: #{tpu_custom_call.1} parent=131 // pred_region
              // Predicated region
              $region148: #{tpu_custom_call.1} parent=135 // pred_check
                _
              $region149: #{tpu_custom_call.1} parent=135 // pred_check_branch
                %2798 = sbr.rel (0) target = $region151
              $region150: #{tpu_custom_call.1} parent=135 // pred_region
                loop: start=0, step=1, limit=1
                $region152: #{tpu_custom_call.1} parent=150 // loop_pre_header
                  _
                $region153: #{tpu_custom_call.1} parent=150 // loop_header
                  %s2800 = sphi 0, %s2804
                  %p2801 = scmp.ge.s32.totalorder %s2800, 1
                  %s2805 = sphi %s2061, %s2061
                  %s2806 = sphi %s2653, %s2653
                $region154: #{tpu_custom_call.1} parent=150 // loop_header_branch
                  %2803 = sbr.rel (%p2801) target = $region158
                $region155: #{tpu_custom_call.1} parent=150 // loop_body
                  %v2807 = vld [vmem:[%s2805] sm:$0xff]
                  %2808 = vst [vmem:[%s2806] sm:$0xff] %v2807
                  %v2809 = vld [vmem:[%s2805 + $0x8] sm:$0xff]
                  %2810 = vst [vmem:[%s2806 + $0x8] sm:$0xff] %v2809
                  %v2811 = vld [vmem:[%s2805 + $0x10] sm:$0xff]
                  %2812 = vst [vmem:[%s2806 + $0x10] sm:$0xff] %v2811
                  %v2813 = vld [vmem:[%s2805 + $0x18] sm:$0xff]
                  %2814 = vst [vmem:[%s2806 + $0x18] sm:$0xff] %v2813
                  %v2815 = vld [vmem:[%s2805 + $0x20] sm:$0xff]
                  %2816 = vst [vmem:[%s2806 + $0x20] sm:$0xff] %v2815
                  %v2817 = vld [vmem:[%s2805 + $0x28] sm:$0xff]
                  %2818 = vst [vmem:[%s2806 + $0x28] sm:$0xff] %v2817
                  %v2819 = vld [vmem:[%s2805 + $0x30] sm:$0xff]
                  %2820 = vst [vmem:[%s2806 + $0x30] sm:$0xff] %v2819
                  %v2821 = vld [vmem:[%s2805 + $0x38] sm:$0xff]
                  %2822 = vst [vmem:[%s2806 + $0x38] sm:$0xff] %v2821
                  %v2823 = vld [vmem:[%s2805 + $0x40] sm:$0xff]
                  %2824 = vst [vmem:[%s2806 + $0x40] sm:$0xff] %v2823
                  %v2825 = vld [vmem:[%s2805 + $0x48] sm:$0xff]
                  %2826 = vst [vmem:[%s2806 + $0x48] sm:$0xff] %v2825
                  %v2827 = vld [vmem:[%s2805 + $0x50] sm:$0xff]
                  %2828 = vst [vmem:[%s2806 + $0x50] sm:$0xff] %v2827
                  %v2829 = vld [vmem:[%s2805 + $0x58] sm:$0xff]
                  %2830 = vst [vmem:[%s2806 + $0x58] sm:$0xff] %v2829
                  %v2831 = vld [vmem:[%s2805 + $0x60] sm:$0xff]
                  %2832 = vst [vmem:[%s2806 + $0x60] sm:$0xff] %v2831
                  %v2833 = vld [vmem:[%s2805 + $0x68] sm:$0xff]
                  %2834 = vst [vmem:[%s2806 + $0x68] sm:$0xff] %v2833
                  %v2835 = vld [vmem:[%s2805 + $0x70] sm:$0xff]
                  %2836 = vst [vmem:[%s2806 + $0x70] sm:$0xff] %v2835
                  %v2837 = vld [vmem:[%s2805 + $0x78] sm:$0xff]
                  %2838 = vst [vmem:[%s2806 + $0x78] sm:$0xff] %v2837
                  %v2839 = vld [vmem:[%s2805 + $0x80] sm:$0xff]
                  %2840 = vst [vmem:[%s2806 + $0x100] sm:$0xff] %v2839
                  %v2841 = vld [vmem:[%s2805 + $0x88] sm:$0xff]
                  %2842 = vst [vmem:[%s2806 + $0x108] sm:$0xff] %v2841
                  %v2843 = vld [vmem:[%s2805 + $0x90] sm:$0xff]
                  %2844 = vst [vmem:[%s2806 + $0x110] sm:$0xff] %v2843
                  %v2845 = vld [vmem:[%s2805 + $0x98] sm:$0xff]
                  %2846 = vst [vmem:[%s2806 + $0x118] sm:$0xff] %v2845
                  %v2847 = vld [vmem:[%s2805 + $0xa0] sm:$0xff]
                  %2848 = vst [vmem:[%s2806 + $0x120] sm:$0xff] %v2847
                  %v2849 = vld [vmem:[%s2805 + $0xa8] sm:$0xff]
                  %2850 = vst [vmem:[%s2806 + $0x128] sm:$0xff] %v2849
                  %v2851 = vld [vmem:[%s2805 + $0xb0] sm:$0xff]
                  %2852 = vst [vmem:[%s2806 + $0x130] sm:$0xff] %v2851
                  %v2853 = vld [vmem:[%s2805 + $0xb8] sm:$0xff]
                  %2854 = vst [vmem:[%s2806 + $0x138] sm:$0xff] %v2853
                  %v2855 = vld [vmem:[%s2805 + $0xc0] sm:$0xff]
                  %2856 = vst [vmem:[%s2806 + $0x140] sm:$0xff] %v2855
                  %v2857 = vld [vmem:[%s2805 + $0xc8] sm:$0xff]
                  %2858 = vst [vmem:[%s2806 + $0x148] sm:$0xff] %v2857
                  %v2859 = vld [vmem:[%s2805 + $0xd0] sm:$0xff]
                  %2860 = vst [vmem:[%s2806 + $0x150] sm:$0xff] %v2859
                  %v2861 = vld [vmem:[%s2805 + $0xd8] sm:$0xff]
                  %2862 = vst [vmem:[%s2806 + $0x158] sm:$0xff] %v2861
                  %v2863 = vld [vmem:[%s2805 + $0xe0] sm:$0xff]
                  %2864 = vst [vmem:[%s2806 + $0x160] sm:$0xff] %v2863
                  %v2865 = vld [vmem:[%s2805 + $0xe8] sm:$0xff]
                  %2866 = vst [vmem:[%s2806 + $0x168] sm:$0xff] %v2865
                  %v2867 = vld [vmem:[%s2805 + $0xf0] sm:$0xff]
                  %2868 = vst [vmem:[%s2806 + $0x170] sm:$0xff] %v2867
                  %v2869 = vld [vmem:[%s2805 + $0xf8] sm:$0xff]
                  %2870 = vst [vmem:[%s2806 + $0x178] sm:$0xff] %v2869
                  %v2871 = vld [vmem:[%s2805 + $0x100] sm:$0xff]
                  %2872 = vst [vmem:[%s2806 + $0x200] sm:$0xff] %v2871
                  %v2873 = vld [vmem:[%s2805 + $0x108] sm:$0xff]
                  %2874 = vst [vmem:[%s2806 + $0x208] sm:$0xff] %v2873
                  %v2875 = vld [vmem:[%s2805 + $0x110] sm:$0xff]
                  %2876 = vst [vmem:[%s2806 + $0x210] sm:$0xff] %v2875
                  %v2877 = vld [vmem:[%s2805 + $0x118] sm:$0xff]
                  %2878 = vst [vmem:[%s2806 + $0x218] sm:$0xff] %v2877
                  %v2879 = vld [vmem:[%s2805 + $0x120] sm:$0xff]
                  %2880 = vst [vmem:[%s2806 + $0x220] sm:$0xff] %v2879
                  %v2881 = vld [vmem:[%s2805 + $0x128] sm:$0xff]
                  %2882 = vst [vmem:[%s2806 + $0x228] sm:$0xff] %v2881
                  %v2883 = vld [vmem:[%s2805 + $0x130] sm:$0xff]
                  %2884 = vst [vmem:[%s2806 + $0x230] sm:$0xff] %v2883
                  %v2885 = vld [vmem:[%s2805 + $0x138] sm:$0xff]
                  %2886 = vst [vmem:[%s2806 + $0x238] sm:$0xff] %v2885
                  %v2887 = vld [vmem:[%s2805 + $0x140] sm:$0xff]
                  %2888 = vst [vmem:[%s2806 + $0x240] sm:$0xff] %v2887
                  %v2889 = vld [vmem:[%s2805 + $0x148] sm:$0xff]
                  %2890 = vst [vmem:[%s2806 + $0x248] sm:$0xff] %v2889
                  %v2891 = vld [vmem:[%s2805 + $0x150] sm:$0xff]
                  %2892 = vst [vmem:[%s2806 + $0x250] sm:$0xff] %v2891
                  %v2893 = vld [vmem:[%s2805 + $0x158] sm:$0xff]
                  %2894 = vst [vmem:[%s2806 + $0x258] sm:$0xff] %v2893
                  %v2895 = vld [vmem:[%s2805 + $0x160] sm:$0xff]
                  %2896 = vst [vmem:[%s2806 + $0x260] sm:$0xff] %v2895
                  %v2897 = vld [vmem:[%s2805 + $0x168] sm:$0xff]
                  %2898 = vst [vmem:[%s2806 + $0x268] sm:$0xff] %v2897
                  %v2899 = vld [vmem:[%s2805 + $0x170] sm:$0xff]
                  %2900 = vst [vmem:[%s2806 + $0x270] sm:$0xff] %v2899
                  %v2901 = vld [vmem:[%s2805 + $0x178] sm:$0xff]
                  %2902 = vst [vmem:[%s2806 + $0x278] sm:$0xff] %v2901
                  %v2903 = vld [vmem:[%s2805 + $0x180] sm:$0xff]
                  %2904 = vst [vmem:[%s2806 + $0x300] sm:$0xff] %v2903
                  %v2905 = vld [vmem:[%s2805 + $0x188] sm:$0xff]
                  %2906 = vst [vmem:[%s2806 + $0x308] sm:$0xff] %v2905
                  %v2907 = vld [vmem:[%s2805 + $0x190] sm:$0xff]
                  %2908 = vst [vmem:[%s2806 + $0x310] sm:$0xff] %v2907
                  %v2909 = vld [vmem:[%s2805 + $0x198] sm:$0xff]
                  %2910 = vst [vmem:[%s2806 + $0x318] sm:$0xff] %v2909
                  %v2911 = vld [vmem:[%s2805 + $0x1a0] sm:$0xff]
                  %2912 = vst [vmem:[%s2806 + $0x320] sm:$0xff] %v2911
                  %v2913 = vld [vmem:[%s2805 + $0x1a8] sm:$0xff]
                  %2914 = vst [vmem:[%s2806 + $0x328] sm:$0xff] %v2913
                  %v2915 = vld [vmem:[%s2805 + $0x1b0] sm:$0xff]
                  %2916 = vst [vmem:[%s2806 + $0x330] sm:$0xff] %v2915
                  %v2917 = vld [vmem:[%s2805 + $0x1b8] sm:$0xff]
                  %2918 = vst [vmem:[%s2806 + $0x338] sm:$0xff] %v2917
                  %v2919 = vld [vmem:[%s2805 + $0x1c0] sm:$0xff]
                  %2920 = vst [vmem:[%s2806 + $0x340] sm:$0xff] %v2919
                  %v2921 = vld [vmem:[%s2805 + $0x1c8] sm:$0xff]
                  %2922 = vst [vmem:[%s2806 + $0x348] sm:$0xff] %v2921
                  %v2923 = vld [vmem:[%s2805 + $0x1d0] sm:$0xff]
                  %2924 = vst [vmem:[%s2806 + $0x350] sm:$0xff] %v2923
                  %v2925 = vld [vmem:[%s2805 + $0x1d8] sm:$0xff]
                  %2926 = vst [vmem:[%s2806 + $0x358] sm:$0xff] %v2925
                  %v2927 = vld [vmem:[%s2805 + $0x1e0] sm:$0xff]
                  %2928 = vst [vmem:[%s2806 + $0x360] sm:$0xff] %v2927
                  %v2929 = vld [vmem:[%s2805 + $0x1e8] sm:$0xff]
                  %2930 = vst [vmem:[%s2806 + $0x368] sm:$0xff] %v2929
                  %v2931 = vld [vmem:[%s2805 + $0x1f0] sm:$0xff]
                  %2932 = vst [vmem:[%s2806 + $0x370] sm:$0xff] %v2931
                  %v2933 = vld [vmem:[%s2805 + $0x1f8] sm:$0xff]
                  %2934 = vst [vmem:[%s2806 + $0x378] sm:$0xff] %v2933
                $region156: #{tpu_custom_call.1} parent=150 // loop_footer
                  %s2804 = sadd.s32 1, %s2800
                $region157: #{tpu_custom_call.1} parent=150 // loop_footer_branch
                  %2799 = sbr.rel target = $region153
                $region158: #{tpu_custom_call.1} parent=150 // loop_exit
                  _
              $region151: #{tpu_custom_call.1} parent=135 // pred_fallthru
                _
              // Predicated region
              $region159: #{tpu_custom_call.1} parent=135 // pred_check
                _
              $region160: #{tpu_custom_call.1} parent=135 // pred_check_branch
                %2936 = sbr.rel target = $region162
              $region161: #{tpu_custom_call.1} parent=135 // pred_region
                _
              $region162: #{tpu_custom_call.1} parent=135 // pred_fallthru
                _
            $region136: #{tpu_custom_call.1} parent=131 // pred_fallthru
              _
            // Predicated region
            $region137: #{tpu_custom_call.1} parent=131 // pred_check
              _
            $region138: #{tpu_custom_call.1} parent=131 // pred_check_branch
              %2659 = sbr.rel target = $region140
            $region139: #{tpu_custom_call.1} parent=131 // pred_region
              loop: start=0, step=1, limit=1
              $region141: #{tpu_custom_call.1} parent=139 // loop_pre_header
                _
              $region142: #{tpu_custom_call.1} parent=139 // loop_header
                %s2662 = sphi 0, %s2666
                %p2663 = scmp.ge.s32.totalorder %s2662, 1
                %s2667 = sphi %s2061, %s2061
                %s2668 = sphi %s2653, %s2653
              $region143: #{tpu_custom_call.1} parent=139 // loop_header_branch
                %2665 = sbr.rel (%p2663) target = $region147
              $region144: #{tpu_custom_call.1} parent=139 // loop_body
                %v2669 = vld [vmem:[%s2667] sm:$0xff]
                %2670 = vst [vmem:[%s2668] sm:$0xff] %v2669
                %v2671 = vld [vmem:[%s2667 + $0x8] sm:$0xff]
                %2672 = vst [vmem:[%s2668 + $0x8] sm:$0xff] %v2671
                %v2673 = vld [vmem:[%s2667 + $0x10] sm:$0xff]
                %2674 = vst [vmem:[%s2668 + $0x10] sm:$0xff] %v2673
                %v2675 = vld [vmem:[%s2667 + $0x18] sm:$0xff]
                %2676 = vst [vmem:[%s2668 + $0x18] sm:$0xff] %v2675
                %v2677 = vld [vmem:[%s2667 + $0x20] sm:$0xff]
                %2678 = vst [vmem:[%s2668 + $0x20] sm:$0xff] %v2677
                %v2679 = vld [vmem:[%s2667 + $0x28] sm:$0xff]
                %2680 = vst [vmem:[%s2668 + $0x28] sm:$0xff] %v2679
                %v2681 = vld [vmem:[%s2667 + $0x30] sm:$0xff]
                %2682 = vst [vmem:[%s2668 + $0x30] sm:$0xff] %v2681
                %v2683 = vld [vmem:[%s2667 + $0x38] sm:$0xff]
                %2684 = vst [vmem:[%s2668 + $0x38] sm:$0xff] %v2683
                %v2685 = vld [vmem:[%s2667 + $0x40] sm:$0xff]
                %2686 = vst [vmem:[%s2668 + $0x40] sm:$0xff] %v2685
                %v2687 = vld [vmem:[%s2667 + $0x48] sm:$0xff]
                %2688 = vst [vmem:[%s2668 + $0x48] sm:$0xff] %v2687
                %v2689 = vld [vmem:[%s2667 + $0x50] sm:$0xff]
                %2690 = vst [vmem:[%s2668 + $0x50] sm:$0xff] %v2689
                %v2691 = vld [vmem:[%s2667 + $0x58] sm:$0xff]
                %2692 = vst [vmem:[%s2668 + $0x58] sm:$0xff] %v2691
                %v2693 = vld [vmem:[%s2667 + $0x60] sm:$0xff]
                %2694 = vst [vmem:[%s2668 + $0x60] sm:$0xff] %v2693
                %v2695 = vld [vmem:[%s2667 + $0x68] sm:$0xff]
                %2696 = vst [vmem:[%s2668 + $0x68] sm:$0xff] %v2695
                %v2697 = vld [vmem:[%s2667 + $0x70] sm:$0xff]
                %2698 = vst [vmem:[%s2668 + $0x70] sm:$0xff] %v2697
                %v2699 = vld [vmem:[%s2667 + $0x78] sm:$0xff]
                %2700 = vst [vmem:[%s2668 + $0x78] sm:$0xff] %v2699
                %v2701 = vld [vmem:[%s2667 + $0x80] sm:$0xff]
                %2702 = vst [vmem:[%s2668 + $0x100] sm:$0xff] %v2701
                %v2703 = vld [vmem:[%s2667 + $0x88] sm:$0xff]
                %2704 = vst [vmem:[%s2668 + $0x108] sm:$0xff] %v2703
                %v2705 = vld [vmem:[%s2667 + $0x90] sm:$0xff]
                %2706 = vst [vmem:[%s2668 + $0x110] sm:$0xff] %v2705
                %v2707 = vld [vmem:[%s2667 + $0x98] sm:$0xff]
                %2708 = vst [vmem:[%s2668 + $0x118] sm:$0xff] %v2707
                %v2709 = vld [vmem:[%s2667 + $0xa0] sm:$0xff]
                %2710 = vst [vmem:[%s2668 + $0x120] sm:$0xff] %v2709
                %v2711 = vld [vmem:[%s2667 + $0xa8] sm:$0xff]
                %2712 = vst [vmem:[%s2668 + $0x128] sm:$0xff] %v2711
                %v2713 = vld [vmem:[%s2667 + $0xb0] sm:$0xff]
                %2714 = vst [vmem:[%s2668 + $0x130] sm:$0xff] %v2713
                %v2715 = vld [vmem:[%s2667 + $0xb8] sm:$0xff]
                %2716 = vst [vmem:[%s2668 + $0x138] sm:$0xff] %v2715
                %v2717 = vld [vmem:[%s2667 + $0xc0] sm:$0xff]
                %2718 = vst [vmem:[%s2668 + $0x140] sm:$0xff] %v2717
                %v2719 = vld [vmem:[%s2667 + $0xc8] sm:$0xff]
                %2720 = vst [vmem:[%s2668 + $0x148] sm:$0xff] %v2719
                %v2721 = vld [vmem:[%s2667 + $0xd0] sm:$0xff]
                %2722 = vst [vmem:[%s2668 + $0x150] sm:$0xff] %v2721
                %v2723 = vld [vmem:[%s2667 + $0xd8] sm:$0xff]
                %2724 = vst [vmem:[%s2668 + $0x158] sm:$0xff] %v2723
                %v2725 = vld [vmem:[%s2667 + $0xe0] sm:$0xff]
                %2726 = vst [vmem:[%s2668 + $0x160] sm:$0xff] %v2725
                %v2727 = vld [vmem:[%s2667 + $0xe8] sm:$0xff]
                %2728 = vst [vmem:[%s2668 + $0x168] sm:$0xff] %v2727
                %v2729 = vld [vmem:[%s2667 + $0xf0] sm:$0xff]
                %2730 = vst [vmem:[%s2668 + $0x170] sm:$0xff] %v2729
                %v2731 = vld [vmem:[%s2667 + $0xf8] sm:$0xff]
                %2732 = vst [vmem:[%s2668 + $0x178] sm:$0xff] %v2731
                %v2733 = vld [vmem:[%s2667 + $0x100] sm:$0xff]
                %2734 = vst [vmem:[%s2668 + $0x200] sm:$0xff] %v2733
                %v2735 = vld [vmem:[%s2667 + $0x108] sm:$0xff]
                %2736 = vst [vmem:[%s2668 + $0x208] sm:$0xff] %v2735
                %v2737 = vld [vmem:[%s2667 + $0x110] sm:$0xff]
                %2738 = vst [vmem:[%s2668 + $0x210] sm:$0xff] %v2737
                %v2739 = vld [vmem:[%s2667 + $0x118] sm:$0xff]
                %2740 = vst [vmem:[%s2668 + $0x218] sm:$0xff] %v2739
                %v2741 = vld [vmem:[%s2667 + $0x120] sm:$0xff]
                %2742 = vst [vmem:[%s2668 + $0x220] sm:$0xff] %v2741
                %v2743 = vld [vmem:[%s2667 + $0x128] sm:$0xff]
                %2744 = vst [vmem:[%s2668 + $0x228] sm:$0xff] %v2743
                %v2745 = vld [vmem:[%s2667 + $0x130] sm:$0xff]
                %2746 = vst [vmem:[%s2668 + $0x230] sm:$0xff] %v2745
                %v2747 = vld [vmem:[%s2667 + $0x138] sm:$0xff]
                %2748 = vst [vmem:[%s2668 + $0x238] sm:$0xff] %v2747
                %v2749 = vld [vmem:[%s2667 + $0x140] sm:$0xff]
                %2750 = vst [vmem:[%s2668 + $0x240] sm:$0xff] %v2749
                %v2751 = vld [vmem:[%s2667 + $0x148] sm:$0xff]
                %2752 = vst [vmem:[%s2668 + $0x248] sm:$0xff] %v2751
                %v2753 = vld [vmem:[%s2667 + $0x150] sm:$0xff]
                %2754 = vst [vmem:[%s2668 + $0x250] sm:$0xff] %v2753
                %v2755 = vld [vmem:[%s2667 + $0x158] sm:$0xff]
                %2756 = vst [vmem:[%s2668 + $0x258] sm:$0xff] %v2755
                %v2757 = vld [vmem:[%s2667 + $0x160] sm:$0xff]
                %2758 = vst [vmem:[%s2668 + $0x260] sm:$0xff] %v2757
                %v2759 = vld [vmem:[%s2667 + $0x168] sm:$0xff]
                %2760 = vst [vmem:[%s2668 + $0x268] sm:$0xff] %v2759
                %v2761 = vld [vmem:[%s2667 + $0x170] sm:$0xff]
                %2762 = vst [vmem:[%s2668 + $0x270] sm:$0xff] %v2761
                %v2763 = vld [vmem:[%s2667 + $0x178] sm:$0xff]
                %2764 = vst [vmem:[%s2668 + $0x278] sm:$0xff] %v2763
                %v2765 = vld [vmem:[%s2667 + $0x180] sm:$0xff]
                %2766 = vst [vmem:[%s2668 + $0x300] sm:$0xff] %v2765
                %v2767 = vld [vmem:[%s2667 + $0x188] sm:$0xff]
                %2768 = vst [vmem:[%s2668 + $0x308] sm:$0xff] %v2767
                %v2769 = vld [vmem:[%s2667 + $0x190] sm:$0xff]
                %2770 = vst [vmem:[%s2668 + $0x310] sm:$0xff] %v2769
                %v2771 = vld [vmem:[%s2667 + $0x198] sm:$0xff]
                %2772 = vst [vmem:[%s2668 + $0x318] sm:$0xff] %v2771
                %v2773 = vld [vmem:[%s2667 + $0x1a0] sm:$0xff]
                %2774 = vst [vmem:[%s2668 + $0x320] sm:$0xff] %v2773
                %v2775 = vld [vmem:[%s2667 + $0x1a8] sm:$0xff]
                %2776 = vst [vmem:[%s2668 + $0x328] sm:$0xff] %v2775
                %v2777 = vld [vmem:[%s2667 + $0x1b0] sm:$0xff]
                %2778 = vst [vmem:[%s2668 + $0x330] sm:$0xff] %v2777
                %v2779 = vld [vmem:[%s2667 + $0x1b8] sm:$0xff]
                %2780 = vst [vmem:[%s2668 + $0x338] sm:$0xff] %v2779
                %v2781 = vld [vmem:[%s2667 + $0x1c0] sm:$0xff]
                %2782 = vst [vmem:[%s2668 + $0x340] sm:$0xff] %v2781
                %v2783 = vld [vmem:[%s2667 + $0x1c8] sm:$0xff]
                %2784 = vst [vmem:[%s2668 + $0x348] sm:$0xff] %v2783
                %v2785 = vld [vmem:[%s2667 + $0x1d0] sm:$0xff]
                %2786 = vst [vmem:[%s2668 + $0x350] sm:$0xff] %v2785
                %v2787 = vld [vmem:[%s2667 + $0x1d8] sm:$0xff]
                %2788 = vst [vmem:[%s2668 + $0x358] sm:$0xff] %v2787
                %v2789 = vld [vmem:[%s2667 + $0x1e0] sm:$0xff]
                %2790 = vst [vmem:[%s2668 + $0x360] sm:$0xff] %v2789
                %v2791 = vld [vmem:[%s2667 + $0x1e8] sm:$0xff]
                %2792 = vst [vmem:[%s2668 + $0x368] sm:$0xff] %v2791
                %v2793 = vld [vmem:[%s2667 + $0x1f0] sm:$0xff]
                %2794 = vst [vmem:[%s2668 + $0x370] sm:$0xff] %v2793
                %v2795 = vld [vmem:[%s2667 + $0x1f8] sm:$0xff]
                %2796 = vst [vmem:[%s2668 + $0x378] sm:$0xff] %v2795
              $region145: #{tpu_custom_call.1} parent=139 // loop_footer
                %s2666 = sadd.s32 1, %s2662
              $region146: #{tpu_custom_call.1} parent=139 // loop_footer_branch
                %2661 = sbr.rel target = $region142
              $region147: #{tpu_custom_call.1} parent=139 // loop_exit
                _
            $region140: #{tpu_custom_call.1} parent=131 // pred_fallthru
              _
          $region132: #{tpu_custom_call.1} parent=127 // pred_fallthru
            _
          %2937 = vnop
        $region128: #{tpu_custom_call.1} parent=39 // pred_fallthru
          _
      $region40: #{tpu_custom_call.1} parent=5 // pred_fallthru
        _
      %p2938 = scmp.le.s32.totalorder 2, %s18
      // Predicated region
      $region163: #{tpu_custom_call.1} parent=5 // pred_check
        %p2939 = pneg %p2938
      $region164: #{tpu_custom_call.1} parent=5 // pred_check_branch
        %2941 = sbr.rel (%p2939) target = $region166
      $region165: #{tpu_custom_call.1} parent=5 // pred_region
        %s2942 = ssub.s32 %s18, 2
        // Predicated region
        $region167: #{tpu_custom_call.1} parent=165 // pred_check
          %p2943 = pneg %p173
        $region168: #{tpu_custom_call.1} parent=165 // pred_check_branch
          %2945 = sbr.rel (%p2943) target = $region170
        $region169: #{tpu_custom_call.1} parent=165 // pred_region
          %s2946 = sand.u32 %s158, 1
          %s2947 = sand.u32 %s158, 1
          %s2948 = smul.addr %s2947, 512
          %s2949 = scalar_lea.vmem [#allocation6], %s2948
        $region170: #{tpu_custom_call.1} parent=165 // pred_fallthru
          _
        // Predicated region
        $region171: #{tpu_custom_call.1} parent=165 // pred_check
          %p2950 = pneg %p201
        $region172: #{tpu_custom_call.1} parent=165 // pred_check_branch
          %2952 = sbr.rel (%p2950) target = $region174
        $region173: #{tpu_custom_call.1} parent=165 // pred_region
          %s2953 = sand.u32 %s186, 1
          %s2954 = sand.u32 %s186, 1
          %s2955 = smul.addr %s2954, 512
          %s2956 = scalar_lea.vmem [#allocation7], %s2955
        $region174: #{tpu_custom_call.1} parent=165 // pred_fallthru
          _
        // Predicated region
        $region175: #{tpu_custom_call.1} parent=165 // pred_check
          %p2957 = pneg %p229
        $region176: #{tpu_custom_call.1} parent=165 // pred_check_branch
          %2959 = sbr.rel (%p2957) target = $region178
        $region177: #{tpu_custom_call.1} parent=165 // pred_region
          %s2960 = sand.u32 %s214, 1
          %s2961 = sand.u32 %s214, 1
          %s2962 = smul.addr %s2961, 512
          %s2963 = scalar_lea.vmem [#allocation8], %s2962
        $region178: #{tpu_custom_call.1} parent=165 // pred_fallthru
          _
      $region166: #{tpu_custom_call.1} parent=5 // pred_fallthru
        _
    $region6: #{tpu_custom_call.1} parent=1 // loop_footer
      %s22 = sadd.s32 1, %s18
    $region7: #{tpu_custom_call.1} parent=1 // loop_footer_branch
      %17 = sbr.rel target = $region3
    $region8: #{tpu_custom_call.1} parent=1 // loop_exit
      _
    %2964 = vsyncpa [#allocation3], 1
    %s2965 = scalar_lea.sflag [#allocation3], 1
    %2966 = vsyncpa %s2965, 1
    %2967 = vsyncpa [#allocation5], 1

</llo_original>
